<compile_context>
chip_gen: v7x
topology: tpu7x:2x2x1
jax: 0.10.0
libtpu: 0.0.40
codegen_flags: <defaults>
</compile_context>

<pallas_src>
import functools

import jax
import jax.numpy as jnp
import numpy as np
from jax.experimental import pallas as pl
from jax.experimental.pallas import tpu as pltpu


def _mha_kernel(x_ref, wqkv_ref, wp_ref, bp_ref, o_ref,
                *, num_heads: int, head_size: int,
                tn: int, s: int, l: int, lp: int):
    """One grid step processes TN independent (S, L) matrices."""
    # (TN, S, L) -> (TN*S, L): contiguous collapse (S is a multiple of 8).
    x2d = x_ref[...].reshape(tn * s, l)

    # Fused QKV: one MXU pass, 3L-lane-wide result.  head_size**-0.5 is
    # already folded into the Wq columns host-side.
    qkv = jnp.dot(x2d, wqkv_ref[...], preferred_element_type=jnp.float32)

    wp_full = wp_ref[...]                      # (L, LP), loaded once
    acc = jnp.zeros((tn * s, lp), dtype=jnp.float32)

    for h in range(num_heads):                 # static unroll over heads
        lo = h * head_size
        hi = lo + head_size
        qh = qkv[:, lo:hi].reshape(tn, s, head_size)
        kh = qkv[:, l + lo:l + hi].reshape(tn, s, head_size)
        vh = qkv[:, 2 * l + lo:2 * l + hi].reshape(tn, s, head_size)

        # Batched (over TN items) scores + stable softmax (no causal mask).
        wei = jnp.einsum('bqd,bkd->bqk', qh, kh,
                         preferred_element_type=jnp.float32)     # (TN, S, S)
        wei = jnp.exp(wei - jnp.max(wei, axis=-1, keepdims=True))
        inv = pl.reciprocal(jnp.sum(wei, axis=-1, keepdims=True), approx=True)
        wei = wei * inv

        oh = jnp.einsum('bqk,bkd->bqd', wei, vh,
                        preferred_element_type=jnp.float32)      # (TN, S, hs)

        # Per-head projection accumulation (== concat(heads) @ Wproj).
        acc = acc + jnp.dot(oh.reshape(tn * s, head_size),
                            wp_full[lo:hi, :],
                            preferred_element_type=jnp.float32)

    out = acc + bp_ref[...]                                      # (TN*S, LP)
    o_ref[...] = out.reshape(tn, s, lp)


def synchronous_mha_forward(x, wq, wk, wv, wp, bp, *, num_heads, head_size):
    """x: (b, c, S, L) float32.  Weights are already laid out so y = x @ W."""
    b, c, s, l = x.shape
    assert num_heads * head_size == l
    n = b * c
    xf = x.reshape(n, s, l).astype(jnp.float32)

    # TN items per grid step; keep >=2 grid steps when possible so v7x's two
    # TensorCores can each take a "parallel" step.  (Single TC on v5e/v6e.)
    if n % 2 == 0 and n >= 4:
        tn = n // 2
    else:
        tn = n
    grid = (n // tn,)

    # Host-side weight prep: fold softmax scale into Wq, fuse QKV, and pad
    # the projection's output lane axis up to a multiple of 128 for
    # lane-dense, unmasked stores.
    scale = jnp.float32(head_size) ** jnp.float32(-0.5)
    wqkv = jnp.concatenate([wq * scale, wk, wv], axis=1)          # (L, 3L)
    lp = l if l % 128 == 0 else ((l + 127) // 128) * 128
    wp_pad = jnp.zeros((l, lp), jnp.float32).at[:, :l].set(wp)
    bp_pad = jnp.zeros((1, lp), jnp.float32).at[:, :l].set(bp)

    kernel = functools.partial(_mha_kernel,
                               num_heads=num_heads, head_size=head_size,
                               tn=tn, s=s, l=l, lp=lp)

    out = pl.pallas_call(
        kernel,
        out_shape=jax.ShapeDtypeStruct((n, s, lp), jnp.float32),
        grid_spec=pltpu.PrefetchScalarGridSpec(
            num_scalar_prefetch=0,
            grid=grid,
            in_specs=[
                pl.BlockSpec((tn, s, l), lambda i: (i, 0, 0)),    # x tile
                pl.BlockSpec((l, 3 * l), lambda i: (0, 0)),       # fused Wqkv
                pl.BlockSpec((l, lp), lambda i: (0, 0)),          # Wproj (padded)
                pl.BlockSpec((1, lp), lambda i: (0, 0)),          # bias (padded)
            ],
            out_specs=pl.BlockSpec((tn, s, lp), lambda i: (i, 0, 0)),
        ),
        compiler_params=pltpu.CompilerParams(
            dimension_semantics=("parallel",)),
    )(xf, wqkv, wp_pad, bp_pad)

    return out[:, :, :l].reshape(b, c, s, l)


def _reference(x, wq, wk, wv, wp, bp, *, num_heads, head_size):
    """Pure-JAX reference of the same math for a correctness check."""
    b, c, s, l = x.shape
    xf = x.reshape(b * c, s, l)
    q = xf @ wq
    k = xf @ wk
    v = xf @ wv
    outs = []
    for h in range(num_heads):
        lo, hi = h * head_size, (h + 1) * head_size
        wei = (q[..., lo:hi] @ jnp.swapaxes(k[..., lo:hi], -1, -2)
               ) * (head_size ** -0.5)
        wei = jax.nn.softmax(wei, axis=-1)
        outs.append(wei @ v[..., lo:hi])
    attn = jnp.concatenate(outs, axis=-1)
    out = attn @ wp + bp
    return out.reshape(b, c, s, l)


if __name__ == "__main__":
    # Small shapes consistent with the module: num_heads * head_size == L.
    b, c = 2, 4          # batch, channels (n_chans analogue)
    S = 8                # sequence / "block_size"
    num_heads = 4
    head_size = 8
    L = num_heads * head_size   # 32 == n_embed

    key = jax.random.PRNGKey(0)
    k_x, k_q, k_k, k_v, k_p, k_b = jax.random.split(key, 6)

    x = jax.random.normal(k_x, (b, c, S, L), dtype=jnp.float32)

    # Per-head Linear(L, head_size, bias=False) weights.  PyTorch stores the
    # weight as (head_size, L) and computes x @ W^T; we pre-transpose and
    # concatenate heads along columns so the kernel does y = x @ W.
    scale = 1.0 / np.sqrt(L)
    wq = jax.random.uniform(k_q, (L, L), jnp.float32, -scale, scale)
    wk = jax.random.uniform(k_k, (L, L), jnp.float32, -scale, scale)
    wv = jax.random.uniform(k_v, (L, L), jnp.float32, -scale, scale)
    # Output projection Linear(L, L) with bias (stored pre-transposed).
    wp = jax.random.uniform(k_p, (L, L), jnp.float32, -scale, scale)
    bp = jax.random.uniform(k_b, (1, L), jnp.float32, -scale, scale)

    out = synchronous_mha_forward(
        x, wq, wk, wv, wp, bp, num_heads=num_heads, head_size=head_size)
    out = jax.block_until_ready(out)

    ref = _reference(x, wq, wk, wv, wp, bp,
                     num_heads=num_heads, head_size=head_size)
    assert out.shape == (b, c, S, L)
    # Loose tolerance: the kernel's softmax uses the EUP approximate
    # reciprocal (pl.reciprocal(approx=True)); the f32 reference divides
    # exactly.
    np.testing.assert_allclose(np.asarray(out), np.asarray(ref),
                               rtol=1e-2, atol=1e-2)

    print("KERNEL_OK")
</pallas_src>

<mosaic_0001>
module attributes {stable_mosaic.version = 11 : i64} {
  func.func @_mha_kernel(%arg0: i32, %arg1: memref<4x8x32xf32, #tpu.memory_space<vmem>>, %arg2: memref<32x96xf32, #tpu.memory_space<vmem>>, %arg3: memref<32x128xf32, #tpu.memory_space<vmem>>, %arg4: memref<1x128xf32, #tpu.memory_space<vmem>>, %arg5: memref<4x8x128xf32, #tpu.memory_space<vmem>>) attributes {dimension_semantics = [#tpu.dimension_semantics<parallel>], iteration_bounds = array<i64: 2>, scalar_prefetch = 0 : i64, scratch_operands = 0 : i64, tpu.core_type = #tpu.core_type<tc>, window_params = [{transform_indices = @transform_0, window_bounds = array<i64: 4, 8, 32>}, {pipeline_mode = #tpu.pipeline_mode<synchronous>, transform_indices = @transform_1, window_bounds = array<i64: 32, 96>}, {pipeline_mode = #tpu.pipeline_mode<synchronous>, transform_indices = @transform_2, window_bounds = array<i64: 32, 128>}, {pipeline_mode = #tpu.pipeline_mode<synchronous>, transform_indices = @transform_3, window_bounds = array<i64: 1, 128>}, {transform_indices = @transform_4, window_bounds = array<i64: 4, 8, 128>}]} {
    %c0 = arith.constant 0 : index
    %c0_0 = arith.constant 0 : index
    %c0_1 = arith.constant 0 : index
    %0 = vector.load %arg1[%c0, %c0_0, %c0_1] : memref<4x8x32xf32, #tpu.memory_space<vmem>>, vector<4x8x32xf32>
    %1 = vector.shape_cast %0 : vector<4x8x32xf32> to vector<32x32xf32>
    %c0_2 = arith.constant 0 : index
    %c0_3 = arith.constant 0 : index
    %2 = vector.load %arg2[%c0_2, %c0_3] : memref<32x96xf32, #tpu.memory_space<vmem>>, vector<32x96xf32>
    %cst = arith.constant dense<0.000000e+00> : vector<32x96xf32>
    %3 = tpu.matmul %1, %2, %cst {dimension_numbers = #tpu.dot_dimension_numbers<[1], [0], [0], [1], [0, 0, 1, 1], [], []>} : vector<32x32xf32>, vector<32x96xf32>, vector<32x96xf32> -> vector<32x96xf32>
    %c0_4 = arith.constant 0 : index
    %c0_5 = arith.constant 0 : index
    %4 = vector.load %arg3[%c0_4, %c0_5] : memref<32x128xf32, #tpu.memory_space<vmem>>, vector<32x128xf32>
    %cst_6 = arith.constant 0.000000e+00 : f32
    %5 = vector.broadcast %cst_6 : f32 to vector<32x128xf32>
    %6 = vector.extract_strided_slice %3 {offsets = [0, 0], sizes = [32, 8], strides = [1, 1]} : vector<32x96xf32> to vector<32x8xf32>
    %7 = vector.shape_cast %6 : vector<32x8xf32> to vector<4x8x8xf32>
    %8 = vector.extract_strided_slice %3 {offsets = [0, 32], sizes = [32, 8], strides = [1, 1]} : vector<32x96xf32> to vector<32x8xf32>
    %9 = vector.shape_cast %8 : vector<32x8xf32> to vector<4x8x8xf32>
    %10 = vector.extract_strided_slice %3 {offsets = [0, 64], sizes = [32, 8], strides = [1, 1]} : vector<32x96xf32> to vector<32x8xf32>
    %11 = vector.shape_cast %10 : vector<32x8xf32> to vector<4x8x8xf32>
    "tpu.trace_start"() <{level = 10 : i32, message = "bqd,bkd->bqk"}> : () -> ()
    %cst_7 = arith.constant dense<0.000000e+00> : vector<4x8x8xf32>
    %12 = tpu.matmul %7, %9, %cst_7 {dimension_numbers = #tpu.dot_dimension_numbers<[2], [2], [1], [1], [0, 0, 0, 1, 1, 1], [0], [0]>} : vector<4x8x8xf32>, vector<4x8x8xf32>, vector<4x8x8xf32> -> vector<4x8x8xf32>
    "tpu.trace_stop"() : () -> ()
    %cst_8 = arith.constant dense<0xFF800000> : vector<4x8xf32>
    %13 = vector.multi_reduction <maximumf>, %12, %cst_8 [2] : vector<4x8x8xf32> to vector<4x8xf32>
    %14 = vector.shape_cast %13 : vector<4x8xf32> to vector<4x8x1xf32>
    %15 = vector.broadcast %14 : vector<4x8x1xf32> to vector<4x8x8xf32>
    %16 = arith.subf %12, %15 : vector<4x8x8xf32>
    %17 = math.exp %16 : vector<4x8x8xf32>
    %cst_9 = arith.constant dense<0.000000e+00> : vector<4x8xf32>
    %18 = vector.multi_reduction <add>, %17, %cst_9 [2] : vector<4x8x8xf32> to vector<4x8xf32>
    %19 = vector.shape_cast %18 : vector<4x8xf32> to vector<4x8x1xf32>
    %20 = tpu.reciprocal %19 {approx = true} : vector<4x8x1xf32> -> vector<4x8x1xf32>
    %21 = vector.broadcast %20 : vector<4x8x1xf32> to vector<4x8x8xf32>
    %22 = arith.mulf %17, %21 : vector<4x8x8xf32>
    "tpu.trace_start"() <{level = 10 : i32, message = "bqk,bkd->bqd"}> : () -> ()
    %cst_10 = arith.constant dense<0.000000e+00> : vector<4x8x8xf32>
    %23 = tpu.matmul %22, %11, %cst_10 {dimension_numbers = #tpu.dot_dimension_numbers<[2], [1], [1], [2], [0, 0, 0, 1, 1, 2], [0], [0]>} : vector<4x8x8xf32>, vector<4x8x8xf32>, vector<4x8x8xf32> -> vector<4x8x8xf32>
    "tpu.trace_stop"() : () -> ()
    %24 = vector.shape_cast %23 : vector<4x8x8xf32> to vector<32x8xf32>
    %25 = vector.extract_strided_slice %4 {offsets = [0, 0], sizes = [8, 128], strides = [1, 1]} : vector<32x128xf32> to vector<8x128xf32>
    %cst_11 = arith.constant dense<0.000000e+00> : vector<32x128xf32>
    %26 = tpu.matmul %24, %25, %cst_11 {dimension_numbers = #tpu.dot_dimension_numbers<[1], [0], [0], [1], [0, 0, 1, 1], [], []>} : vector<32x8xf32>, vector<8x128xf32>, vector<32x128xf32> -> vector<32x128xf32>
    %27 = arith.addf %5, %26 : vector<32x128xf32>
    %28 = vector.extract_strided_slice %3 {offsets = [0, 8], sizes = [32, 8], strides = [1, 1]} : vector<32x96xf32> to vector<32x8xf32>
    %29 = vector.shape_cast %28 : vector<32x8xf32> to vector<4x8x8xf32>
    %30 = vector.extract_strided_slice %3 {offsets = [0, 40], sizes = [32, 8], strides = [1, 1]} : vector<32x96xf32> to vector<32x8xf32>
    %31 = vector.shape_cast %30 : vector<32x8xf32> to vector<4x8x8xf32>
    %32 = vector.extract_strided_slice %3 {offsets = [0, 72], sizes = [32, 8], strides = [1, 1]} : vector<32x96xf32> to vector<32x8xf32>
    %33 = vector.shape_cast %32 : vector<32x8xf32> to vector<4x8x8xf32>
    "tpu.trace_start"() <{level = 10 : i32, message = "bqd,bkd->bqk"}> : () -> ()
    %cst_12 = arith.constant dense<0.000000e+00> : vector<4x8x8xf32>
    %34 = tpu.matmul %29, %31, %cst_12 {dimension_numbers = #tpu.dot_dimension_numbers<[2], [2], [1], [1], [0, 0, 0, 1, 1, 1], [0], [0]>} : vector<4x8x8xf32>, vector<4x8x8xf32>, vector<4x8x8xf32> -> vector<4x8x8xf32>
    "tpu.trace_stop"() : () -> ()
    %cst_13 = arith.constant dense<0xFF800000> : vector<4x8xf32>
    %35 = vector.multi_reduction <maximumf>, %34, %cst_13 [2] : vector<4x8x8xf32> to vector<4x8xf32>
    %36 = vector.shape_cast %35 : vector<4x8xf32> to vector<4x8x1xf32>
    %37 = vector.broadcast %36 : vector<4x8x1xf32> to vector<4x8x8xf32>
    %38 = arith.subf %34, %37 : vector<4x8x8xf32>
    %39 = math.exp %38 : vector<4x8x8xf32>
    %cst_14 = arith.constant dense<0.000000e+00> : vector<4x8xf32>
    %40 = vector.multi_reduction <add>, %39, %cst_14 [2] : vector<4x8x8xf32> to vector<4x8xf32>
    %41 = vector.shape_cast %40 : vector<4x8xf32> to vector<4x8x1xf32>
    %42 = tpu.reciprocal %41 {approx = true} : vector<4x8x1xf32> -> vector<4x8x1xf32>
    %43 = vector.broadcast %42 : vector<4x8x1xf32> to vector<4x8x8xf32>
    %44 = arith.mulf %39, %43 : vector<4x8x8xf32>
    "tpu.trace_start"() <{level = 10 : i32, message = "bqk,bkd->bqd"}> : () -> ()
    %cst_15 = arith.constant dense<0.000000e+00> : vector<4x8x8xf32>
    %45 = tpu.matmul %44, %33, %cst_15 {dimension_numbers = #tpu.dot_dimension_numbers<[2], [1], [1], [2], [0, 0, 0, 1, 1, 2], [0], [0]>} : vector<4x8x8xf32>, vector<4x8x8xf32>, vector<4x8x8xf32> -> vector<4x8x8xf32>
    "tpu.trace_stop"() : () -> ()
    %46 = vector.shape_cast %45 : vector<4x8x8xf32> to vector<32x8xf32>
    %47 = vector.extract_strided_slice %4 {offsets = [8, 0], sizes = [8, 128], strides = [1, 1]} : vector<32x128xf32> to vector<8x128xf32>
    %cst_16 = arith.constant dense<0.000000e+00> : vector<32x128xf32>
    %48 = tpu.matmul %46, %47, %cst_16 {dimension_numbers = #tpu.dot_dimension_numbers<[1], [0], [0], [1], [0, 0, 1, 1], [], []>} : vector<32x8xf32>, vector<8x128xf32>, vector<32x128xf32> -> vector<32x128xf32>
    %49 = arith.addf %27, %48 : vector<32x128xf32>
    %50 = vector.extract_strided_slice %3 {offsets = [0, 16], sizes = [32, 8], strides = [1, 1]} : vector<32x96xf32> to vector<32x8xf32>
    %51 = vector.shape_cast %50 : vector<32x8xf32> to vector<4x8x8xf32>
    %52 = vector.extract_strided_slice %3 {offsets = [0, 48], sizes = [32, 8], strides = [1, 1]} : vector<32x96xf32> to vector<32x8xf32>
    %53 = vector.shape_cast %52 : vector<32x8xf32> to vector<4x8x8xf32>
    %54 = vector.extract_strided_slice %3 {offsets = [0, 80], sizes = [32, 8], strides = [1, 1]} : vector<32x96xf32> to vector<32x8xf32>
    %55 = vector.shape_cast %54 : vector<32x8xf32> to vector<4x8x8xf32>
    "tpu.trace_start"() <{level = 10 : i32, message = "bqd,bkd->bqk"}> : () -> ()
    %cst_17 = arith.constant dense<0.000000e+00> : vector<4x8x8xf32>
    %56 = tpu.matmul %51, %53, %cst_17 {dimension_numbers = #tpu.dot_dimension_numbers<[2], [2], [1], [1], [0, 0, 0, 1, 1, 1], [0], [0]>} : vector<4x8x8xf32>, vector<4x8x8xf32>, vector<4x8x8xf32> -> vector<4x8x8xf32>
    "tpu.trace_stop"() : () -> ()
    %cst_18 = arith.constant dense<0xFF800000> : vector<4x8xf32>
    %57 = vector.multi_reduction <maximumf>, %56, %cst_18 [2] : vector<4x8x8xf32> to vector<4x8xf32>
    %58 = vector.shape_cast %57 : vector<4x8xf32> to vector<4x8x1xf32>
    %59 = vector.broadcast %58 : vector<4x8x1xf32> to vector<4x8x8xf32>
    %60 = arith.subf %56, %59 : vector<4x8x8xf32>
    %61 = math.exp %60 : vector<4x8x8xf32>
    %cst_19 = arith.constant dense<0.000000e+00> : vector<4x8xf32>
    %62 = vector.multi_reduction <add>, %61, %cst_19 [2] : vector<4x8x8xf32> to vector<4x8xf32>
    %63 = vector.shape_cast %62 : vector<4x8xf32> to vector<4x8x1xf32>
    %64 = tpu.reciprocal %63 {approx = true} : vector<4x8x1xf32> -> vector<4x8x1xf32>
    %65 = vector.broadcast %64 : vector<4x8x1xf32> to vector<4x8x8xf32>
    %66 = arith.mulf %61, %65 : vector<4x8x8xf32>
    "tpu.trace_start"() <{level = 10 : i32, message = "bqk,bkd->bqd"}> : () -> ()
    %cst_20 = arith.constant dense<0.000000e+00> : vector<4x8x8xf32>
    %67 = tpu.matmul %66, %55, %cst_20 {dimension_numbers = #tpu.dot_dimension_numbers<[2], [1], [1], [2], [0, 0, 0, 1, 1, 2], [0], [0]>} : vector<4x8x8xf32>, vector<4x8x8xf32>, vector<4x8x8xf32> -> vector<4x8x8xf32>
    "tpu.trace_stop"() : () -> ()
    %68 = vector.shape_cast %67 : vector<4x8x8xf32> to vector<32x8xf32>
    %69 = vector.extract_strided_slice %4 {offsets = [16, 0], sizes = [8, 128], strides = [1, 1]} : vector<32x128xf32> to vector<8x128xf32>
    %cst_21 = arith.constant dense<0.000000e+00> : vector<32x128xf32>
    %70 = tpu.matmul %68, %69, %cst_21 {dimension_numbers = #tpu.dot_dimension_numbers<[1], [0], [0], [1], [0, 0, 1, 1], [], []>} : vector<32x8xf32>, vector<8x128xf32>, vector<32x128xf32> -> vector<32x128xf32>
    %71 = arith.addf %49, %70 : vector<32x128xf32>
    %72 = vector.extract_strided_slice %3 {offsets = [0, 24], sizes = [32, 8], strides = [1, 1]} : vector<32x96xf32> to vector<32x8xf32>
    %73 = vector.shape_cast %72 : vector<32x8xf32> to vector<4x8x8xf32>
    %74 = vector.extract_strided_slice %3 {offsets = [0, 56], sizes = [32, 8], strides = [1, 1]} : vector<32x96xf32> to vector<32x8xf32>
    %75 = vector.shape_cast %74 : vector<32x8xf32> to vector<4x8x8xf32>
    %76 = vector.extract_strided_slice %3 {offsets = [0, 88], sizes = [32, 8], strides = [1, 1]} : vector<32x96xf32> to vector<32x8xf32>
    %77 = vector.shape_cast %76 : vector<32x8xf32> to vector<4x8x8xf32>
    "tpu.trace_start"() <{level = 10 : i32, message = "bqd,bkd->bqk"}> : () -> ()
    %cst_22 = arith.constant dense<0.000000e+00> : vector<4x8x8xf32>
    %78 = tpu.matmul %73, %75, %cst_22 {dimension_numbers = #tpu.dot_dimension_numbers<[2], [2], [1], [1], [0, 0, 0, 1, 1, 1], [0], [0]>} : vector<4x8x8xf32>, vector<4x8x8xf32>, vector<4x8x8xf32> -> vector<4x8x8xf32>
    "tpu.trace_stop"() : () -> ()
    %cst_23 = arith.constant dense<0xFF800000> : vector<4x8xf32>
    %79 = vector.multi_reduction <maximumf>, %78, %cst_23 [2] : vector<4x8x8xf32> to vector<4x8xf32>
    %80 = vector.shape_cast %79 : vector<4x8xf32> to vector<4x8x1xf32>
    %81 = vector.broadcast %80 : vector<4x8x1xf32> to vector<4x8x8xf32>
    %82 = arith.subf %78, %81 : vector<4x8x8xf32>
    %83 = math.exp %82 : vector<4x8x8xf32>
    %cst_24 = arith.constant dense<0.000000e+00> : vector<4x8xf32>
    %84 = vector.multi_reduction <add>, %83, %cst_24 [2] : vector<4x8x8xf32> to vector<4x8xf32>
    %85 = vector.shape_cast %84 : vector<4x8xf32> to vector<4x8x1xf32>
    %86 = tpu.reciprocal %85 {approx = true} : vector<4x8x1xf32> -> vector<4x8x1xf32>
    %87 = vector.broadcast %86 : vector<4x8x1xf32> to vector<4x8x8xf32>
    %88 = arith.mulf %83, %87 : vector<4x8x8xf32>
    "tpu.trace_start"() <{level = 10 : i32, message = "bqk,bkd->bqd"}> : () -> ()
    %cst_25 = arith.constant dense<0.000000e+00> : vector<4x8x8xf32>
    %89 = tpu.matmul %88, %77, %cst_25 {dimension_numbers = #tpu.dot_dimension_numbers<[2], [1], [1], [2], [0, 0, 0, 1, 1, 2], [0], [0]>} : vector<4x8x8xf32>, vector<4x8x8xf32>, vector<4x8x8xf32> -> vector<4x8x8xf32>
    "tpu.trace_stop"() : () -> ()
    %90 = vector.shape_cast %89 : vector<4x8x8xf32> to vector<32x8xf32>
    %91 = vector.extract_strided_slice %4 {offsets = [24, 0], sizes = [8, 128], strides = [1, 1]} : vector<32x128xf32> to vector<8x128xf32>
    %cst_26 = arith.constant dense<0.000000e+00> : vector<32x128xf32>
    %92 = tpu.matmul %90, %91, %cst_26 {dimension_numbers = #tpu.dot_dimension_numbers<[1], [0], [0], [1], [0, 0, 1, 1], [], []>} : vector<32x8xf32>, vector<8x128xf32>, vector<32x128xf32> -> vector<32x128xf32>
    %93 = arith.addf %71, %92 : vector<32x128xf32>
    %c0_27 = arith.constant 0 : index
    %c0_28 = arith.constant 0 : index
    %94 = vector.load %arg4[%c0_27, %c0_28] : memref<1x128xf32, #tpu.memory_space<vmem>>, vector<1x128xf32>
    %95 = vector.broadcast %94 : vector<1x128xf32> to vector<32x128xf32>
    %96 = arith.addf %93, %95 : vector<32x128xf32>
    %97 = vector.shape_cast %96 : vector<32x128xf32> to vector<4x8x128xf32>
    %c0_29 = arith.constant 0 : index
    %c0_30 = arith.constant 0 : index
    %c0_31 = arith.constant 0 : index
    %98 = vector.load %arg5[%c0_29, %c0_30, %c0_31] : memref<4x8x128xf32, #tpu.memory_space<vmem>>, vector<4x8x128xf32>
    tpu.vector_store %arg5[%c0_29, %c0_30, %c0_31], %97 {strides = array<i32>} : memref<4x8x128xf32, #tpu.memory_space<vmem>>, vector<4x8x128xf32>,
    return
  }
  func.func @transform_0(%arg0: i32) -> (i32, i32, i32) {
    %c0_i32 = arith.constant 0 : i32
    %c0_i32_0 = arith.constant 0 : i32
    %c0_i32_1 = arith.constant 0 : i32
    return %arg0, %c0_i32, %c0_i32_0 : i32, i32, i32
  }
  func.func @transform_1(%arg0: i32) -> (i32, i32) {
    %c0_i32 = arith.constant 0 : i32
    %c0_i32_0 = arith.constant 0 : i32
    %c0_i32_1 = arith.constant 0 : i32
    return %c0_i32, %c0_i32_0 : i32, i32
  }
  func.func @transform_2(%arg0: i32) -> (i32, i32) {
    %c0_i32 = arith.constant 0 : i32
    %c0_i32_0 = arith.constant 0 : i32
    %c0_i32_1 = arith.constant 0 : i32
    return %c0_i32, %c0_i32_0 : i32, i32
  }
  func.func @transform_3(%arg0: i32) -> (i32, i32) {
    %c0_i32 = arith.constant 0 : i32
    %c0_i32_0 = arith.constant 0 : i32
    %c0_i32_1 = arith.constant 0 : i32
    return %c0_i32, %c0_i32_0 : i32, i32
  }
  func.func @transform_4(%arg0: i32) -> (i32, i32, i32) {
    %c0_i32 = arith.constant 0 : i32
    %c0_i32_0 = arith.constant 0 : i32
    %c0_i32_1 = arith.constant 0 : i32
    return %arg0, %c0_i32, %c0_i32_0 : i32, i32, i32
  }
}

</mosaic_0001>

<llo_original>
// kernel: tpu_custom_call.1
$region0: #{tpu_custom_call.1}
  #allocation0 [shape = 'u32[]', space=smem, size = 0x4, offset = 0x4, fixed_abs, tag = 'smem constant byte address 0x4 - core index']
  #allocation1 [shape = 'u32[144,128]{1,0:T(1,128)}', space=vmem, size = 0x12000, scoped, tag = 'internal scratch']
  %s0 = inlined_call_operand.hbm [shape: f32[8,8,32], index: 0, kind: input, shape index: {}]
  %s1 = inlined_call_operand.hbm [shape: f32[32,96], index: 1, kind: input, shape index: {}]
  %s2 = inlined_call_operand.hbm [shape: f32[32,128], index: 2, kind: input, shape index: {}]
  %s3 = inlined_call_operand.vmem [shape: f32[1,128], index: 3, kind: input, shape index: {}]
  %s4 = inlined_call_operand.hbm [shape: f32[8,8,128], index: 4, kind: output, shape index: {}]
  %s5 = sld [smem:[#allocation0]]
  $region61: #{tpu_custom_call.1} parent=0
    _
  %s7 = ssub.s32 1, %s5
  %s8 = scalar_select 0, %s7, %s5
  $region1: #{tpu_custom_call.1} parent=0
    #allocation2 [shape = 'u8[32768]{0}', space=vmem, size = 0x8000, scoped, tag = 'input window, operand 0']
    #allocation3 [shape = 's32[2]{0}', space=sflag, size = 0x8, scoped, tag = 'scoped memory for tpu_custom_call.1']
    #allocation4 [shape = 's32[2]{0}', space=sflag, size = 0x8, scoped, tag = 'scoped memory for tpu_custom_call.1']
    #allocation5 [shape = 'u8[16384]{0}', space=vmem, size = 0x4000, scoped, tag = 'input window, operand 1, single buffered']
    #allocation6 [shape = 's32[1]{0}', space=sflag, size = 0x4, scoped, tag = 'scoped memory for tpu_custom_call.1']
    #allocation7 [shape = 'u8[16384]{0}', space=vmem, size = 0x4000, scoped, tag = 'input window, operand 2, single buffered']
    #allocation8 [shape = 'u8[32768]{0}', space=vmem, size = 0x8000, scoped, tag = 'output window, operand 0']
    %9 = vsyncpa [#allocation3], 0
    %s10 = scalar_lea.sflag [#allocation3], 1
    %11 = vsyncpa %s10, 0
    %12 = vsyncpa [#allocation6], 0
    %13 = vsyncpa [#allocation4], 0
    %s14 = scalar_lea.sflag [#allocation4], 1
    %15 = vsyncpa %s14, 0
    loop: start=0, step=1, limit=4
    $region2: #{tpu_custom_call.1} parent=1 // loop_pre_header
      _
    $region3: #{tpu_custom_call.1} parent=1 // loop_header
      %s17 = sphi 0, %s21
      %p18 = scmp.ge.s32.totalorder %s17, 4
      %s27 = sphi 0, %s29
      %s30 = sphi 0, %s27
      %s31 = sphi 0, %s30
      %s47 = sphi 0, %s31
      %s51 = sphi 0, %s51
      %s53 = sphi 0, %s51
      %s54 = sphi 0, %s53
      %s68 = sphi 0, %s54
      %s72 = sphi 0, %s72
      %s74 = sphi 0, %s72
      %s75 = sphi 0, %s74
      %s89 = sphi 0, %s75
      %s93 = sphi 0, %s93
      %s95 = sphi 0, %s93
      %s96 = sphi 0, %s95
      %s110 = sphi 0, %s96
      %s116 = sphi 0, %s118
      %s119 = sphi 0, %s116
      %s120 = sphi 0, %s119
      %s136 = sphi 0, %s120
    $region4: #{tpu_custom_call.1} parent=1 // loop_header_branch
      %20 = sbr.rel (%p18) target = $region8
    $region5: #{tpu_custom_call.1} parent=1 // loop_body
      %s22 = ssub.s32 %s17, 1
      %s23 = ssub.s32 %s17, 2
      %s24 = sadd.s32 %s17, 1
      %s25 = ssub.s32 %s17, %s24
      %p26 = scmp.eq.s32.totalorder %s25, 0
      %s28 = sadd.s32 %s27, 1
      %s29 = scalar_select %p26, %s27, %s28
      %p32 = pneg %p26
      %p33 = scmp.eq.s32.totalorder %s17, 1
      %p34 = por %p32, %p33
      %p35 = scmp.ne.s32.totalorder %s27, %s30
      %p36 = scmp.eq.s32.totalorder %s17, 0
      %p37 = por %p35, %p36
      %p38 = scmp.ne.s32.totalorder %s27, %s30
      %p39 = scmp.eq.s32.totalorder %s22, 1
      %p40 = por %p38, %p39
      %p41 = scmp.ne.s32.totalorder %s30, %s31
      %p42 = scmp.eq.s32.totalorder %s22, 0
      %p43 = por %p41, %p42
      %p44 = scmp.ne.s32.totalorder %s30, %s31
      %p45 = scmp.eq.s32.totalorder %s23, 1
      %p46 = por %p44, %p45
      %p48 = scmp.ne.s32.totalorder %s31, %s47
      %p49 = scmp.eq.s32.totalorder %s23, 0
      %p50 = por %p48, %p49
      %s52 = sadd.s32 %s51, 1
      %p55 = scmp.eq.s32.totalorder %s17, 1
      %p56 = scmp.ne.s32.totalorder %s51, %s53
      %p57 = scmp.eq.s32.totalorder %s17, 0
      %p58 = por %p56, %p57
      %p59 = scmp.ne.s32.totalorder %s51, %s53
      %p60 = scmp.eq.s32.totalorder %s22, 1
      %p61 = por %p59, %p60
      %p62 = scmp.ne.s32.totalorder %s53, %s54
      %p63 = scmp.eq.s32.totalorder %s22, 0
      %p64 = por %p62, %p63
      %p65 = scmp.ne.s32.totalorder %s53, %s54
      %p66 = scmp.eq.s32.totalorder %s23, 1
      %p67 = por %p65, %p66
      %p69 = scmp.ne.s32.totalorder %s54, %s68
      %p70 = scmp.eq.s32.totalorder %s23, 0
      %p71 = por %p69, %p70
      %s73 = sadd.s32 %s72, 1
      %p76 = scmp.eq.s32.totalorder %s17, 1
      %p77 = scmp.ne.s32.totalorder %s72, %s74
      %p78 = scmp.eq.s32.totalorder %s17, 0
      %p79 = por %p77, %p78
      %p80 = scmp.ne.s32.totalorder %s72, %s74
      %p81 = scmp.eq.s32.totalorder %s22, 1
      %p82 = por %p80, %p81
      %p83 = scmp.ne.s32.totalorder %s74, %s75
      %p84 = scmp.eq.s32.totalorder %s22, 0
      %p85 = por %p83, %p84
      %p86 = scmp.ne.s32.totalorder %s74, %s75
      %p87 = scmp.eq.s32.totalorder %s23, 1
      %p88 = por %p86, %p87
      %p90 = scmp.ne.s32.totalorder %s75, %s89
      %p91 = scmp.eq.s32.totalorder %s23, 0
      %p92 = por %p90, %p91
      %s94 = sadd.s32 %s93, 1
      %p97 = scmp.eq.s32.totalorder %s17, 1
      %p98 = scmp.ne.s32.totalorder %s93, %s95
      %p99 = scmp.eq.s32.totalorder %s17, 0
      %p100 = por %p98, %p99
      %p101 = scmp.ne.s32.totalorder %s93, %s95
      %p102 = scmp.eq.s32.totalorder %s22, 1
      %p103 = por %p101, %p102
      %p104 = scmp.ne.s32.totalorder %s95, %s96
      %p105 = scmp.eq.s32.totalorder %s22, 0
      %p106 = por %p104, %p105
      %p107 = scmp.ne.s32.totalorder %s95, %s96
      %p108 = scmp.eq.s32.totalorder %s23, 1
      %p109 = por %p107, %p108
      %p111 = scmp.ne.s32.totalorder %s96, %s110
      %p112 = scmp.eq.s32.totalorder %s23, 0
      %p113 = por %p111, %p112
      %s114 = ssub.s32 %s17, %s24
      %p115 = scmp.eq.s32.totalorder %s114, 0
      %s117 = sadd.s32 %s116, 1
      %s118 = scalar_select %p115, %s116, %s117
      %p121 = pneg %p115
      %p122 = scmp.eq.s32.totalorder %s17, 1
      %p123 = por %p121, %p122
      %p124 = scmp.ne.s32.totalorder %s116, %s119
      %p125 = scmp.eq.s32.totalorder %s17, 0
      %p126 = por %p124, %p125
      %p127 = scmp.ne.s32.totalorder %s116, %s119
      %p128 = scmp.eq.s32.totalorder %s22, 1
      %p129 = por %p127, %p128
      %p130 = scmp.ne.s32.totalorder %s119, %s120
      %p131 = scmp.eq.s32.totalorder %s22, 0
      %p132 = por %p130, %p131
      %p133 = scmp.ne.s32.totalorder %s119, %s120
      %p134 = scmp.eq.s32.totalorder %s23, 1
      %p135 = por %p133, %p134
      %p137 = scmp.ne.s32.totalorder %s120, %s136
      %p138 = scmp.eq.s32.totalorder %s23, 0
      %p139 = por %p137, %p138
      %p140 = scmp.le.s32.totalorder 1, %s17
      %p141 = scmp.lt.s32.totalorder %s17, 3
      %p142 = pnand %p140, %p141
      %p143 = pneg %p142
      // Predicated region
      $region9: #{tpu_custom_call.1} parent=5 // pred_check
        _
      $region10: #{tpu_custom_call.1} parent=5 // pred_check_branch
        %145 = sbr.rel (%p142) target = $region12
      $region11: #{tpu_custom_call.1} parent=5 // pred_region
        %s146 = ssub.s32 %s17, 1
        // Predicated region
        $region13: #{tpu_custom_call.1} parent=11 // pred_check
          %p147 = pneg %p64
        $region14: #{tpu_custom_call.1} parent=11 // pred_check_branch
          %149 = sbr.rel (%p147) target = $region16
        $region15: #{tpu_custom_call.1} parent=11 // pred_region
          %s151 = ssub.s32 512, 512
          %152 = vsyncadd [#allocation6], %s151
          %s153 = sshll.u32 [#allocation5], 4
          %s154 = int_to_ptr.vmem [resolvable:$true] %s153
          %159 = dma.hbm_to_vmem [thread:$0]  %s1, 512, %s154, [#allocation6], 128, 128, 8
        $region16: #{tpu_custom_call.1} parent=11 // pred_fallthru
          _
        // Predicated region
        $region17: #{tpu_custom_call.1} parent=11 // pred_check
          %p160 = pneg %p85
        $region18: #{tpu_custom_call.1} parent=11 // pred_check_branch
          %162 = sbr.rel (%p160) target = $region20
        $region19: #{tpu_custom_call.1} parent=11 // pred_region
          %s164 = ssub.s32 512, 512
          %165 = vsyncadd [#allocation6], %s164
          %s166 = sshll.u32 [#allocation7], 4
          %s167 = int_to_ptr.vmem [resolvable:$true] %s166
          %172 = dma.hbm_to_vmem [thread:$0]  %s2, 512, %s167, [#allocation6], 128, 128, 8
        $region20: #{tpu_custom_call.1} parent=11 // pred_fallthru
          _
        // Predicated region
        $region21: #{tpu_custom_call.1} parent=11 // pred_check
          %p173 = pneg %p106
        $region22: #{tpu_custom_call.1} parent=11 // pred_check_branch
          %175 = sbr.rel (%p173) target = $region24
        $region23: #{tpu_custom_call.1} parent=11 // pred_region
          _
        $region24: #{tpu_custom_call.1} parent=11 // pred_fallthru
          _
      $region12: #{tpu_custom_call.1} parent=5 // pred_fallthru
        _
      %p176 = scmp.lt.s32.totalorder %s17, 2
      // Predicated region
      $region25: #{tpu_custom_call.1} parent=5 // pred_check
        %p177 = pneg %p176
      $region26: #{tpu_custom_call.1} parent=5 // pred_check_branch
        %179 = sbr.rel (%p177) target = $region28
      $region27: #{tpu_custom_call.1} parent=5 // pred_region
        // Predicated region
        $region29: #{tpu_custom_call.1} parent=27 // pred_check
          %p180 = pneg %p37
        $region30: #{tpu_custom_call.1} parent=27 // pred_check_branch
          %182 = sbr.rel (%p180) target = $region32
        $region31: #{tpu_custom_call.1} parent=27 // pred_region
          %s183 = sand.u32 %s27, 1
          %s184 = scalar_lea.sflag [#allocation3], %s183
          %s185 = sand.u32 %s27, 1
          %s186 = smul.addr %s185, 32
          %s187 = scalar_lea.vmem [#allocation2], %s186
          %s188 = smul.u32 4, %s17
          %s190 = ssub.s32 512, 512
          %191 = vsyncadd %s184, %s190
          %s192 = smul.addr %s188, 128
          %s193 = scalar_lea.hbm %s0, %s192
          %s194 = sshll.u32 %s187, 4
          %s195 = int_to_ptr.vmem [resolvable:$true] %s194
          %200 = dma.hbm_to_vmem [thread:$0]  %s193, 512, %s195, %s184, 128, 128, 8
        $region32: #{tpu_custom_call.1} parent=27 // pred_fallthru
          _
      $region28: #{tpu_custom_call.1} parent=5 // pred_fallthru
        _
      %p201 = scmp.le.s32.totalorder 1, %s17
      %p202 = scmp.lt.s32.totalorder %s17, 3
      %p203 = pnand %p201, %p202
      %p204 = pneg %p203
      // Predicated region
      $region33: #{tpu_custom_call.1} parent=5 // pred_check
        _
      $region34: #{tpu_custom_call.1} parent=5 // pred_check_branch
        %206 = sbr.rel (%p203) target = $region36
      $region35: #{tpu_custom_call.1} parent=5 // pred_region
        %s207 = ssub.s32 %s17, 1
        %s208 = sand.u32 %s30, 1
        %s209 = scalar_lea.sflag [#allocation3], %s208
        %s210 = sand.u32 %s30, 1
        %s211 = smul.addr %s210, 32
        %s212 = scalar_lea.vmem [#allocation2], %s211
        // Predicated region
        $region37: #{tpu_custom_call.1} parent=35 // pred_check
          %p213 = pneg %p43
        $region38: #{tpu_custom_call.1} parent=35 // pred_check_branch
          %215 = sbr.rel (%p213) target = $region40
        $region39: #{tpu_custom_call.1} parent=35 // pred_region
          %216 = dma.done %s209, 512
        $region40: #{tpu_custom_call.1} parent=35 // pred_fallthru
          _
        // Predicated region
        $region41: #{tpu_custom_call.1} parent=35 // pred_check
          %p217 = pneg %p64
        $region42: #{tpu_custom_call.1} parent=35 // pred_check_branch
          %219 = sbr.rel (%p217) target = $region44
        $region43: #{tpu_custom_call.1} parent=35 // pred_region
          %220 = dma.done [#allocation6], 512
        $region44: #{tpu_custom_call.1} parent=35 // pred_fallthru
          _
        // Predicated region
        $region45: #{tpu_custom_call.1} parent=35 // pred_check
          %p221 = pneg %p85
        $region46: #{tpu_custom_call.1} parent=35 // pred_check_branch
          %223 = sbr.rel (%p221) target = $region48
        $region47: #{tpu_custom_call.1} parent=35 // pred_region
          %224 = dma.done [#allocation6], 512
        $region48: #{tpu_custom_call.1} parent=35 // pred_fallthru
          _
        %s225 = sand.u32 %s30, 1
        %s226 = scalar_lea.sflag [#allocation3], %s225
        %s227 = sand.u32 %s30, 1
        %s228 = smul.addr %s227, 32
        %s229 = scalar_lea.vmem [#allocation2], %s228
        %p230 = pneg %p43
        %p231 = pneg %p40
        %p232 = pneg %p64
        %p233 = pneg %p61
        %p234 = pneg %p85
        %p235 = pneg %p82
        %p236 = pneg %p106
        %p237 = pneg %p103
        %p238 = pneg %p132
        %p239 = pneg %p129
        %s240 = sand.u32 %s119, 1
        %s241 = scalar_lea.sflag [#allocation4], %s240
        %s242 = sand.u32 %s119, 1
        %s243 = smul.addr %s242, 32
        %s244 = scalar_lea.vmem [#allocation8], %s243
        %s245 = smul.u32 4, %s22
        %s246 = smul.u32 4, %s22
        %v247 = vld [vmem:[%s212] sm:$0xff]
        %v248 = vld [vmem:[%s212 + $0x8] sm:$0xff]
        %v249 = vld [vmem:[%s212 + $0x10] sm:$0xff]
        %v250 = vld [vmem:[%s212 + $0x18] sm:$0xff]
        %v251 = vld [vmem:[#allocation5] sm:$0xff]
        %v252 = vld [vmem:[#allocation5 + $0x8] sm:$0xff]
        %v253 = vld [vmem:[#allocation5 + $0x10] sm:$0xff]
        %v254 = vld [vmem:[#allocation5 + $0x18] sm:$0xff]
        %vm255 = vcmask 261120
        %v257 = vsel %vm255, %v247, 0
        %v260 = vsel %vm255, %v248, 0
        %v263 = vsel %vm255, %v249, 0
        %v266 = vsel %vm255, %v250, 0
        %268 = vmatprep.subr.mxu0 0.0
        %269 = vmatpush1.msra.mxu0 %v251
        %270 = vmatprep.subr.mxu0 0.0
        %271 = vmatpush1.msra.mxu0 %v252
        %272 = vmatprep.subr.mxu0 0.0
        %273 = vmatpush1.msra.mxu0 %v253
        %274 = vmatprep.subr.mxu0 0.0
        %275 = vmatpush1.msra.mxu0 %v254
        %276 = vmatprep.subr.mxu0 0.0
        %277 = vmatpush1.msra.mxu0 0.0
        %278 = vmatprep.subr.mxu0 0.0
        %279 = vmatpush1.msra.mxu0 0.0
        %280 = vmatprep.subr.mxu0 0.0
        %281 = vmatpush1.msra.mxu0 0.0
        %282 = vmatprep.subr.mxu0 0.0
        %283 = vmatpush1.msra.mxu0 0.0
        %284 = vmatprep.subr.mxu0 0.0
        %285 = vmatpush1.msra.mxu0 0.0
        %286 = vmatprep.subr.mxu0 0.0
        %287 = vmatpush1.msra.mxu0 0.0
        %288 = vmatprep.subr.mxu0 0.0
        %289 = vmatpush1.msra.mxu0 0.0
        %290 = vmatprep.subr.mxu0 0.0
        %291 = vmatpush1.msra.mxu0 0.0
        %292 = vmatprep.subr.mxu0 0.0
        %293 = vmatpush1.msra.mxu0 0.0
        %294 = vmatprep.subr.mxu0 0.0
        %295 = vmatpush1.msra.mxu0 0.0
        %296 = vmatprep.subr.mxu0 0.0
        %297 = vmatpush1.msra.mxu0 0.0
        %298 = vmatprep.subr.mxu0 0.0
        %299 = vmatpush1.msra.mxu0 0.0
        %300 = vmatprep.subr.mxu0 0.0
        %301 = vmatpush1.msra.mxu0 0.0
        %302 = vmatprep.subr.mxu0 0.0
        %303 = vmatpush1.msra.mxu0 0.0
        %304 = vmatprep.subr.mxu0 0.0
        %305 = vmatpush1.msra.mxu0 0.0
        %306 = vmatprep.subr.mxu0 0.0
        %307 = vmatpush1.msra.mxu0 0.0
        %308 = vmatprep.subr.mxu0 0.0
        %309 = vmatpush1.msra.mxu0 0.0
        %310 = vmatprep.subr.mxu0 0.0
        %311 = vmatpush1.msra.mxu0 0.0
        %312 = vmatprep.subr.mxu0 0.0
        %313 = vmatpush1.msra.mxu0 0.0
        %314 = vmatprep.subr.mxu0 0.0
        %315 = vmatpush1.msra.mxu0 0.0
        %316 = vmatprep.subr.mxu0 0.0
        %317 = vmatpush1.msra.mxu0 0.0
        %318 = vmatprep.subr.mxu0 0.0
        %319 = vmatpush1.msra.mxu0 0.0
        %320 = vmatprep.subr.mxu0 0.0
        %321 = vmatpush1.msra.mxu0 0.0
        %322 = vmatprep.subr.mxu0 0.0
        %323 = vmatpush1.msra.mxu0 0.0
        %324 = vmatprep.subr.mxu0 0.0
        %325 = vmatpush1.msra.mxu0 0.0
        %326 = vmatprep.subr.mxu0 0.0
        %327 = vmatpush1.msra.mxu0 0.0
        %328 = vmatprep.subr.mxu0 0.0
        %329 = vmatpush1.msra.mxu0 0.0
        %330 = vmatprep.subr.mxu0 0.0
        %331 = vmatpush1.msra.mxu0 0.0
        %332 = vmatprep.mubr.f32.mxu0 0.0
        %333 = vmatmul.mubr.f32.gmra.mrb[0].mxu0 %v257
        %v334 = vpop.f32.mrb[0].mxu0
        %v335 = vadd.f32 0.0, %v334
        %v336 = vpop.f32.mrb[0].mxu0
        %337 = vmatprep.mubr.f32.mxu0 0.0
        %338 = vmatmul.mubr.f32.gmra.mrb[0].mxu0 %v260
        %v339 = vpop.f32.mrb[0].mxu0
        %v340 = vadd.f32 0.0, %v339
        %v341 = vpop.f32.mrb[0].mxu0
        %342 = vmatprep.mubr.f32.mxu0 0.0
        %343 = vmatmul.mubr.f32.gmra.mrb[0].mxu0 %v263
        %v344 = vpop.f32.mrb[0].mxu0
        %v345 = vadd.f32 0.0, %v344
        %v346 = vpop.f32.mrb[0].mxu0
        %347 = vmatprep.mubr.f32.mxu0 0.0
        %348 = vmatmul.mubr.f32.gmra.mrb[0].mxu0 %v266
        %v349 = vpop.f32.mrb[0].mxu0
        %v350 = vadd.f32 0.0, %v349
        %v351 = vpop.f32.mrb[0].mxu0
        %352 = vdwg.mxu0
        %v353 = vld [vmem:[#allocation7] sm:$0xff]
        %v354 = vld [vmem:[#allocation7 + $0x8] sm:$0xff]
        %v355 = vld [vmem:[#allocation7 + $0x10] sm:$0xff]
        %v356 = vld [vmem:[#allocation7 + $0x18] sm:$0xff]
        %358 = vrot.lane.b32.xlu0 %v335, 96
        %v359 = vpop.permute.xlu0 %358
        %vm360 = vcmask 64512
        %v361 = vsel %vm360, %v335, 0
        %v363 = vsel %vm360, %v359, 0
        %365 = vmatprep.subr.mxu0 0.0
        %366 = vmatpush1.xpose.msra.mxu0 %v363
        %367 = vmatprep.subr.mxu0 0.0
        %368 = vmatpush1.xpose.msra.mxu0 0.0
        %369 = vmatprep.subr.mxu0 0.0
        %370 = vmatpush1.xpose.msra.mxu0 0.0
        %371 = vmatprep.subr.mxu0 0.0
        %372 = vmatpush1.xpose.msra.mxu0 0.0
        %373 = vmatprep.subr.mxu0 0.0
        %374 = vmatpush1.xpose.msra.mxu0 0.0
        %375 = vmatprep.subr.mxu0 0.0
        %376 = vmatpush1.xpose.msra.mxu0 0.0
        %377 = vmatprep.subr.mxu0 0.0
        %378 = vmatpush1.xpose.msra.mxu0 0.0
        %379 = vmatprep.subr.mxu0 0.0
        %380 = vmatpush1.xpose.msra.mxu0 0.0
        %381 = vmatprep.subr.mxu0 0.0
        %382 = vmatpush1.xpose.msra.mxu0 0.0
        %383 = vmatprep.subr.mxu0 0.0
        %384 = vmatpush1.xpose.msra.mxu0 0.0
        %385 = vmatprep.subr.mxu0 0.0
        %386 = vmatpush1.xpose.msra.mxu0 0.0
        %387 = vmatprep.subr.mxu0 0.0
        %388 = vmatpush1.xpose.msra.mxu0 0.0
        %389 = vmatprep.subr.mxu0 0.0
        %390 = vmatpush1.xpose.msra.mxu0 0.0
        %391 = vmatprep.subr.mxu0 0.0
        %392 = vmatpush1.xpose.msra.mxu0 0.0
        %393 = vmatprep.subr.mxu0 0.0
        %394 = vmatpush1.xpose.msra.mxu0 0.0
        %395 = vmatprep.subr.mxu0 0.0
        %396 = vmatpush1.xpose.msra.mxu0 0.0
        %397 = vmatprep.subr.mxu0 0.0
        %398 = vmatpush1.xpose.msra.mxu0 0.0
        %399 = vmatprep.subr.mxu0 0.0
        %400 = vmatpush1.xpose.msra.mxu0 0.0
        %401 = vmatprep.subr.mxu0 0.0
        %402 = vmatpush1.xpose.msra.mxu0 0.0
        %403 = vmatprep.subr.mxu0 0.0
        %404 = vmatpush1.xpose.msra.mxu0 0.0
        %405 = vmatprep.subr.mxu0 0.0
        %406 = vmatpush1.xpose.msra.mxu0 0.0
        %407 = vmatprep.subr.mxu0 0.0
        %408 = vmatpush1.xpose.msra.mxu0 0.0
        %409 = vmatprep.subr.mxu0 0.0
        %410 = vmatpush1.xpose.msra.mxu0 0.0
        %411 = vmatprep.subr.mxu0 0.0
        %412 = vmatpush1.xpose.msra.mxu0 0.0
        %413 = vmatprep.subr.mxu0 0.0
        %414 = vmatpush1.xpose.msra.mxu0 0.0
        %415 = vmatprep.subr.mxu0 0.0
        %416 = vmatpush1.xpose.msra.mxu0 0.0
        %417 = vmatprep.subr.mxu0 0.0
        %418 = vmatpush1.xpose.msra.mxu0 0.0
        %419 = vmatprep.subr.mxu0 0.0
        %420 = vmatpush1.xpose.msra.mxu0 0.0
        %421 = vmatprep.subr.mxu0 0.0
        %422 = vmatpush1.xpose.msra.mxu0 0.0
        %423 = vmatprep.subr.mxu0 0.0
        %424 = vmatpush1.xpose.msra.mxu0 0.0
        %425 = vmatprep.subr.mxu0 0.0
        %426 = vmatpush1.xpose.msra.mxu0 0.0
        %427 = vmatprep.subr.mxu0 0.0
        %428 = vmatpush1.xpose.msra.mxu0 0.0
        %429 = vmatprep.mubr.f32.mxu0 0.0
        %430 = vmatmul.mubr.f32.gmra.mrb[0].mxu0 %v361
        %v431 = vpop.f32.mrb[0].mxu0
        %v432 = vadd.f32 0.0, %v431
        %v433 = vpop.f32.mrb[0].mxu0
        %434 = vdwg.mxu0
        %436 = vrot.lane.b32.xlu0 %v340, 96
        %v437 = vpop.permute.xlu0 %436
        %v438 = vsel %vm360, %v340, 0
        %v440 = vsel %vm360, %v437, 0
        %442 = vmatprep.subr.mxu0 0.0
        %443 = vmatpush1.xpose.msra.mxu0 %v440
        %444 = vmatprep.subr.mxu0 0.0
        %445 = vmatpush1.xpose.msra.mxu0 0.0
        %446 = vmatprep.subr.mxu0 0.0
        %447 = vmatpush1.xpose.msra.mxu0 0.0
        %448 = vmatprep.subr.mxu0 0.0
        %449 = vmatpush1.xpose.msra.mxu0 0.0
        %450 = vmatprep.subr.mxu0 0.0
        %451 = vmatpush1.xpose.msra.mxu0 0.0
        %452 = vmatprep.subr.mxu0 0.0
        %453 = vmatpush1.xpose.msra.mxu0 0.0
        %454 = vmatprep.subr.mxu0 0.0
        %455 = vmatpush1.xpose.msra.mxu0 0.0
        %456 = vmatprep.subr.mxu0 0.0
        %457 = vmatpush1.xpose.msra.mxu0 0.0
        %458 = vmatprep.subr.mxu0 0.0
        %459 = vmatpush1.xpose.msra.mxu0 0.0
        %460 = vmatprep.subr.mxu0 0.0
        %461 = vmatpush1.xpose.msra.mxu0 0.0
        %462 = vmatprep.subr.mxu0 0.0
        %463 = vmatpush1.xpose.msra.mxu0 0.0
        %464 = vmatprep.subr.mxu0 0.0
        %465 = vmatpush1.xpose.msra.mxu0 0.0
        %466 = vmatprep.subr.mxu0 0.0
        %467 = vmatpush1.xpose.msra.mxu0 0.0
        %468 = vmatprep.subr.mxu0 0.0
        %469 = vmatpush1.xpose.msra.mxu0 0.0
        %470 = vmatprep.subr.mxu0 0.0
        %471 = vmatpush1.xpose.msra.mxu0 0.0
        %472 = vmatprep.subr.mxu0 0.0
        %473 = vmatpush1.xpose.msra.mxu0 0.0
        %474 = vmatprep.subr.mxu0 0.0
        %475 = vmatpush1.xpose.msra.mxu0 0.0
        %476 = vmatprep.subr.mxu0 0.0
        %477 = vmatpush1.xpose.msra.mxu0 0.0
        %478 = vmatprep.subr.mxu0 0.0
        %479 = vmatpush1.xpose.msra.mxu0 0.0
        %480 = vmatprep.subr.mxu0 0.0
        %481 = vmatpush1.xpose.msra.mxu0 0.0
        %482 = vmatprep.subr.mxu0 0.0
        %483 = vmatpush1.xpose.msra.mxu0 0.0
        %484 = vmatprep.subr.mxu0 0.0
        %485 = vmatpush1.xpose.msra.mxu0 0.0
        %486 = vmatprep.subr.mxu0 0.0
        %487 = vmatpush1.xpose.msra.mxu0 0.0
        %488 = vmatprep.subr.mxu0 0.0
        %489 = vmatpush1.xpose.msra.mxu0 0.0
        %490 = vmatprep.subr.mxu0 0.0
        %491 = vmatpush1.xpose.msra.mxu0 0.0
        %492 = vmatprep.subr.mxu0 0.0
        %493 = vmatpush1.xpose.msra.mxu0 0.0
        %494 = vmatprep.subr.mxu0 0.0
        %495 = vmatpush1.xpose.msra.mxu0 0.0
        %496 = vmatprep.subr.mxu0 0.0
        %497 = vmatpush1.xpose.msra.mxu0 0.0
        %498 = vmatprep.subr.mxu0 0.0
        %499 = vmatpush1.xpose.msra.mxu0 0.0
        %500 = vmatprep.subr.mxu0 0.0
        %501 = vmatpush1.xpose.msra.mxu0 0.0
        %502 = vmatprep.subr.mxu0 0.0
        %503 = vmatpush1.xpose.msra.mxu0 0.0
        %504 = vmatprep.subr.mxu0 0.0
        %505 = vmatpush1.xpose.msra.mxu0 0.0
        %506 = vmatprep.mubr.f32.mxu0 0.0
        %507 = vmatmul.mubr.f32.gmra.mrb[0].mxu0 %v438
        %v508 = vpop.f32.mrb[0].mxu0
        %v509 = vadd.f32 0.0, %v508
        %v510 = vpop.f32.mrb[0].mxu0
        %511 = vdwg.mxu0
        %513 = vrot.lane.b32.xlu0 %v345, 96
        %v514 = vpop.permute.xlu0 %513
        %v515 = vsel %vm360, %v345, 0
        %v517 = vsel %vm360, %v514, 0
        %519 = vmatprep.subr.mxu0 0.0
        %520 = vmatpush1.xpose.msra.mxu0 %v517
        %521 = vmatprep.subr.mxu0 0.0
        %522 = vmatpush1.xpose.msra.mxu0 0.0
        %523 = vmatprep.subr.mxu0 0.0
        %524 = vmatpush1.xpose.msra.mxu0 0.0
        %525 = vmatprep.subr.mxu0 0.0
        %526 = vmatpush1.xpose.msra.mxu0 0.0
        %527 = vmatprep.subr.mxu0 0.0
        %528 = vmatpush1.xpose.msra.mxu0 0.0
        %529 = vmatprep.subr.mxu0 0.0
        %530 = vmatpush1.xpose.msra.mxu0 0.0
        %531 = vmatprep.subr.mxu0 0.0
        %532 = vmatpush1.xpose.msra.mxu0 0.0
        %533 = vmatprep.subr.mxu0 0.0
        %534 = vmatpush1.xpose.msra.mxu0 0.0
        %535 = vmatprep.subr.mxu0 0.0
        %536 = vmatpush1.xpose.msra.mxu0 0.0
        %537 = vmatprep.subr.mxu0 0.0
        %538 = vmatpush1.xpose.msra.mxu0 0.0
        %539 = vmatprep.subr.mxu0 0.0
        %540 = vmatpush1.xpose.msra.mxu0 0.0
        %541 = vmatprep.subr.mxu0 0.0
        %542 = vmatpush1.xpose.msra.mxu0 0.0
        %543 = vmatprep.subr.mxu0 0.0
        %544 = vmatpush1.xpose.msra.mxu0 0.0
        %545 = vmatprep.subr.mxu0 0.0
        %546 = vmatpush1.xpose.msra.mxu0 0.0
        %547 = vmatprep.subr.mxu0 0.0
        %548 = vmatpush1.xpose.msra.mxu0 0.0
        %549 = vmatprep.subr.mxu0 0.0
        %550 = vmatpush1.xpose.msra.mxu0 0.0
        %551 = vmatprep.subr.mxu0 0.0
        %552 = vmatpush1.xpose.msra.mxu0 0.0
        %553 = vmatprep.subr.mxu0 0.0
        %554 = vmatpush1.xpose.msra.mxu0 0.0
        %555 = vmatprep.subr.mxu0 0.0
        %556 = vmatpush1.xpose.msra.mxu0 0.0
        %557 = vmatprep.subr.mxu0 0.0
        %558 = vmatpush1.xpose.msra.mxu0 0.0
        %559 = vmatprep.subr.mxu0 0.0
        %560 = vmatpush1.xpose.msra.mxu0 0.0
        %561 = vmatprep.subr.mxu0 0.0
        %562 = vmatpush1.xpose.msra.mxu0 0.0
        %563 = vmatprep.subr.mxu0 0.0
        %564 = vmatpush1.xpose.msra.mxu0 0.0
        %565 = vmatprep.subr.mxu0 0.0
        %566 = vmatpush1.xpose.msra.mxu0 0.0
        %567 = vmatprep.subr.mxu0 0.0
        %568 = vmatpush1.xpose.msra.mxu0 0.0
        %569 = vmatprep.subr.mxu0 0.0
        %570 = vmatpush1.xpose.msra.mxu0 0.0
        %571 = vmatprep.subr.mxu0 0.0
        %572 = vmatpush1.xpose.msra.mxu0 0.0
        %573 = vmatprep.subr.mxu0 0.0
        %574 = vmatpush1.xpose.msra.mxu0 0.0
        %575 = vmatprep.subr.mxu0 0.0
        %576 = vmatpush1.xpose.msra.mxu0 0.0
        %577 = vmatprep.subr.mxu0 0.0
        %578 = vmatpush1.xpose.msra.mxu0 0.0
        %579 = vmatprep.subr.mxu0 0.0
        %580 = vmatpush1.xpose.msra.mxu0 0.0
        %581 = vmatprep.subr.mxu0 0.0
        %582 = vmatpush1.xpose.msra.mxu0 0.0
        %583 = vmatprep.mubr.f32.mxu0 0.0
        %584 = vmatmul.mubr.f32.gmra.mrb[0].mxu0 %v515
        %v585 = vpop.f32.mrb[0].mxu0
        %v586 = vadd.f32 0.0, %v585
        %v587 = vpop.f32.mrb[0].mxu0
        %588 = vdwg.mxu0
        %590 = vrot.lane.b32.xlu0 %v350, 96
        %v591 = vpop.permute.xlu0 %590
        %v592 = vsel %vm360, %v350, 0
        %v594 = vsel %vm360, %v591, 0
        %596 = vmatprep.subr.mxu0 0.0
        %597 = vmatpush1.xpose.msra.mxu0 %v594
        %598 = vmatprep.subr.mxu0 0.0
        %599 = vmatpush1.xpose.msra.mxu0 0.0
        %600 = vmatprep.subr.mxu0 0.0
        %601 = vmatpush1.xpose.msra.mxu0 0.0
        %602 = vmatprep.subr.mxu0 0.0
        %603 = vmatpush1.xpose.msra.mxu0 0.0
        %604 = vmatprep.subr.mxu0 0.0
        %605 = vmatpush1.xpose.msra.mxu0 0.0
        %606 = vmatprep.subr.mxu0 0.0
        %607 = vmatpush1.xpose.msra.mxu0 0.0
        %608 = vmatprep.subr.mxu0 0.0
        %609 = vmatpush1.xpose.msra.mxu0 0.0
        %610 = vmatprep.subr.mxu0 0.0
        %611 = vmatpush1.xpose.msra.mxu0 0.0
        %612 = vmatprep.subr.mxu0 0.0
        %613 = vmatpush1.xpose.msra.mxu0 0.0
        %614 = vmatprep.subr.mxu0 0.0
        %615 = vmatpush1.xpose.msra.mxu0 0.0
        %616 = vmatprep.subr.mxu0 0.0
        %617 = vmatpush1.xpose.msra.mxu0 0.0
        %618 = vmatprep.subr.mxu0 0.0
        %619 = vmatpush1.xpose.msra.mxu0 0.0
        %620 = vmatprep.subr.mxu0 0.0
        %621 = vmatpush1.xpose.msra.mxu0 0.0
        %622 = vmatprep.subr.mxu0 0.0
        %623 = vmatpush1.xpose.msra.mxu0 0.0
        %624 = vmatprep.subr.mxu0 0.0
        %625 = vmatpush1.xpose.msra.mxu0 0.0
        %626 = vmatprep.subr.mxu0 0.0
        %627 = vmatpush1.xpose.msra.mxu0 0.0
        %628 = vmatprep.subr.mxu0 0.0
        %629 = vmatpush1.xpose.msra.mxu0 0.0
        %630 = vmatprep.subr.mxu0 0.0
        %631 = vmatpush1.xpose.msra.mxu0 0.0
        %632 = vmatprep.subr.mxu0 0.0
        %633 = vmatpush1.xpose.msra.mxu0 0.0
        %634 = vmatprep.subr.mxu0 0.0
        %635 = vmatpush1.xpose.msra.mxu0 0.0
        %636 = vmatprep.subr.mxu0 0.0
        %637 = vmatpush1.xpose.msra.mxu0 0.0
        %638 = vmatprep.subr.mxu0 0.0
        %639 = vmatpush1.xpose.msra.mxu0 0.0
        %640 = vmatprep.subr.mxu0 0.0
        %641 = vmatpush1.xpose.msra.mxu0 0.0
        %642 = vmatprep.subr.mxu0 0.0
        %643 = vmatpush1.xpose.msra.mxu0 0.0
        %644 = vmatprep.subr.mxu0 0.0
        %645 = vmatpush1.xpose.msra.mxu0 0.0
        %646 = vmatprep.subr.mxu0 0.0
        %647 = vmatpush1.xpose.msra.mxu0 0.0
        %648 = vmatprep.subr.mxu0 0.0
        %649 = vmatpush1.xpose.msra.mxu0 0.0
        %650 = vmatprep.subr.mxu0 0.0
        %651 = vmatpush1.xpose.msra.mxu0 0.0
        %652 = vmatprep.subr.mxu0 0.0
        %653 = vmatpush1.xpose.msra.mxu0 0.0
        %654 = vmatprep.subr.mxu0 0.0
        %655 = vmatpush1.xpose.msra.mxu0 0.0
        %656 = vmatprep.subr.mxu0 0.0
        %657 = vmatpush1.xpose.msra.mxu0 0.0
        %658 = vmatprep.subr.mxu0 0.0
        %659 = vmatpush1.xpose.msra.mxu0 0.0
        %660 = vmatprep.mubr.f32.mxu0 0.0
        %661 = vmatmul.mubr.f32.gmra.mrb[0].mxu0 %v592
        %v662 = vpop.f32.mrb[0].mxu0
        %v663 = vadd.f32 0.0, %v662
        %v664 = vpop.f32.mrb[0].mxu0
        %665 = vdwg.mxu0
        %v666 = vsel %vm360, %v432, -inf
        %667 = vmax.xlane.f32.xlu0 %v666
        %v668 = vpop.xlane.xlu0 %667
        %v669 = vsel %vm360, %v509, -inf
        %670 = vmax.xlane.f32.xlu0 %v669
        %v671 = vpop.xlane.xlu0 %670
        %v672 = vsel %vm360, %v586, -inf
        %673 = vmax.xlane.f32.xlu0 %v672
        %v674 = vpop.xlane.xlu0 %673
        %v675 = vsel %vm360, %v663, -inf
        %676 = vmax.xlane.f32.xlu0 %v675
        %v677 = vpop.xlane.xlu0 %676
        %v678 = vsub.f32 %v432, %v668
        %v679 = vsub.f32 %v509, %v671
        %v680 = vsub.f32 %v586, %v674
        %v681 = vsub.f32 %v663, %v677
        %v682 = vmul.f32 %v678, 1.442695
        %v683 = vpow.pop %v682
        %v684 = vmul.f32 %v679, 1.442695
        %v685 = vpow.pop %v684
        %v686 = vmul.f32 %v680, 1.442695
        %v687 = vpow.pop %v686
        %v688 = vmul.f32 %v681, 1.442695
        %v689 = vpow.pop %v688
        %v690 = vsel %vm360, %v683, 0.0
        %691 = vadd.xlane.f32.xlu0 %v690
        %v692 = vpop.xlane.xlu0 %691
        %v693 = vsel %vm360, %v685, 0.0
        %694 = vadd.xlane.f32.xlu0 %v693
        %v695 = vpop.xlane.xlu0 %694
        %v696 = vsel %vm360, %v687, 0.0
        %697 = vadd.xlane.f32.xlu0 %v696
        %v698 = vpop.xlane.xlu0 %697
        %v699 = vsel %vm360, %v689, 0.0
        %700 = vadd.xlane.f32.xlu0 %v699
        %v701 = vpop.xlane.xlu0 %700
        %v702 = vrcp.pop %v692
        %v703 = vrcp.pop %v695
        %v704 = vrcp.pop %v698
        %v705 = vrcp.pop %v701
        %v706 = vmul.f32 %v683, %v702
        %v707 = vmul.f32 %v685, %v703
        %v708 = vmul.f32 %v687, %v704
        %v709 = vmul.f32 %v689, %v705
        %710 = vrot.lane.b32.xlu0 %v335, 64
        %v711 = vpop.permute.xlu0 %710
        %v714 = vsel %vm360, %v706, 0
        %716 = vmatprep.subr.mxu0 0.0
        %717 = vmatpush1.msra.mxu0 %v711
        %718 = vmatprep.subr.mxu0 0.0
        %719 = vmatpush1.msra.mxu0 0.0
        %720 = vmatprep.subr.mxu0 0.0
        %721 = vmatpush1.msra.mxu0 0.0
        %722 = vmatprep.subr.mxu0 0.0
        %723 = vmatpush1.msra.mxu0 0.0
        %724 = vmatprep.subr.mxu0 0.0
        %725 = vmatpush1.msra.mxu0 0.0
        %726 = vmatprep.subr.mxu0 0.0
        %727 = vmatpush1.msra.mxu0 0.0
        %728 = vmatprep.subr.mxu0 0.0
        %729 = vmatpush1.msra.mxu0 0.0
        %730 = vmatprep.subr.mxu0 0.0
        %731 = vmatpush1.msra.mxu0 0.0
        %732 = vmatprep.subr.mxu0 0.0
        %733 = vmatpush1.msra.mxu0 0.0
        %734 = vmatprep.subr.mxu0 0.0
        %735 = vmatpush1.msra.mxu0 0.0
        %736 = vmatprep.subr.mxu0 0.0
        %737 = vmatpush1.msra.mxu0 0.0
        %738 = vmatprep.subr.mxu0 0.0
        %739 = vmatpush1.msra.mxu0 0.0
        %740 = vmatprep.subr.mxu0 0.0
        %741 = vmatpush1.msra.mxu0 0.0
        %742 = vmatprep.subr.mxu0 0.0
        %743 = vmatpush1.msra.mxu0 0.0
        %744 = vmatprep.subr.mxu0 0.0
        %745 = vmatpush1.msra.mxu0 0.0
        %746 = vmatprep.subr.mxu0 0.0
        %747 = vmatpush1.msra.mxu0 0.0
        %748 = vmatprep.subr.mxu0 0.0
        %749 = vmatpush1.msra.mxu0 0.0
        %750 = vmatprep.subr.mxu0 0.0
        %751 = vmatpush1.msra.mxu0 0.0
        %752 = vmatprep.subr.mxu0 0.0
        %753 = vmatpush1.msra.mxu0 0.0
        %754 = vmatprep.subr.mxu0 0.0
        %755 = vmatpush1.msra.mxu0 0.0
        %756 = vmatprep.subr.mxu0 0.0
        %757 = vmatpush1.msra.mxu0 0.0
        %758 = vmatprep.subr.mxu0 0.0
        %759 = vmatpush1.msra.mxu0 0.0
        %760 = vmatprep.subr.mxu0 0.0
        %761 = vmatpush1.msra.mxu0 0.0
        %762 = vmatprep.subr.mxu0 0.0
        %763 = vmatpush1.msra.mxu0 0.0
        %764 = vmatprep.subr.mxu0 0.0
        %765 = vmatpush1.msra.mxu0 0.0
        %766 = vmatprep.subr.mxu0 0.0
        %767 = vmatpush1.msra.mxu0 0.0
        %768 = vmatprep.subr.mxu0 0.0
        %769 = vmatpush1.msra.mxu0 0.0
        %770 = vmatprep.subr.mxu0 0.0
        %771 = vmatpush1.msra.mxu0 0.0
        %772 = vmatprep.subr.mxu0 0.0
        %773 = vmatpush1.msra.mxu0 0.0
        %774 = vmatprep.subr.mxu0 0.0
        %775 = vmatpush1.msra.mxu0 0.0
        %776 = vmatprep.subr.mxu0 0.0
        %777 = vmatpush1.msra.mxu0 0.0
        %778 = vmatprep.subr.mxu0 0.0
        %779 = vmatpush1.msra.mxu0 0.0
        %780 = vmatprep.mubr.f32.mxu0 0.0
        %781 = vmatmul.mubr.f32.gmra.mrb[0].mxu0 %v714
        %v782 = vpop.f32.mrb[0].mxu0
        %v783 = vadd.f32 0.0, %v782
        %v784 = vpop.f32.mrb[0].mxu0
        %785 = vdwg.mxu0
        %786 = vrot.lane.b32.xlu0 %v340, 64
        %v787 = vpop.permute.xlu0 %786
        %v790 = vsel %vm360, %v707, 0
        %792 = vmatprep.subr.mxu0 0.0
        %793 = vmatpush1.msra.mxu0 %v787
        %794 = vmatprep.subr.mxu0 0.0
        %795 = vmatpush1.msra.mxu0 0.0
        %796 = vmatprep.subr.mxu0 0.0
        %797 = vmatpush1.msra.mxu0 0.0
        %798 = vmatprep.subr.mxu0 0.0
        %799 = vmatpush1.msra.mxu0 0.0
        %800 = vmatprep.subr.mxu0 0.0
        %801 = vmatpush1.msra.mxu0 0.0
        %802 = vmatprep.subr.mxu0 0.0
        %803 = vmatpush1.msra.mxu0 0.0
        %804 = vmatprep.subr.mxu0 0.0
        %805 = vmatpush1.msra.mxu0 0.0
        %806 = vmatprep.subr.mxu0 0.0
        %807 = vmatpush1.msra.mxu0 0.0
        %808 = vmatprep.subr.mxu0 0.0
        %809 = vmatpush1.msra.mxu0 0.0
        %810 = vmatprep.subr.mxu0 0.0
        %811 = vmatpush1.msra.mxu0 0.0
        %812 = vmatprep.subr.mxu0 0.0
        %813 = vmatpush1.msra.mxu0 0.0
        %814 = vmatprep.subr.mxu0 0.0
        %815 = vmatpush1.msra.mxu0 0.0
        %816 = vmatprep.subr.mxu0 0.0
        %817 = vmatpush1.msra.mxu0 0.0
        %818 = vmatprep.subr.mxu0 0.0
        %819 = vmatpush1.msra.mxu0 0.0
        %820 = vmatprep.subr.mxu0 0.0
        %821 = vmatpush1.msra.mxu0 0.0
        %822 = vmatprep.subr.mxu0 0.0
        %823 = vmatpush1.msra.mxu0 0.0
        %824 = vmatprep.subr.mxu0 0.0
        %825 = vmatpush1.msra.mxu0 0.0
        %826 = vmatprep.subr.mxu0 0.0
        %827 = vmatpush1.msra.mxu0 0.0
        %828 = vmatprep.subr.mxu0 0.0
        %829 = vmatpush1.msra.mxu0 0.0
        %830 = vmatprep.subr.mxu0 0.0
        %831 = vmatpush1.msra.mxu0 0.0
        %832 = vmatprep.subr.mxu0 0.0
        %833 = vmatpush1.msra.mxu0 0.0
        %834 = vmatprep.subr.mxu0 0.0
        %835 = vmatpush1.msra.mxu0 0.0
        %836 = vmatprep.subr.mxu0 0.0
        %837 = vmatpush1.msra.mxu0 0.0
        %838 = vmatprep.subr.mxu0 0.0
        %839 = vmatpush1.msra.mxu0 0.0
        %840 = vmatprep.subr.mxu0 0.0
        %841 = vmatpush1.msra.mxu0 0.0
        %842 = vmatprep.subr.mxu0 0.0
        %843 = vmatpush1.msra.mxu0 0.0
        %844 = vmatprep.subr.mxu0 0.0
        %845 = vmatpush1.msra.mxu0 0.0
        %846 = vmatprep.subr.mxu0 0.0
        %847 = vmatpush1.msra.mxu0 0.0
        %848 = vmatprep.subr.mxu0 0.0
        %849 = vmatpush1.msra.mxu0 0.0
        %850 = vmatprep.subr.mxu0 0.0
        %851 = vmatpush1.msra.mxu0 0.0
        %852 = vmatprep.subr.mxu0 0.0
        %853 = vmatpush1.msra.mxu0 0.0
        %854 = vmatprep.subr.mxu0 0.0
        %855 = vmatpush1.msra.mxu0 0.0
        %856 = vmatprep.mubr.f32.mxu0 0.0
        %857 = vmatmul.mubr.f32.gmra.mrb[0].mxu0 %v790
        %v858 = vpop.f32.mrb[0].mxu0
        %v859 = vadd.f32 0.0, %v858
        %v860 = vpop.f32.mrb[0].mxu0
        %861 = vdwg.mxu0
        %862 = vrot.lane.b32.xlu0 %v345, 64
        %v863 = vpop.permute.xlu0 %862
        %v866 = vsel %vm360, %v708, 0
        %868 = vmatprep.subr.mxu0 0.0
        %869 = vmatpush1.msra.mxu0 %v863
        %870 = vmatprep.subr.mxu0 0.0
        %871 = vmatpush1.msra.mxu0 0.0
        %872 = vmatprep.subr.mxu0 0.0
        %873 = vmatpush1.msra.mxu0 0.0
        %874 = vmatprep.subr.mxu0 0.0
        %875 = vmatpush1.msra.mxu0 0.0
        %876 = vmatprep.subr.mxu0 0.0
        %877 = vmatpush1.msra.mxu0 0.0
        %878 = vmatprep.subr.mxu0 0.0
        %879 = vmatpush1.msra.mxu0 0.0
        %880 = vmatprep.subr.mxu0 0.0
        %881 = vmatpush1.msra.mxu0 0.0
        %882 = vmatprep.subr.mxu0 0.0
        %883 = vmatpush1.msra.mxu0 0.0
        %884 = vmatprep.subr.mxu0 0.0
        %885 = vmatpush1.msra.mxu0 0.0
        %886 = vmatprep.subr.mxu0 0.0
        %887 = vmatpush1.msra.mxu0 0.0
        %888 = vmatprep.subr.mxu0 0.0
        %889 = vmatpush1.msra.mxu0 0.0
        %890 = vmatprep.subr.mxu0 0.0
        %891 = vmatpush1.msra.mxu0 0.0
        %892 = vmatprep.subr.mxu0 0.0
        %893 = vmatpush1.msra.mxu0 0.0
        %894 = vmatprep.subr.mxu0 0.0
        %895 = vmatpush1.msra.mxu0 0.0
        %896 = vmatprep.subr.mxu0 0.0
        %897 = vmatpush1.msra.mxu0 0.0
        %898 = vmatprep.subr.mxu0 0.0
        %899 = vmatpush1.msra.mxu0 0.0
        %900 = vmatprep.subr.mxu0 0.0
        %901 = vmatpush1.msra.mxu0 0.0
        %902 = vmatprep.subr.mxu0 0.0
        %903 = vmatpush1.msra.mxu0 0.0
        %904 = vmatprep.subr.mxu0 0.0
        %905 = vmatpush1.msra.mxu0 0.0
        %906 = vmatprep.subr.mxu0 0.0
        %907 = vmatpush1.msra.mxu0 0.0
        %908 = vmatprep.subr.mxu0 0.0
        %909 = vmatpush1.msra.mxu0 0.0
        %910 = vmatprep.subr.mxu0 0.0
        %911 = vmatpush1.msra.mxu0 0.0
        %912 = vmatprep.subr.mxu0 0.0
        %913 = vmatpush1.msra.mxu0 0.0
        %914 = vmatprep.subr.mxu0 0.0
        %915 = vmatpush1.msra.mxu0 0.0
        %916 = vmatprep.subr.mxu0 0.0
        %917 = vmatpush1.msra.mxu0 0.0
        %918 = vmatprep.subr.mxu0 0.0
        %919 = vmatpush1.msra.mxu0 0.0
        %920 = vmatprep.subr.mxu0 0.0
        %921 = vmatpush1.msra.mxu0 0.0
        %922 = vmatprep.subr.mxu0 0.0
        %923 = vmatpush1.msra.mxu0 0.0
        %924 = vmatprep.subr.mxu0 0.0
        %925 = vmatpush1.msra.mxu0 0.0
        %926 = vmatprep.subr.mxu0 0.0
        %927 = vmatpush1.msra.mxu0 0.0
        %928 = vmatprep.subr.mxu0 0.0
        %929 = vmatpush1.msra.mxu0 0.0
        %930 = vmatprep.subr.mxu0 0.0
        %931 = vmatpush1.msra.mxu0 0.0
        %932 = vmatprep.mubr.f32.mxu0 0.0
        %933 = vmatmul.mubr.f32.gmra.mrb[0].mxu0 %v866
        %v934 = vpop.f32.mrb[0].mxu0
        %v935 = vadd.f32 0.0, %v934
        %v936 = vpop.f32.mrb[0].mxu0
        %937 = vdwg.mxu0
        %938 = vrot.lane.b32.xlu0 %v350, 64
        %v939 = vpop.permute.xlu0 %938
        %v942 = vsel %vm360, %v709, 0
        %944 = vmatprep.subr.mxu0 0.0
        %945 = vmatpush1.msra.mxu0 %v939
        %946 = vmatprep.subr.mxu0 0.0
        %947 = vmatpush1.msra.mxu0 0.0
        %948 = vmatprep.subr.mxu0 0.0
        %949 = vmatpush1.msra.mxu0 0.0
        %950 = vmatprep.subr.mxu0 0.0
        %951 = vmatpush1.msra.mxu0 0.0
        %952 = vmatprep.subr.mxu0 0.0
        %953 = vmatpush1.msra.mxu0 0.0
        %954 = vmatprep.subr.mxu0 0.0
        %955 = vmatpush1.msra.mxu0 0.0
        %956 = vmatprep.subr.mxu0 0.0
        %957 = vmatpush1.msra.mxu0 0.0
        %958 = vmatprep.subr.mxu0 0.0
        %959 = vmatpush1.msra.mxu0 0.0
        %960 = vmatprep.subr.mxu0 0.0
        %961 = vmatpush1.msra.mxu0 0.0
        %962 = vmatprep.subr.mxu0 0.0
        %963 = vmatpush1.msra.mxu0 0.0
        %964 = vmatprep.subr.mxu0 0.0
        %965 = vmatpush1.msra.mxu0 0.0
        %966 = vmatprep.subr.mxu0 0.0
        %967 = vmatpush1.msra.mxu0 0.0
        %968 = vmatprep.subr.mxu0 0.0
        %969 = vmatpush1.msra.mxu0 0.0
        %970 = vmatprep.subr.mxu0 0.0
        %971 = vmatpush1.msra.mxu0 0.0
        %972 = vmatprep.subr.mxu0 0.0
        %973 = vmatpush1.msra.mxu0 0.0
        %974 = vmatprep.subr.mxu0 0.0
        %975 = vmatpush1.msra.mxu0 0.0
        %976 = vmatprep.subr.mxu0 0.0
        %977 = vmatpush1.msra.mxu0 0.0
        %978 = vmatprep.subr.mxu0 0.0
        %979 = vmatpush1.msra.mxu0 0.0
        %980 = vmatprep.subr.mxu0 0.0
        %981 = vmatpush1.msra.mxu0 0.0
        %982 = vmatprep.subr.mxu0 0.0
        %983 = vmatpush1.msra.mxu0 0.0
        %984 = vmatprep.subr.mxu0 0.0
        %985 = vmatpush1.msra.mxu0 0.0
        %986 = vmatprep.subr.mxu0 0.0
        %987 = vmatpush1.msra.mxu0 0.0
        %988 = vmatprep.subr.mxu0 0.0
        %989 = vmatpush1.msra.mxu0 0.0
        %990 = vmatprep.subr.mxu0 0.0
        %991 = vmatpush1.msra.mxu0 0.0
        %992 = vmatprep.subr.mxu0 0.0
        %993 = vmatpush1.msra.mxu0 0.0
        %994 = vmatprep.subr.mxu0 0.0
        %995 = vmatpush1.msra.mxu0 0.0
        %996 = vmatprep.subr.mxu0 0.0
        %997 = vmatpush1.msra.mxu0 0.0
        %998 = vmatprep.subr.mxu0 0.0
        %999 = vmatpush1.msra.mxu0 0.0
        %1000 = vmatprep.subr.mxu0 0.0
        %1001 = vmatpush1.msra.mxu0 0.0
        %1002 = vmatprep.subr.mxu0 0.0
        %1003 = vmatpush1.msra.mxu0 0.0
        %1004 = vmatprep.subr.mxu0 0.0
        %1005 = vmatpush1.msra.mxu0 0.0
        %1006 = vmatprep.subr.mxu0 0.0
        %1007 = vmatpush1.msra.mxu0 0.0
        %1008 = vmatprep.mubr.f32.mxu0 0.0
        %1009 = vmatmul.mubr.f32.gmra.mrb[0].mxu0 %v942
        %v1010 = vpop.f32.mrb[0].mxu0
        %v1011 = vadd.f32 0.0, %v1010
        %v1012 = vpop.f32.mrb[0].mxu0
        %1013 = vdwg.mxu0
        %1014 = vrot.lane.b32.xlu0 %v335, 120
        %v1015 = vpop.permute.xlu0 %1014
        %1016 = vrot.lane.b32.xlu0 %v335, 88
        %v1017 = vpop.permute.xlu0 %1016
        %v1018 = vsel %vm360, %v1015, 0
        %v1020 = vsel %vm360, %v1017, 0
        %1022 = vmatprep.subr.mxu0 0.0
        %1023 = vmatpush1.xpose.msra.mxu0 %v1020
        %1024 = vmatprep.subr.mxu0 0.0
        %1025 = vmatpush1.xpose.msra.mxu0 0.0
        %1026 = vmatprep.subr.mxu0 0.0
        %1027 = vmatpush1.xpose.msra.mxu0 0.0
        %1028 = vmatprep.subr.mxu0 0.0
        %1029 = vmatpush1.xpose.msra.mxu0 0.0
        %1030 = vmatprep.subr.mxu0 0.0
        %1031 = vmatpush1.xpose.msra.mxu0 0.0
        %1032 = vmatprep.subr.mxu0 0.0
        %1033 = vmatpush1.xpose.msra.mxu0 0.0
        %1034 = vmatprep.subr.mxu0 0.0
        %1035 = vmatpush1.xpose.msra.mxu0 0.0
        %1036 = vmatprep.subr.mxu0 0.0
        %1037 = vmatpush1.xpose.msra.mxu0 0.0
        %1038 = vmatprep.subr.mxu0 0.0
        %1039 = vmatpush1.xpose.msra.mxu0 0.0
        %1040 = vmatprep.subr.mxu0 0.0
        %1041 = vmatpush1.xpose.msra.mxu0 0.0
        %1042 = vmatprep.subr.mxu0 0.0
        %1043 = vmatpush1.xpose.msra.mxu0 0.0
        %1044 = vmatprep.subr.mxu0 0.0
        %1045 = vmatpush1.xpose.msra.mxu0 0.0
        %1046 = vmatprep.subr.mxu0 0.0
        %1047 = vmatpush1.xpose.msra.mxu0 0.0
        %1048 = vmatprep.subr.mxu0 0.0
        %1049 = vmatpush1.xpose.msra.mxu0 0.0
        %1050 = vmatprep.subr.mxu0 0.0
        %1051 = vmatpush1.xpose.msra.mxu0 0.0
        %1052 = vmatprep.subr.mxu0 0.0
        %1053 = vmatpush1.xpose.msra.mxu0 0.0
        %1054 = vmatprep.subr.mxu0 0.0
        %1055 = vmatpush1.xpose.msra.mxu0 0.0
        %1056 = vmatprep.subr.mxu0 0.0
        %1057 = vmatpush1.xpose.msra.mxu0 0.0
        %1058 = vmatprep.subr.mxu0 0.0
        %1059 = vmatpush1.xpose.msra.mxu0 0.0
        %1060 = vmatprep.subr.mxu0 0.0
        %1061 = vmatpush1.xpose.msra.mxu0 0.0
        %1062 = vmatprep.subr.mxu0 0.0
        %1063 = vmatpush1.xpose.msra.mxu0 0.0
        %1064 = vmatprep.subr.mxu0 0.0
        %1065 = vmatpush1.xpose.msra.mxu0 0.0
        %1066 = vmatprep.subr.mxu0 0.0
        %1067 = vmatpush1.xpose.msra.mxu0 0.0
        %1068 = vmatprep.subr.mxu0 0.0
        %1069 = vmatpush1.xpose.msra.mxu0 0.0
        %1070 = vmatprep.subr.mxu0 0.0
        %1071 = vmatpush1.xpose.msra.mxu0 0.0
        %1072 = vmatprep.subr.mxu0 0.0
        %1073 = vmatpush1.xpose.msra.mxu0 0.0
        %1074 = vmatprep.subr.mxu0 0.0
        %1075 = vmatpush1.xpose.msra.mxu0 0.0
        %1076 = vmatprep.subr.mxu0 0.0
        %1077 = vmatpush1.xpose.msra.mxu0 0.0
        %1078 = vmatprep.subr.mxu0 0.0
        %1079 = vmatpush1.xpose.msra.mxu0 0.0
        %1080 = vmatprep.subr.mxu0 0.0
        %1081 = vmatpush1.xpose.msra.mxu0 0.0
        %1082 = vmatprep.subr.mxu0 0.0
        %1083 = vmatpush1.xpose.msra.mxu0 0.0
        %1084 = vmatprep.subr.mxu0 0.0
        %1085 = vmatpush1.xpose.msra.mxu0 0.0
        %1086 = vmatprep.mubr.f32.mxu0 0.0
        %1087 = vmatmul.mubr.f32.gmra.mrb[0].mxu0 %v1018
        %v1088 = vpop.f32.mrb[0].mxu0
        %v1089 = vadd.f32 0.0, %v1088
        %v1090 = vpop.f32.mrb[0].mxu0
        %1091 = vdwg.mxu0
        %1092 = vrot.lane.b32.xlu0 %v340, 120
        %v1093 = vpop.permute.xlu0 %1092
        %1094 = vrot.lane.b32.xlu0 %v340, 88
        %v1095 = vpop.permute.xlu0 %1094
        %v1096 = vsel %vm360, %v1093, 0
        %v1098 = vsel %vm360, %v1095, 0
        %1100 = vmatprep.subr.mxu0 0.0
        %1101 = vmatpush1.xpose.msra.mxu0 %v1098
        %1102 = vmatprep.subr.mxu0 0.0
        %1103 = vmatpush1.xpose.msra.mxu0 0.0
        %1104 = vmatprep.subr.mxu0 0.0
        %1105 = vmatpush1.xpose.msra.mxu0 0.0
        %1106 = vmatprep.subr.mxu0 0.0
        %1107 = vmatpush1.xpose.msra.mxu0 0.0
        %1108 = vmatprep.subr.mxu0 0.0
        %1109 = vmatpush1.xpose.msra.mxu0 0.0
        %1110 = vmatprep.subr.mxu0 0.0
        %1111 = vmatpush1.xpose.msra.mxu0 0.0
        %1112 = vmatprep.subr.mxu0 0.0
        %1113 = vmatpush1.xpose.msra.mxu0 0.0
        %1114 = vmatprep.subr.mxu0 0.0
        %1115 = vmatpush1.xpose.msra.mxu0 0.0
        %1116 = vmatprep.subr.mxu0 0.0
        %1117 = vmatpush1.xpose.msra.mxu0 0.0
        %1118 = vmatprep.subr.mxu0 0.0
        %1119 = vmatpush1.xpose.msra.mxu0 0.0
        %1120 = vmatprep.subr.mxu0 0.0
        %1121 = vmatpush1.xpose.msra.mxu0 0.0
        %1122 = vmatprep.subr.mxu0 0.0
        %1123 = vmatpush1.xpose.msra.mxu0 0.0
        %1124 = vmatprep.subr.mxu0 0.0
        %1125 = vmatpush1.xpose.msra.mxu0 0.0
        %1126 = vmatprep.subr.mxu0 0.0
        %1127 = vmatpush1.xpose.msra.mxu0 0.0
        %1128 = vmatprep.subr.mxu0 0.0
        %1129 = vmatpush1.xpose.msra.mxu0 0.0
        %1130 = vmatprep.subr.mxu0 0.0
        %1131 = vmatpush1.xpose.msra.mxu0 0.0
        %1132 = vmatprep.subr.mxu0 0.0
        %1133 = vmatpush1.xpose.msra.mxu0 0.0
        %1134 = vmatprep.subr.mxu0 0.0
        %1135 = vmatpush1.xpose.msra.mxu0 0.0
        %1136 = vmatprep.subr.mxu0 0.0
        %1137 = vmatpush1.xpose.msra.mxu0 0.0
        %1138 = vmatprep.subr.mxu0 0.0
        %1139 = vmatpush1.xpose.msra.mxu0 0.0
        %1140 = vmatprep.subr.mxu0 0.0
        %1141 = vmatpush1.xpose.msra.mxu0 0.0
        %1142 = vmatprep.subr.mxu0 0.0
        %1143 = vmatpush1.xpose.msra.mxu0 0.0
        %1144 = vmatprep.subr.mxu0 0.0
        %1145 = vmatpush1.xpose.msra.mxu0 0.0
        %1146 = vmatprep.subr.mxu0 0.0
        %1147 = vmatpush1.xpose.msra.mxu0 0.0
        %1148 = vmatprep.subr.mxu0 0.0
        %1149 = vmatpush1.xpose.msra.mxu0 0.0
        %1150 = vmatprep.subr.mxu0 0.0
        %1151 = vmatpush1.xpose.msra.mxu0 0.0
        %1152 = vmatprep.subr.mxu0 0.0
        %1153 = vmatpush1.xpose.msra.mxu0 0.0
        %1154 = vmatprep.subr.mxu0 0.0
        %1155 = vmatpush1.xpose.msra.mxu0 0.0
        %1156 = vmatprep.subr.mxu0 0.0
        %1157 = vmatpush1.xpose.msra.mxu0 0.0
        %1158 = vmatprep.subr.mxu0 0.0
        %1159 = vmatpush1.xpose.msra.mxu0 0.0
        %1160 = vmatprep.subr.mxu0 0.0
        %1161 = vmatpush1.xpose.msra.mxu0 0.0
        %1162 = vmatprep.subr.mxu0 0.0
        %1163 = vmatpush1.xpose.msra.mxu0 0.0
        %1164 = vmatprep.mubr.f32.mxu0 0.0
        %1165 = vmatmul.mubr.f32.gmra.mrb[0].mxu0 %v1096
        %v1166 = vpop.f32.mrb[0].mxu0
        %v1167 = vadd.f32 0.0, %v1166
        %v1168 = vpop.f32.mrb[0].mxu0
        %1169 = vdwg.mxu0
        %1170 = vrot.lane.b32.xlu0 %v345, 120
        %v1171 = vpop.permute.xlu0 %1170
        %1172 = vrot.lane.b32.xlu0 %v345, 88
        %v1173 = vpop.permute.xlu0 %1172
        %v1174 = vsel %vm360, %v1171, 0
        %v1176 = vsel %vm360, %v1173, 0
        %1178 = vmatprep.subr.mxu0 0.0
        %1179 = vmatpush1.xpose.msra.mxu0 %v1176
        %1180 = vmatprep.subr.mxu0 0.0
        %1181 = vmatpush1.xpose.msra.mxu0 0.0
        %1182 = vmatprep.subr.mxu0 0.0
        %1183 = vmatpush1.xpose.msra.mxu0 0.0
        %1184 = vmatprep.subr.mxu0 0.0
        %1185 = vmatpush1.xpose.msra.mxu0 0.0
        %1186 = vmatprep.subr.mxu0 0.0
        %1187 = vmatpush1.xpose.msra.mxu0 0.0
        %1188 = vmatprep.subr.mxu0 0.0
        %1189 = vmatpush1.xpose.msra.mxu0 0.0
        %1190 = vmatprep.subr.mxu0 0.0
        %1191 = vmatpush1.xpose.msra.mxu0 0.0
        %1192 = vmatprep.subr.mxu0 0.0
        %1193 = vmatpush1.xpose.msra.mxu0 0.0
        %1194 = vmatprep.subr.mxu0 0.0
        %1195 = vmatpush1.xpose.msra.mxu0 0.0
        %1196 = vmatprep.subr.mxu0 0.0
        %1197 = vmatpush1.xpose.msra.mxu0 0.0
        %1198 = vmatprep.subr.mxu0 0.0
        %1199 = vmatpush1.xpose.msra.mxu0 0.0
        %1200 = vmatprep.subr.mxu0 0.0
        %1201 = vmatpush1.xpose.msra.mxu0 0.0
        %1202 = vmatprep.subr.mxu0 0.0
        %1203 = vmatpush1.xpose.msra.mxu0 0.0
        %1204 = vmatprep.subr.mxu0 0.0
        %1205 = vmatpush1.xpose.msra.mxu0 0.0
        %1206 = vmatprep.subr.mxu0 0.0
        %1207 = vmatpush1.xpose.msra.mxu0 0.0
        %1208 = vmatprep.subr.mxu0 0.0
        %1209 = vmatpush1.xpose.msra.mxu0 0.0
        %1210 = vmatprep.subr.mxu0 0.0
        %1211 = vmatpush1.xpose.msra.mxu0 0.0
        %1212 = vmatprep.subr.mxu0 0.0
        %1213 = vmatpush1.xpose.msra.mxu0 0.0
        %1214 = vmatprep.subr.mxu0 0.0
        %1215 = vmatpush1.xpose.msra.mxu0 0.0
        %1216 = vmatprep.subr.mxu0 0.0
        %1217 = vmatpush1.xpose.msra.mxu0 0.0
        %1218 = vmatprep.subr.mxu0 0.0
        %1219 = vmatpush1.xpose.msra.mxu0 0.0
        %1220 = vmatprep.subr.mxu0 0.0
        %1221 = vmatpush1.xpose.msra.mxu0 0.0
        %1222 = vmatprep.subr.mxu0 0.0
        %1223 = vmatpush1.xpose.msra.mxu0 0.0
        %1224 = vmatprep.subr.mxu0 0.0
        %1225 = vmatpush1.xpose.msra.mxu0 0.0
        %1226 = vmatprep.subr.mxu0 0.0
        %1227 = vmatpush1.xpose.msra.mxu0 0.0
        %1228 = vmatprep.subr.mxu0 0.0
        %1229 = vmatpush1.xpose.msra.mxu0 0.0
        %1230 = vmatprep.subr.mxu0 0.0
        %1231 = vmatpush1.xpose.msra.mxu0 0.0
        %1232 = vmatprep.subr.mxu0 0.0
        %1233 = vmatpush1.xpose.msra.mxu0 0.0
        %1234 = vmatprep.subr.mxu0 0.0
        %1235 = vmatpush1.xpose.msra.mxu0 0.0
        %1236 = vmatprep.subr.mxu0 0.0
        %1237 = vmatpush1.xpose.msra.mxu0 0.0
        %1238 = vmatprep.subr.mxu0 0.0
        %1239 = vmatpush1.xpose.msra.mxu0 0.0
        %1240 = vmatprep.subr.mxu0 0.0
        %1241 = vmatpush1.xpose.msra.mxu0 0.0
        %1242 = vmatprep.mubr.f32.mxu0 0.0
        %1243 = vmatmul.mubr.f32.gmra.mrb[0].mxu0 %v1174
        %v1244 = vpop.f32.mrb[0].mxu0
        %v1245 = vadd.f32 0.0, %v1244
        %v1246 = vpop.f32.mrb[0].mxu0
        %1247 = vdwg.mxu0
        %1248 = vrot.lane.b32.xlu0 %v350, 120
        %v1249 = vpop.permute.xlu0 %1248
        %1250 = vrot.lane.b32.xlu0 %v350, 88
        %v1251 = vpop.permute.xlu0 %1250
        %v1252 = vsel %vm360, %v1249, 0
        %v1254 = vsel %vm360, %v1251, 0
        %1256 = vmatprep.subr.mxu0 0.0
        %1257 = vmatpush1.xpose.msra.mxu0 %v1254
        %1258 = vmatprep.subr.mxu0 0.0
        %1259 = vmatpush1.xpose.msra.mxu0 0.0
        %1260 = vmatprep.subr.mxu0 0.0
        %1261 = vmatpush1.xpose.msra.mxu0 0.0
        %1262 = vmatprep.subr.mxu0 0.0
        %1263 = vmatpush1.xpose.msra.mxu0 0.0
        %1264 = vmatprep.subr.mxu0 0.0
        %1265 = vmatpush1.xpose.msra.mxu0 0.0
        %1266 = vmatprep.subr.mxu0 0.0
        %1267 = vmatpush1.xpose.msra.mxu0 0.0
        %1268 = vmatprep.subr.mxu0 0.0
        %1269 = vmatpush1.xpose.msra.mxu0 0.0
        %1270 = vmatprep.subr.mxu0 0.0
        %1271 = vmatpush1.xpose.msra.mxu0 0.0
        %1272 = vmatprep.subr.mxu0 0.0
        %1273 = vmatpush1.xpose.msra.mxu0 0.0
        %1274 = vmatprep.subr.mxu0 0.0
        %1275 = vmatpush1.xpose.msra.mxu0 0.0
        %1276 = vmatprep.subr.mxu0 0.0
        %1277 = vmatpush1.xpose.msra.mxu0 0.0
        %1278 = vmatprep.subr.mxu0 0.0
        %1279 = vmatpush1.xpose.msra.mxu0 0.0
        %1280 = vmatprep.subr.mxu0 0.0
        %1281 = vmatpush1.xpose.msra.mxu0 0.0
        %1282 = vmatprep.subr.mxu0 0.0
        %1283 = vmatpush1.xpose.msra.mxu0 0.0
        %1284 = vmatprep.subr.mxu0 0.0
        %1285 = vmatpush1.xpose.msra.mxu0 0.0
        %1286 = vmatprep.subr.mxu0 0.0
        %1287 = vmatpush1.xpose.msra.mxu0 0.0
        %1288 = vmatprep.subr.mxu0 0.0
        %1289 = vmatpush1.xpose.msra.mxu0 0.0
        %1290 = vmatprep.subr.mxu0 0.0
        %1291 = vmatpush1.xpose.msra.mxu0 0.0
        %1292 = vmatprep.subr.mxu0 0.0
        %1293 = vmatpush1.xpose.msra.mxu0 0.0
        %1294 = vmatprep.subr.mxu0 0.0
        %1295 = vmatpush1.xpose.msra.mxu0 0.0
        %1296 = vmatprep.subr.mxu0 0.0
        %1297 = vmatpush1.xpose.msra.mxu0 0.0
        %1298 = vmatprep.subr.mxu0 0.0
        %1299 = vmatpush1.xpose.msra.mxu0 0.0
        %1300 = vmatprep.subr.mxu0 0.0
        %1301 = vmatpush1.xpose.msra.mxu0 0.0
        %1302 = vmatprep.subr.mxu0 0.0
        %1303 = vmatpush1.xpose.msra.mxu0 0.0
        %1304 = vmatprep.subr.mxu0 0.0
        %1305 = vmatpush1.xpose.msra.mxu0 0.0
        %1306 = vmatprep.subr.mxu0 0.0
        %1307 = vmatpush1.xpose.msra.mxu0 0.0
        %1308 = vmatprep.subr.mxu0 0.0
        %1309 = vmatpush1.xpose.msra.mxu0 0.0
        %1310 = vmatprep.subr.mxu0 0.0
        %1311 = vmatpush1.xpose.msra.mxu0 0.0
        %1312 = vmatprep.subr.mxu0 0.0
        %1313 = vmatpush1.xpose.msra.mxu0 0.0
        %1314 = vmatprep.subr.mxu0 0.0
        %1315 = vmatpush1.xpose.msra.mxu0 0.0
        %1316 = vmatprep.subr.mxu0 0.0
        %1317 = vmatpush1.xpose.msra.mxu0 0.0
        %1318 = vmatprep.subr.mxu0 0.0
        %1319 = vmatpush1.xpose.msra.mxu0 0.0
        %1320 = vmatprep.mubr.f32.mxu0 0.0
        %1321 = vmatmul.mubr.f32.gmra.mrb[0].mxu0 %v1252
        %v1322 = vpop.f32.mrb[0].mxu0
        %v1323 = vadd.f32 0.0, %v1322
        %v1324 = vpop.f32.mrb[0].mxu0
        %1325 = vdwg.mxu0
        %v1326 = vsel %vm360, %v1089, -inf
        %1327 = vmax.xlane.f32.xlu0 %v1326
        %v1328 = vpop.xlane.xlu0 %1327
        %v1329 = vsel %vm360, %v1167, -inf
        %1330 = vmax.xlane.f32.xlu0 %v1329
        %v1331 = vpop.xlane.xlu0 %1330
        %v1332 = vsel %vm360, %v1245, -inf
        %1333 = vmax.xlane.f32.xlu0 %v1332
        %v1334 = vpop.xlane.xlu0 %1333
        %v1335 = vsel %vm360, %v1323, -inf
        %1336 = vmax.xlane.f32.xlu0 %v1335
        %v1337 = vpop.xlane.xlu0 %1336
        %v1338 = vsub.f32 %v1089, %v1328
        %v1339 = vsub.f32 %v1167, %v1331
        %v1340 = vsub.f32 %v1245, %v1334
        %v1341 = vsub.f32 %v1323, %v1337
        %v1342 = vmul.f32 %v1338, 1.442695
        %v1343 = vpow.pop %v1342
        %v1344 = vmul.f32 %v1339, 1.442695
        %v1345 = vpow.pop %v1344
        %v1346 = vmul.f32 %v1340, 1.442695
        %v1347 = vpow.pop %v1346
        %v1348 = vmul.f32 %v1341, 1.442695
        %v1349 = vpow.pop %v1348
        %v1350 = vsel %vm360, %v1343, 0.0
        %1351 = vadd.xlane.f32.xlu0 %v1350
        %v1352 = vpop.xlane.xlu0 %1351
        %v1353 = vsel %vm360, %v1345, 0.0
        %1354 = vadd.xlane.f32.xlu0 %v1353
        %v1355 = vpop.xlane.xlu0 %1354
        %v1356 = vsel %vm360, %v1347, 0.0
        %1357 = vadd.xlane.f32.xlu0 %v1356
        %v1358 = vpop.xlane.xlu0 %1357
        %v1359 = vsel %vm360, %v1349, 0.0
        %1360 = vadd.xlane.f32.xlu0 %v1359
        %v1361 = vpop.xlane.xlu0 %1360
        %v1362 = vrcp.pop %v1352
        %v1363 = vrcp.pop %v1355
        %v1364 = vrcp.pop %v1358
        %v1365 = vrcp.pop %v1361
        %v1366 = vmul.f32 %v1343, %v1362
        %v1367 = vmul.f32 %v1345, %v1363
        %v1368 = vmul.f32 %v1347, %v1364
        %v1369 = vmul.f32 %v1349, %v1365
        %1370 = vrot.lane.b32.xlu0 %v335, 56
        %v1371 = vpop.permute.xlu0 %1370
        %v1374 = vsel %vm360, %v1366, 0
        %1376 = vmatprep.subr.mxu0 0.0
        %1377 = vmatpush1.msra.mxu0 %v1371
        %1378 = vmatprep.subr.mxu0 0.0
        %1379 = vmatpush1.msra.mxu0 0.0
        %1380 = vmatprep.subr.mxu0 0.0
        %1381 = vmatpush1.msra.mxu0 0.0
        %1382 = vmatprep.subr.mxu0 0.0
        %1383 = vmatpush1.msra.mxu0 0.0
        %1384 = vmatprep.subr.mxu0 0.0
        %1385 = vmatpush1.msra.mxu0 0.0
        %1386 = vmatprep.subr.mxu0 0.0
        %1387 = vmatpush1.msra.mxu0 0.0
        %1388 = vmatprep.subr.mxu0 0.0
        %1389 = vmatpush1.msra.mxu0 0.0
        %1390 = vmatprep.subr.mxu0 0.0
        %1391 = vmatpush1.msra.mxu0 0.0
        %1392 = vmatprep.subr.mxu0 0.0
        %1393 = vmatpush1.msra.mxu0 0.0
        %1394 = vmatprep.subr.mxu0 0.0
        %1395 = vmatpush1.msra.mxu0 0.0
        %1396 = vmatprep.subr.mxu0 0.0
        %1397 = vmatpush1.msra.mxu0 0.0
        %1398 = vmatprep.subr.mxu0 0.0
        %1399 = vmatpush1.msra.mxu0 0.0
        %1400 = vmatprep.subr.mxu0 0.0
        %1401 = vmatpush1.msra.mxu0 0.0
        %1402 = vmatprep.subr.mxu0 0.0
        %1403 = vmatpush1.msra.mxu0 0.0
        %1404 = vmatprep.subr.mxu0 0.0
        %1405 = vmatpush1.msra.mxu0 0.0
        %1406 = vmatprep.subr.mxu0 0.0
        %1407 = vmatpush1.msra.mxu0 0.0
        %1408 = vmatprep.subr.mxu0 0.0
        %1409 = vmatpush1.msra.mxu0 0.0
        %1410 = vmatprep.subr.mxu0 0.0
        %1411 = vmatpush1.msra.mxu0 0.0
        %1412 = vmatprep.subr.mxu0 0.0
        %1413 = vmatpush1.msra.mxu0 0.0
        %1414 = vmatprep.subr.mxu0 0.0
        %1415 = vmatpush1.msra.mxu0 0.0
        %1416 = vmatprep.subr.mxu0 0.0
        %1417 = vmatpush1.msra.mxu0 0.0
        %1418 = vmatprep.subr.mxu0 0.0
        %1419 = vmatpush1.msra.mxu0 0.0
        %1420 = vmatprep.subr.mxu0 0.0
        %1421 = vmatpush1.msra.mxu0 0.0
        %1422 = vmatprep.subr.mxu0 0.0
        %1423 = vmatpush1.msra.mxu0 0.0
        %1424 = vmatprep.subr.mxu0 0.0
        %1425 = vmatpush1.msra.mxu0 0.0
        %1426 = vmatprep.subr.mxu0 0.0
        %1427 = vmatpush1.msra.mxu0 0.0
        %1428 = vmatprep.subr.mxu0 0.0
        %1429 = vmatpush1.msra.mxu0 0.0
        %1430 = vmatprep.subr.mxu0 0.0
        %1431 = vmatpush1.msra.mxu0 0.0
        %1432 = vmatprep.subr.mxu0 0.0
        %1433 = vmatpush1.msra.mxu0 0.0
        %1434 = vmatprep.subr.mxu0 0.0
        %1435 = vmatpush1.msra.mxu0 0.0
        %1436 = vmatprep.subr.mxu0 0.0
        %1437 = vmatpush1.msra.mxu0 0.0
        %1438 = vmatprep.subr.mxu0 0.0
        %1439 = vmatpush1.msra.mxu0 0.0
        %1440 = vmatprep.mubr.f32.mxu0 0.0
        %1441 = vmatmul.mubr.f32.gmra.mrb[0].mxu0 %v1374
        %v1442 = vpop.f32.mrb[0].mxu0
        %v1443 = vadd.f32 0.0, %v1442
        %v1444 = vpop.f32.mrb[0].mxu0
        %1445 = vdwg.mxu0
        %1446 = vrot.lane.b32.xlu0 %v340, 56
        %v1447 = vpop.permute.xlu0 %1446
        %v1450 = vsel %vm360, %v1367, 0
        %1452 = vmatprep.subr.mxu0 0.0
        %1453 = vmatpush1.msra.mxu0 %v1447
        %1454 = vmatprep.subr.mxu0 0.0
        %1455 = vmatpush1.msra.mxu0 0.0
        %1456 = vmatprep.subr.mxu0 0.0
        %1457 = vmatpush1.msra.mxu0 0.0
        %1458 = vmatprep.subr.mxu0 0.0
        %1459 = vmatpush1.msra.mxu0 0.0
        %1460 = vmatprep.subr.mxu0 0.0
        %1461 = vmatpush1.msra.mxu0 0.0
        %1462 = vmatprep.subr.mxu0 0.0
        %1463 = vmatpush1.msra.mxu0 0.0
        %1464 = vmatprep.subr.mxu0 0.0
        %1465 = vmatpush1.msra.mxu0 0.0
        %1466 = vmatprep.subr.mxu0 0.0
        %1467 = vmatpush1.msra.mxu0 0.0
        %1468 = vmatprep.subr.mxu0 0.0
        %1469 = vmatpush1.msra.mxu0 0.0
        %1470 = vmatprep.subr.mxu0 0.0
        %1471 = vmatpush1.msra.mxu0 0.0
        %1472 = vmatprep.subr.mxu0 0.0
        %1473 = vmatpush1.msra.mxu0 0.0
        %1474 = vmatprep.subr.mxu0 0.0
        %1475 = vmatpush1.msra.mxu0 0.0
        %1476 = vmatprep.subr.mxu0 0.0
        %1477 = vmatpush1.msra.mxu0 0.0
        %1478 = vmatprep.subr.mxu0 0.0
        %1479 = vmatpush1.msra.mxu0 0.0
        %1480 = vmatprep.subr.mxu0 0.0
        %1481 = vmatpush1.msra.mxu0 0.0
        %1482 = vmatprep.subr.mxu0 0.0
        %1483 = vmatpush1.msra.mxu0 0.0
        %1484 = vmatprep.subr.mxu0 0.0
        %1485 = vmatpush1.msra.mxu0 0.0
        %1486 = vmatprep.subr.mxu0 0.0
        %1487 = vmatpush1.msra.mxu0 0.0
        %1488 = vmatprep.subr.mxu0 0.0
        %1489 = vmatpush1.msra.mxu0 0.0
        %1490 = vmatprep.subr.mxu0 0.0
        %1491 = vmatpush1.msra.mxu0 0.0
        %1492 = vmatprep.subr.mxu0 0.0
        %1493 = vmatpush1.msra.mxu0 0.0
        %1494 = vmatprep.subr.mxu0 0.0
        %1495 = vmatpush1.msra.mxu0 0.0
        %1496 = vmatprep.subr.mxu0 0.0
        %1497 = vmatpush1.msra.mxu0 0.0
        %1498 = vmatprep.subr.mxu0 0.0
        %1499 = vmatpush1.msra.mxu0 0.0
        %1500 = vmatprep.subr.mxu0 0.0
        %1501 = vmatpush1.msra.mxu0 0.0
        %1502 = vmatprep.subr.mxu0 0.0
        %1503 = vmatpush1.msra.mxu0 0.0
        %1504 = vmatprep.subr.mxu0 0.0
        %1505 = vmatpush1.msra.mxu0 0.0
        %1506 = vmatprep.subr.mxu0 0.0
        %1507 = vmatpush1.msra.mxu0 0.0
        %1508 = vmatprep.subr.mxu0 0.0
        %1509 = vmatpush1.msra.mxu0 0.0
        %1510 = vmatprep.subr.mxu0 0.0
        %1511 = vmatpush1.msra.mxu0 0.0
        %1512 = vmatprep.subr.mxu0 0.0
        %1513 = vmatpush1.msra.mxu0 0.0
        %1514 = vmatprep.subr.mxu0 0.0
        %1515 = vmatpush1.msra.mxu0 0.0
        %1516 = vmatprep.mubr.f32.mxu0 0.0
        %1517 = vmatmul.mubr.f32.gmra.mrb[0].mxu0 %v1450
        %v1518 = vpop.f32.mrb[0].mxu0
        %v1519 = vadd.f32 0.0, %v1518
        %v1520 = vpop.f32.mrb[0].mxu0
        %1521 = vdwg.mxu0
        %1522 = vrot.lane.b32.xlu0 %v345, 56
        %v1523 = vpop.permute.xlu0 %1522
        %v1526 = vsel %vm360, %v1368, 0
        %1528 = vmatprep.subr.mxu0 0.0
        %1529 = vmatpush1.msra.mxu0 %v1523
        %1530 = vmatprep.subr.mxu0 0.0
        %1531 = vmatpush1.msra.mxu0 0.0
        %1532 = vmatprep.subr.mxu0 0.0
        %1533 = vmatpush1.msra.mxu0 0.0
        %1534 = vmatprep.subr.mxu0 0.0
        %1535 = vmatpush1.msra.mxu0 0.0
        %1536 = vmatprep.subr.mxu0 0.0
        %1537 = vmatpush1.msra.mxu0 0.0
        %1538 = vmatprep.subr.mxu0 0.0
        %1539 = vmatpush1.msra.mxu0 0.0
        %1540 = vmatprep.subr.mxu0 0.0
        %1541 = vmatpush1.msra.mxu0 0.0
        %1542 = vmatprep.subr.mxu0 0.0
        %1543 = vmatpush1.msra.mxu0 0.0
        %1544 = vmatprep.subr.mxu0 0.0
        %1545 = vmatpush1.msra.mxu0 0.0
        %1546 = vmatprep.subr.mxu0 0.0
        %1547 = vmatpush1.msra.mxu0 0.0
        %1548 = vmatprep.subr.mxu0 0.0
        %1549 = vmatpush1.msra.mxu0 0.0
        %1550 = vmatprep.subr.mxu0 0.0
        %1551 = vmatpush1.msra.mxu0 0.0
        %1552 = vmatprep.subr.mxu0 0.0
        %1553 = vmatpush1.msra.mxu0 0.0
        %1554 = vmatprep.subr.mxu0 0.0
        %1555 = vmatpush1.msra.mxu0 0.0
        %1556 = vmatprep.subr.mxu0 0.0
        %1557 = vmatpush1.msra.mxu0 0.0
        %1558 = vmatprep.subr.mxu0 0.0
        %1559 = vmatpush1.msra.mxu0 0.0
        %1560 = vmatprep.subr.mxu0 0.0
        %1561 = vmatpush1.msra.mxu0 0.0
        %1562 = vmatprep.subr.mxu0 0.0
        %1563 = vmatpush1.msra.mxu0 0.0
        %1564 = vmatprep.subr.mxu0 0.0
        %1565 = vmatpush1.msra.mxu0 0.0
        %1566 = vmatprep.subr.mxu0 0.0
        %1567 = vmatpush1.msra.mxu0 0.0
        %1568 = vmatprep.subr.mxu0 0.0
        %1569 = vmatpush1.msra.mxu0 0.0
        %1570 = vmatprep.subr.mxu0 0.0
        %1571 = vmatpush1.msra.mxu0 0.0
        %1572 = vmatprep.subr.mxu0 0.0
        %1573 = vmatpush1.msra.mxu0 0.0
        %1574 = vmatprep.subr.mxu0 0.0
        %1575 = vmatpush1.msra.mxu0 0.0
        %1576 = vmatprep.subr.mxu0 0.0
        %1577 = vmatpush1.msra.mxu0 0.0
        %1578 = vmatprep.subr.mxu0 0.0
        %1579 = vmatpush1.msra.mxu0 0.0
        %1580 = vmatprep.subr.mxu0 0.0
        %1581 = vmatpush1.msra.mxu0 0.0
        %1582 = vmatprep.subr.mxu0 0.0
        %1583 = vmatpush1.msra.mxu0 0.0
        %1584 = vmatprep.subr.mxu0 0.0
        %1585 = vmatpush1.msra.mxu0 0.0
        %1586 = vmatprep.subr.mxu0 0.0
        %1587 = vmatpush1.msra.mxu0 0.0
        %1588 = vmatprep.subr.mxu0 0.0
        %1589 = vmatpush1.msra.mxu0 0.0
        %1590 = vmatprep.subr.mxu0 0.0
        %1591 = vmatpush1.msra.mxu0 0.0
        %1592 = vmatprep.mubr.f32.mxu0 0.0
        %1593 = vmatmul.mubr.f32.gmra.mrb[0].mxu0 %v1526
        %v1594 = vpop.f32.mrb[0].mxu0
        %v1595 = vadd.f32 0.0, %v1594
        %v1596 = vpop.f32.mrb[0].mxu0
        %1597 = vdwg.mxu0
        %1598 = vrot.lane.b32.xlu0 %v350, 56
        %v1599 = vpop.permute.xlu0 %1598
        %v1602 = vsel %vm360, %v1369, 0
        %1604 = vmatprep.subr.mxu0 0.0
        %1605 = vmatpush1.msra.mxu0 %v1599
        %1606 = vmatprep.subr.mxu0 0.0
        %1607 = vmatpush1.msra.mxu0 0.0
        %1608 = vmatprep.subr.mxu0 0.0
        %1609 = vmatpush1.msra.mxu0 0.0
        %1610 = vmatprep.subr.mxu0 0.0
        %1611 = vmatpush1.msra.mxu0 0.0
        %1612 = vmatprep.subr.mxu0 0.0
        %1613 = vmatpush1.msra.mxu0 0.0
        %1614 = vmatprep.subr.mxu0 0.0
        %1615 = vmatpush1.msra.mxu0 0.0
        %1616 = vmatprep.subr.mxu0 0.0
        %1617 = vmatpush1.msra.mxu0 0.0
        %1618 = vmatprep.subr.mxu0 0.0
        %1619 = vmatpush1.msra.mxu0 0.0
        %1620 = vmatprep.subr.mxu0 0.0
        %1621 = vmatpush1.msra.mxu0 0.0
        %1622 = vmatprep.subr.mxu0 0.0
        %1623 = vmatpush1.msra.mxu0 0.0
        %1624 = vmatprep.subr.mxu0 0.0
        %1625 = vmatpush1.msra.mxu0 0.0
        %1626 = vmatprep.subr.mxu0 0.0
        %1627 = vmatpush1.msra.mxu0 0.0
        %1628 = vmatprep.subr.mxu0 0.0
        %1629 = vmatpush1.msra.mxu0 0.0
        %1630 = vmatprep.subr.mxu0 0.0
        %1631 = vmatpush1.msra.mxu0 0.0
        %1632 = vmatprep.subr.mxu0 0.0
        %1633 = vmatpush1.msra.mxu0 0.0
        %1634 = vmatprep.subr.mxu0 0.0
        %1635 = vmatpush1.msra.mxu0 0.0
        %1636 = vmatprep.subr.mxu0 0.0
        %1637 = vmatpush1.msra.mxu0 0.0
        %1638 = vmatprep.subr.mxu0 0.0
        %1639 = vmatpush1.msra.mxu0 0.0
        %1640 = vmatprep.subr.mxu0 0.0
        %1641 = vmatpush1.msra.mxu0 0.0
        %1642 = vmatprep.subr.mxu0 0.0
        %1643 = vmatpush1.msra.mxu0 0.0
        %1644 = vmatprep.subr.mxu0 0.0
        %1645 = vmatpush1.msra.mxu0 0.0
        %1646 = vmatprep.subr.mxu0 0.0
        %1647 = vmatpush1.msra.mxu0 0.0
        %1648 = vmatprep.subr.mxu0 0.0
        %1649 = vmatpush1.msra.mxu0 0.0
        %1650 = vmatprep.subr.mxu0 0.0
        %1651 = vmatpush1.msra.mxu0 0.0
        %1652 = vmatprep.subr.mxu0 0.0
        %1653 = vmatpush1.msra.mxu0 0.0
        %1654 = vmatprep.subr.mxu0 0.0
        %1655 = vmatpush1.msra.mxu0 0.0
        %1656 = vmatprep.subr.mxu0 0.0
        %1657 = vmatpush1.msra.mxu0 0.0
        %1658 = vmatprep.subr.mxu0 0.0
        %1659 = vmatpush1.msra.mxu0 0.0
        %1660 = vmatprep.subr.mxu0 0.0
        %1661 = vmatpush1.msra.mxu0 0.0
        %1662 = vmatprep.subr.mxu0 0.0
        %1663 = vmatpush1.msra.mxu0 0.0
        %1664 = vmatprep.subr.mxu0 0.0
        %1665 = vmatpush1.msra.mxu0 0.0
        %1666 = vmatprep.subr.mxu0 0.0
        %1667 = vmatpush1.msra.mxu0 0.0
        %1668 = vmatprep.mubr.f32.mxu0 0.0
        %1669 = vmatmul.mubr.f32.gmra.mrb[0].mxu0 %v1602
        %v1670 = vpop.f32.mrb[0].mxu0
        %v1671 = vadd.f32 0.0, %v1670
        %v1672 = vpop.f32.mrb[0].mxu0
        %1673 = vdwg.mxu0
        %v1675 = vsel %vm360, %v1443, 0
        %v1678 = vsel %vm360, %v1519, 0
        %v1681 = vsel %vm360, %v1595, 0
        %v1684 = vsel %vm360, %v1671, 0
        %1686 = vmatprep.subr.mxu0 0.0
        %1687 = vmatpush1.msra.mxu0 %v354
        %1688 = vmatprep.subr.mxu0 0.0
        %1689 = vmatpush1.msra.mxu0 0.0
        %1690 = vmatprep.subr.mxu0 0.0
        %1691 = vmatpush1.msra.mxu0 0.0
        %1692 = vmatprep.subr.mxu0 0.0
        %1693 = vmatpush1.msra.mxu0 0.0
        %1694 = vmatprep.subr.mxu0 0.0
        %1695 = vmatpush1.msra.mxu0 0.0
        %1696 = vmatprep.subr.mxu0 0.0
        %1697 = vmatpush1.msra.mxu0 0.0
        %1698 = vmatprep.subr.mxu0 0.0
        %1699 = vmatpush1.msra.mxu0 0.0
        %1700 = vmatprep.subr.mxu0 0.0
        %1701 = vmatpush1.msra.mxu0 0.0
        %1702 = vmatprep.subr.mxu0 0.0
        %1703 = vmatpush1.msra.mxu0 0.0
        %1704 = vmatprep.subr.mxu0 0.0
        %1705 = vmatpush1.msra.mxu0 0.0
        %1706 = vmatprep.subr.mxu0 0.0
        %1707 = vmatpush1.msra.mxu0 0.0
        %1708 = vmatprep.subr.mxu0 0.0
        %1709 = vmatpush1.msra.mxu0 0.0
        %1710 = vmatprep.subr.mxu0 0.0
        %1711 = vmatpush1.msra.mxu0 0.0
        %1712 = vmatprep.subr.mxu0 0.0
        %1713 = vmatpush1.msra.mxu0 0.0
        %1714 = vmatprep.subr.mxu0 0.0
        %1715 = vmatpush1.msra.mxu0 0.0
        %1716 = vmatprep.subr.mxu0 0.0
        %1717 = vmatpush1.msra.mxu0 0.0
        %1718 = vmatprep.subr.mxu0 0.0
        %1719 = vmatpush1.msra.mxu0 0.0
        %1720 = vmatprep.subr.mxu0 0.0
        %1721 = vmatpush1.msra.mxu0 0.0
        %1722 = vmatprep.subr.mxu0 0.0
        %1723 = vmatpush1.msra.mxu0 0.0
        %1724 = vmatprep.subr.mxu0 0.0
        %1725 = vmatpush1.msra.mxu0 0.0
        %1726 = vmatprep.subr.mxu0 0.0
        %1727 = vmatpush1.msra.mxu0 0.0
        %1728 = vmatprep.subr.mxu0 0.0
        %1729 = vmatpush1.msra.mxu0 0.0
        %1730 = vmatprep.subr.mxu0 0.0
        %1731 = vmatpush1.msra.mxu0 0.0
        %1732 = vmatprep.subr.mxu0 0.0
        %1733 = vmatpush1.msra.mxu0 0.0
        %1734 = vmatprep.subr.mxu0 0.0
        %1735 = vmatpush1.msra.mxu0 0.0
        %1736 = vmatprep.subr.mxu0 0.0
        %1737 = vmatpush1.msra.mxu0 0.0
        %1738 = vmatprep.subr.mxu0 0.0
        %1739 = vmatpush1.msra.mxu0 0.0
        %1740 = vmatprep.subr.mxu0 0.0
        %1741 = vmatpush1.msra.mxu0 0.0
        %1742 = vmatprep.subr.mxu0 0.0
        %1743 = vmatpush1.msra.mxu0 0.0
        %1744 = vmatprep.subr.mxu0 0.0
        %1745 = vmatpush1.msra.mxu0 0.0
        %1746 = vmatprep.subr.mxu0 0.0
        %1747 = vmatpush1.msra.mxu0 0.0
        %1748 = vmatprep.subr.mxu0 0.0
        %1749 = vmatpush1.msra.mxu0 0.0
        %1750 = vmatprep.mubr.f32.mxu0 0.0
        %1751 = vmatmul.mubr.f32.gmra.mrb[0].mxu0 %v1675
        %v1752 = vpop.f32.mrb[0].mxu0
        %v1753 = vadd.f32 0.0, %v1752
        %v1754 = vpop.f32.mrb[0].mxu0
        %1755 = vmatprep.mubr.f32.mxu0 0.0
        %1756 = vmatmul.mubr.f32.gmra.mrb[0].mxu0 %v1678
        %v1757 = vpop.f32.mrb[0].mxu0
        %v1758 = vadd.f32 0.0, %v1757
        %v1759 = vpop.f32.mrb[0].mxu0
        %1760 = vmatprep.mubr.f32.mxu0 0.0
        %1761 = vmatmul.mubr.f32.gmra.mrb[0].mxu0 %v1681
        %v1762 = vpop.f32.mrb[0].mxu0
        %v1763 = vadd.f32 0.0, %v1762
        %v1764 = vpop.f32.mrb[0].mxu0
        %1765 = vmatprep.mubr.f32.mxu0 0.0
        %1766 = vmatmul.mubr.f32.gmra.mrb[0].mxu0 %v1684
        %v1767 = vpop.f32.mrb[0].mxu0
        %v1768 = vadd.f32 0.0, %v1767
        %v1769 = vpop.f32.mrb[0].mxu0
        %1770 = vdwg.mxu0
        %v1772 = vsel %vm360, %v783, 0
        %v1775 = vsel %vm360, %v859, 0
        %v1778 = vsel %vm360, %v935, 0
        %v1781 = vsel %vm360, %v1011, 0
        %1783 = vmatprep.subr.mxu0 0.0
        %1784 = vmatpush1.msra.mxu0 %v353
        %1785 = vmatprep.subr.mxu0 0.0
        %1786 = vmatpush1.msra.mxu0 0.0
        %1787 = vmatprep.subr.mxu0 0.0
        %1788 = vmatpush1.msra.mxu0 0.0
        %1789 = vmatprep.subr.mxu0 0.0
        %1790 = vmatpush1.msra.mxu0 0.0
        %1791 = vmatprep.subr.mxu0 0.0
        %1792 = vmatpush1.msra.mxu0 0.0
        %1793 = vmatprep.subr.mxu0 0.0
        %1794 = vmatpush1.msra.mxu0 0.0
        %1795 = vmatprep.subr.mxu0 0.0
        %1796 = vmatpush1.msra.mxu0 0.0
        %1797 = vmatprep.subr.mxu0 0.0
        %1798 = vmatpush1.msra.mxu0 0.0
        %1799 = vmatprep.subr.mxu0 0.0
        %1800 = vmatpush1.msra.mxu0 0.0
        %1801 = vmatprep.subr.mxu0 0.0
        %1802 = vmatpush1.msra.mxu0 0.0
        %1803 = vmatprep.subr.mxu0 0.0
        %1804 = vmatpush1.msra.mxu0 0.0
        %1805 = vmatprep.subr.mxu0 0.0
        %1806 = vmatpush1.msra.mxu0 0.0
        %1807 = vmatprep.subr.mxu0 0.0
        %1808 = vmatpush1.msra.mxu0 0.0
        %1809 = vmatprep.subr.mxu0 0.0
        %1810 = vmatpush1.msra.mxu0 0.0
        %1811 = vmatprep.subr.mxu0 0.0
        %1812 = vmatpush1.msra.mxu0 0.0
        %1813 = vmatprep.subr.mxu0 0.0
        %1814 = vmatpush1.msra.mxu0 0.0
        %1815 = vmatprep.subr.mxu0 0.0
        %1816 = vmatpush1.msra.mxu0 0.0
        %1817 = vmatprep.subr.mxu0 0.0
        %1818 = vmatpush1.msra.mxu0 0.0
        %1819 = vmatprep.subr.mxu0 0.0
        %1820 = vmatpush1.msra.mxu0 0.0
        %1821 = vmatprep.subr.mxu0 0.0
        %1822 = vmatpush1.msra.mxu0 0.0
        %1823 = vmatprep.subr.mxu0 0.0
        %1824 = vmatpush1.msra.mxu0 0.0
        %1825 = vmatprep.subr.mxu0 0.0
        %1826 = vmatpush1.msra.mxu0 0.0
        %1827 = vmatprep.subr.mxu0 0.0
        %1828 = vmatpush1.msra.mxu0 0.0
        %1829 = vmatprep.subr.mxu0 0.0
        %1830 = vmatpush1.msra.mxu0 0.0
        %1831 = vmatprep.subr.mxu0 0.0
        %1832 = vmatpush1.msra.mxu0 0.0
        %1833 = vmatprep.subr.mxu0 0.0
        %1834 = vmatpush1.msra.mxu0 0.0
        %1835 = vmatprep.subr.mxu0 0.0
        %1836 = vmatpush1.msra.mxu0 0.0
        %1837 = vmatprep.subr.mxu0 0.0
        %1838 = vmatpush1.msra.mxu0 0.0
        %1839 = vmatprep.subr.mxu0 0.0
        %1840 = vmatpush1.msra.mxu0 0.0
        %1841 = vmatprep.subr.mxu0 0.0
        %1842 = vmatpush1.msra.mxu0 0.0
        %1843 = vmatprep.subr.mxu0 0.0
        %1844 = vmatpush1.msra.mxu0 0.0
        %1845 = vmatprep.subr.mxu0 0.0
        %1846 = vmatpush1.msra.mxu0 0.0
        %1847 = vmatprep.mubr.f32.mxu0 0.0
        %1848 = vmatmul.mubr.f32.gmra.mrb[0].mxu0 %v1772
        %v1849 = vpop.f32.mrb[0].mxu0
        %v1850 = vadd.f32 %v1753, %v1849
        %v1851 = vpop.f32.mrb[0].mxu0
        %1852 = vmatprep.mubr.f32.mxu0 0.0
        %1853 = vmatmul.mubr.f32.gmra.mrb[0].mxu0 %v1775
        %v1854 = vpop.f32.mrb[0].mxu0
        %v1855 = vadd.f32 %v1758, %v1854
        %v1856 = vpop.f32.mrb[0].mxu0
        %1857 = vmatprep.mubr.f32.mxu0 0.0
        %1858 = vmatmul.mubr.f32.gmra.mrb[0].mxu0 %v1778
        %v1859 = vpop.f32.mrb[0].mxu0
        %v1860 = vadd.f32 %v1763, %v1859
        %v1861 = vpop.f32.mrb[0].mxu0
        %1862 = vmatprep.mubr.f32.mxu0 0.0
        %1863 = vmatmul.mubr.f32.gmra.mrb[0].mxu0 %v1781
        %v1864 = vpop.f32.mrb[0].mxu0
        %v1865 = vadd.f32 %v1768, %v1864
        %v1866 = vpop.f32.mrb[0].mxu0
        %1867 = vdwg.mxu0
        %1868 = vrot.lane.b32.xlu0 %v335, 112
        %v1869 = vpop.permute.xlu0 %1868
        %1870 = vrot.lane.b32.xlu0 %v335, 80
        %v1871 = vpop.permute.xlu0 %1870
        %v1872 = vsel %vm360, %v1869, 0
        %v1874 = vsel %vm360, %v1871, 0
        %1876 = vmatprep.subr.mxu0 0.0
        %1877 = vmatpush1.xpose.msra.mxu0 %v1874
        %1878 = vmatprep.subr.mxu0 0.0
        %1879 = vmatpush1.xpose.msra.mxu0 0.0
        %1880 = vmatprep.subr.mxu0 0.0
        %1881 = vmatpush1.xpose.msra.mxu0 0.0
        %1882 = vmatprep.subr.mxu0 0.0
        %1883 = vmatpush1.xpose.msra.mxu0 0.0
        %1884 = vmatprep.subr.mxu0 0.0
        %1885 = vmatpush1.xpose.msra.mxu0 0.0
        %1886 = vmatprep.subr.mxu0 0.0
        %1887 = vmatpush1.xpose.msra.mxu0 0.0
        %1888 = vmatprep.subr.mxu0 0.0
        %1889 = vmatpush1.xpose.msra.mxu0 0.0
        %1890 = vmatprep.subr.mxu0 0.0
        %1891 = vmatpush1.xpose.msra.mxu0 0.0
        %1892 = vmatprep.subr.mxu0 0.0
        %1893 = vmatpush1.xpose.msra.mxu0 0.0
        %1894 = vmatprep.subr.mxu0 0.0
        %1895 = vmatpush1.xpose.msra.mxu0 0.0
        %1896 = vmatprep.subr.mxu0 0.0
        %1897 = vmatpush1.xpose.msra.mxu0 0.0
        %1898 = vmatprep.subr.mxu0 0.0
        %1899 = vmatpush1.xpose.msra.mxu0 0.0
        %1900 = vmatprep.subr.mxu0 0.0
        %1901 = vmatpush1.xpose.msra.mxu0 0.0
        %1902 = vmatprep.subr.mxu0 0.0
        %1903 = vmatpush1.xpose.msra.mxu0 0.0
        %1904 = vmatprep.subr.mxu0 0.0
        %1905 = vmatpush1.xpose.msra.mxu0 0.0
        %1906 = vmatprep.subr.mxu0 0.0
        %1907 = vmatpush1.xpose.msra.mxu0 0.0
        %1908 = vmatprep.subr.mxu0 0.0
        %1909 = vmatpush1.xpose.msra.mxu0 0.0
        %1910 = vmatprep.subr.mxu0 0.0
        %1911 = vmatpush1.xpose.msra.mxu0 0.0
        %1912 = vmatprep.subr.mxu0 0.0
        %1913 = vmatpush1.xpose.msra.mxu0 0.0
        %1914 = vmatprep.subr.mxu0 0.0
        %1915 = vmatpush1.xpose.msra.mxu0 0.0
        %1916 = vmatprep.subr.mxu0 0.0
        %1917 = vmatpush1.xpose.msra.mxu0 0.0
        %1918 = vmatprep.subr.mxu0 0.0
        %1919 = vmatpush1.xpose.msra.mxu0 0.0
        %1920 = vmatprep.subr.mxu0 0.0
        %1921 = vmatpush1.xpose.msra.mxu0 0.0
        %1922 = vmatprep.subr.mxu0 0.0
        %1923 = vmatpush1.xpose.msra.mxu0 0.0
        %1924 = vmatprep.subr.mxu0 0.0
        %1925 = vmatpush1.xpose.msra.mxu0 0.0
        %1926 = vmatprep.subr.mxu0 0.0
        %1927 = vmatpush1.xpose.msra.mxu0 0.0
        %1928 = vmatprep.subr.mxu0 0.0
        %1929 = vmatpush1.xpose.msra.mxu0 0.0
        %1930 = vmatprep.subr.mxu0 0.0
        %1931 = vmatpush1.xpose.msra.mxu0 0.0
        %1932 = vmatprep.subr.mxu0 0.0
        %1933 = vmatpush1.xpose.msra.mxu0 0.0
        %1934 = vmatprep.subr.mxu0 0.0
        %1935 = vmatpush1.xpose.msra.mxu0 0.0
        %1936 = vmatprep.subr.mxu0 0.0
        %1937 = vmatpush1.xpose.msra.mxu0 0.0
        %1938 = vmatprep.subr.mxu0 0.0
        %1939 = vmatpush1.xpose.msra.mxu0 0.0
        %1940 = vmatprep.mubr.f32.mxu0 0.0
        %1941 = vmatmul.mubr.f32.gmra.mrb[0].mxu0 %v1872
        %v1942 = vpop.f32.mrb[0].mxu0
        %v1943 = vadd.f32 0.0, %v1942
        %v1944 = vpop.f32.mrb[0].mxu0
        %1945 = vdwg.mxu0
        %1946 = vrot.lane.b32.xlu0 %v340, 112
        %v1947 = vpop.permute.xlu0 %1946
        %1948 = vrot.lane.b32.xlu0 %v340, 80
        %v1949 = vpop.permute.xlu0 %1948
        %v1950 = vsel %vm360, %v1947, 0
        %v1952 = vsel %vm360, %v1949, 0
        %1954 = vmatprep.subr.mxu0 0.0
        %1955 = vmatpush1.xpose.msra.mxu0 %v1952
        %1956 = vmatprep.subr.mxu0 0.0
        %1957 = vmatpush1.xpose.msra.mxu0 0.0
        %1958 = vmatprep.subr.mxu0 0.0
        %1959 = vmatpush1.xpose.msra.mxu0 0.0
        %1960 = vmatprep.subr.mxu0 0.0
        %1961 = vmatpush1.xpose.msra.mxu0 0.0
        %1962 = vmatprep.subr.mxu0 0.0
        %1963 = vmatpush1.xpose.msra.mxu0 0.0
        %1964 = vmatprep.subr.mxu0 0.0
        %1965 = vmatpush1.xpose.msra.mxu0 0.0
        %1966 = vmatprep.subr.mxu0 0.0
        %1967 = vmatpush1.xpose.msra.mxu0 0.0
        %1968 = vmatprep.subr.mxu0 0.0
        %1969 = vmatpush1.xpose.msra.mxu0 0.0
        %1970 = vmatprep.subr.mxu0 0.0
        %1971 = vmatpush1.xpose.msra.mxu0 0.0
        %1972 = vmatprep.subr.mxu0 0.0
        %1973 = vmatpush1.xpose.msra.mxu0 0.0
        %1974 = vmatprep.subr.mxu0 0.0
        %1975 = vmatpush1.xpose.msra.mxu0 0.0
        %1976 = vmatprep.subr.mxu0 0.0
        %1977 = vmatpush1.xpose.msra.mxu0 0.0
        %1978 = vmatprep.subr.mxu0 0.0
        %1979 = vmatpush1.xpose.msra.mxu0 0.0
        %1980 = vmatprep.subr.mxu0 0.0
        %1981 = vmatpush1.xpose.msra.mxu0 0.0
        %1982 = vmatprep.subr.mxu0 0.0
        %1983 = vmatpush1.xpose.msra.mxu0 0.0
        %1984 = vmatprep.subr.mxu0 0.0
        %1985 = vmatpush1.xpose.msra.mxu0 0.0
        %1986 = vmatprep.subr.mxu0 0.0
        %1987 = vmatpush1.xpose.msra.mxu0 0.0
        %1988 = vmatprep.subr.mxu0 0.0
        %1989 = vmatpush1.xpose.msra.mxu0 0.0
        %1990 = vmatprep.subr.mxu0 0.0
        %1991 = vmatpush1.xpose.msra.mxu0 0.0
        %1992 = vmatprep.subr.mxu0 0.0
        %1993 = vmatpush1.xpose.msra.mxu0 0.0
        %1994 = vmatprep.subr.mxu0 0.0
        %1995 = vmatpush1.xpose.msra.mxu0 0.0
        %1996 = vmatprep.subr.mxu0 0.0
        %1997 = vmatpush1.xpose.msra.mxu0 0.0
        %1998 = vmatprep.subr.mxu0 0.0
        %1999 = vmatpush1.xpose.msra.mxu0 0.0
        %2000 = vmatprep.subr.mxu0 0.0
        %2001 = vmatpush1.xpose.msra.mxu0 0.0
        %2002 = vmatprep.subr.mxu0 0.0
        %2003 = vmatpush1.xpose.msra.mxu0 0.0
        %2004 = vmatprep.subr.mxu0 0.0
        %2005 = vmatpush1.xpose.msra.mxu0 0.0
        %2006 = vmatprep.subr.mxu0 0.0
        %2007 = vmatpush1.xpose.msra.mxu0 0.0
        %2008 = vmatprep.subr.mxu0 0.0
        %2009 = vmatpush1.xpose.msra.mxu0 0.0
        %2010 = vmatprep.subr.mxu0 0.0
        %2011 = vmatpush1.xpose.msra.mxu0 0.0
        %2012 = vmatprep.subr.mxu0 0.0
        %2013 = vmatpush1.xpose.msra.mxu0 0.0
        %2014 = vmatprep.subr.mxu0 0.0
        %2015 = vmatpush1.xpose.msra.mxu0 0.0
        %2016 = vmatprep.subr.mxu0 0.0
        %2017 = vmatpush1.xpose.msra.mxu0 0.0
        %2018 = vmatprep.mubr.f32.mxu0 0.0
        %2019 = vmatmul.mubr.f32.gmra.mrb[0].mxu0 %v1950
        %v2020 = vpop.f32.mrb[0].mxu0
        %v2021 = vadd.f32 0.0, %v2020
        %v2022 = vpop.f32.mrb[0].mxu0
        %2023 = vdwg.mxu0
        %2024 = vrot.lane.b32.xlu0 %v345, 112
        %v2025 = vpop.permute.xlu0 %2024
        %2026 = vrot.lane.b32.xlu0 %v345, 80
        %v2027 = vpop.permute.xlu0 %2026
        %v2028 = vsel %vm360, %v2025, 0
        %v2030 = vsel %vm360, %v2027, 0
        %2032 = vmatprep.subr.mxu0 0.0
        %2033 = vmatpush1.xpose.msra.mxu0 %v2030
        %2034 = vmatprep.subr.mxu0 0.0
        %2035 = vmatpush1.xpose.msra.mxu0 0.0
        %2036 = vmatprep.subr.mxu0 0.0
        %2037 = vmatpush1.xpose.msra.mxu0 0.0
        %2038 = vmatprep.subr.mxu0 0.0
        %2039 = vmatpush1.xpose.msra.mxu0 0.0
        %2040 = vmatprep.subr.mxu0 0.0
        %2041 = vmatpush1.xpose.msra.mxu0 0.0
        %2042 = vmatprep.subr.mxu0 0.0
        %2043 = vmatpush1.xpose.msra.mxu0 0.0
        %2044 = vmatprep.subr.mxu0 0.0
        %2045 = vmatpush1.xpose.msra.mxu0 0.0
        %2046 = vmatprep.subr.mxu0 0.0
        %2047 = vmatpush1.xpose.msra.mxu0 0.0
        %2048 = vmatprep.subr.mxu0 0.0
        %2049 = vmatpush1.xpose.msra.mxu0 0.0
        %2050 = vmatprep.subr.mxu0 0.0
        %2051 = vmatpush1.xpose.msra.mxu0 0.0
        %2052 = vmatprep.subr.mxu0 0.0
        %2053 = vmatpush1.xpose.msra.mxu0 0.0
        %2054 = vmatprep.subr.mxu0 0.0
        %2055 = vmatpush1.xpose.msra.mxu0 0.0
        %2056 = vmatprep.subr.mxu0 0.0
        %2057 = vmatpush1.xpose.msra.mxu0 0.0
        %2058 = vmatprep.subr.mxu0 0.0
        %2059 = vmatpush1.xpose.msra.mxu0 0.0
        %2060 = vmatprep.subr.mxu0 0.0
        %2061 = vmatpush1.xpose.msra.mxu0 0.0
        %2062 = vmatprep.subr.mxu0 0.0
        %2063 = vmatpush1.xpose.msra.mxu0 0.0
        %2064 = vmatprep.subr.mxu0 0.0
        %2065 = vmatpush1.xpose.msra.mxu0 0.0
        %2066 = vmatprep.subr.mxu0 0.0
        %2067 = vmatpush1.xpose.msra.mxu0 0.0
        %2068 = vmatprep.subr.mxu0 0.0
        %2069 = vmatpush1.xpose.msra.mxu0 0.0
        %2070 = vmatprep.subr.mxu0 0.0
        %2071 = vmatpush1.xpose.msra.mxu0 0.0
        %2072 = vmatprep.subr.mxu0 0.0
        %2073 = vmatpush1.xpose.msra.mxu0 0.0
        %2074 = vmatprep.subr.mxu0 0.0
        %2075 = vmatpush1.xpose.msra.mxu0 0.0
        %2076 = vmatprep.subr.mxu0 0.0
        %2077 = vmatpush1.xpose.msra.mxu0 0.0
        %2078 = vmatprep.subr.mxu0 0.0
        %2079 = vmatpush1.xpose.msra.mxu0 0.0
        %2080 = vmatprep.subr.mxu0 0.0
        %2081 = vmatpush1.xpose.msra.mxu0 0.0
        %2082 = vmatprep.subr.mxu0 0.0
        %2083 = vmatpush1.xpose.msra.mxu0 0.0
        %2084 = vmatprep.subr.mxu0 0.0
        %2085 = vmatpush1.xpose.msra.mxu0 0.0
        %2086 = vmatprep.subr.mxu0 0.0
        %2087 = vmatpush1.xpose.msra.mxu0 0.0
        %2088 = vmatprep.subr.mxu0 0.0
        %2089 = vmatpush1.xpose.msra.mxu0 0.0
        %2090 = vmatprep.subr.mxu0 0.0
        %2091 = vmatpush1.xpose.msra.mxu0 0.0
        %2092 = vmatprep.subr.mxu0 0.0
        %2093 = vmatpush1.xpose.msra.mxu0 0.0
        %2094 = vmatprep.subr.mxu0 0.0
        %2095 = vmatpush1.xpose.msra.mxu0 0.0
        %2096 = vmatprep.mubr.f32.mxu0 0.0
        %2097 = vmatmul.mubr.f32.gmra.mrb[0].mxu0 %v2028
        %v2098 = vpop.f32.mrb[0].mxu0
        %v2099 = vadd.f32 0.0, %v2098
        %v2100 = vpop.f32.mrb[0].mxu0
        %2101 = vdwg.mxu0
        %2102 = vrot.lane.b32.xlu0 %v350, 112
        %v2103 = vpop.permute.xlu0 %2102
        %2104 = vrot.lane.b32.xlu0 %v350, 80
        %v2105 = vpop.permute.xlu0 %2104
        %v2106 = vsel %vm360, %v2103, 0
        %v2108 = vsel %vm360, %v2105, 0
        %2110 = vmatprep.subr.mxu0 0.0
        %2111 = vmatpush1.xpose.msra.mxu0 %v2108
        %2112 = vmatprep.subr.mxu0 0.0
        %2113 = vmatpush1.xpose.msra.mxu0 0.0
        %2114 = vmatprep.subr.mxu0 0.0
        %2115 = vmatpush1.xpose.msra.mxu0 0.0
        %2116 = vmatprep.subr.mxu0 0.0
        %2117 = vmatpush1.xpose.msra.mxu0 0.0
        %2118 = vmatprep.subr.mxu0 0.0
        %2119 = vmatpush1.xpose.msra.mxu0 0.0
        %2120 = vmatprep.subr.mxu0 0.0
        %2121 = vmatpush1.xpose.msra.mxu0 0.0
        %2122 = vmatprep.subr.mxu0 0.0
        %2123 = vmatpush1.xpose.msra.mxu0 0.0
        %2124 = vmatprep.subr.mxu0 0.0
        %2125 = vmatpush1.xpose.msra.mxu0 0.0
        %2126 = vmatprep.subr.mxu0 0.0
        %2127 = vmatpush1.xpose.msra.mxu0 0.0
        %2128 = vmatprep.subr.mxu0 0.0
        %2129 = vmatpush1.xpose.msra.mxu0 0.0
        %2130 = vmatprep.subr.mxu0 0.0
        %2131 = vmatpush1.xpose.msra.mxu0 0.0
        %2132 = vmatprep.subr.mxu0 0.0
        %2133 = vmatpush1.xpose.msra.mxu0 0.0
        %2134 = vmatprep.subr.mxu0 0.0
        %2135 = vmatpush1.xpose.msra.mxu0 0.0
        %2136 = vmatprep.subr.mxu0 0.0
        %2137 = vmatpush1.xpose.msra.mxu0 0.0
        %2138 = vmatprep.subr.mxu0 0.0
        %2139 = vmatpush1.xpose.msra.mxu0 0.0
        %2140 = vmatprep.subr.mxu0 0.0
        %2141 = vmatpush1.xpose.msra.mxu0 0.0
        %2142 = vmatprep.subr.mxu0 0.0
        %2143 = vmatpush1.xpose.msra.mxu0 0.0
        %2144 = vmatprep.subr.mxu0 0.0
        %2145 = vmatpush1.xpose.msra.mxu0 0.0
        %2146 = vmatprep.subr.mxu0 0.0
        %2147 = vmatpush1.xpose.msra.mxu0 0.0
        %2148 = vmatprep.subr.mxu0 0.0
        %2149 = vmatpush1.xpose.msra.mxu0 0.0
        %2150 = vmatprep.subr.mxu0 0.0
        %2151 = vmatpush1.xpose.msra.mxu0 0.0
        %2152 = vmatprep.subr.mxu0 0.0
        %2153 = vmatpush1.xpose.msra.mxu0 0.0
        %2154 = vmatprep.subr.mxu0 0.0
        %2155 = vmatpush1.xpose.msra.mxu0 0.0
        %2156 = vmatprep.subr.mxu0 0.0
        %2157 = vmatpush1.xpose.msra.mxu0 0.0
        %2158 = vmatprep.subr.mxu0 0.0
        %2159 = vmatpush1.xpose.msra.mxu0 0.0
        %2160 = vmatprep.subr.mxu0 0.0
        %2161 = vmatpush1.xpose.msra.mxu0 0.0
        %2162 = vmatprep.subr.mxu0 0.0
        %2163 = vmatpush1.xpose.msra.mxu0 0.0
        %2164 = vmatprep.subr.mxu0 0.0
        %2165 = vmatpush1.xpose.msra.mxu0 0.0
        %2166 = vmatprep.subr.mxu0 0.0
        %2167 = vmatpush1.xpose.msra.mxu0 0.0
        %2168 = vmatprep.subr.mxu0 0.0
        %2169 = vmatpush1.xpose.msra.mxu0 0.0
        %2170 = vmatprep.subr.mxu0 0.0
        %2171 = vmatpush1.xpose.msra.mxu0 0.0
        %2172 = vmatprep.subr.mxu0 0.0
        %2173 = vmatpush1.xpose.msra.mxu0 0.0
        %2174 = vmatprep.mubr.f32.mxu0 0.0
        %2175 = vmatmul.mubr.f32.gmra.mrb[0].mxu0 %v2106
        %v2176 = vpop.f32.mrb[0].mxu0
        %v2177 = vadd.f32 0.0, %v2176
        %v2178 = vpop.f32.mrb[0].mxu0
        %2179 = vdwg.mxu0
        %v2180 = vsel %vm360, %v1943, -inf
        %2181 = vmax.xlane.f32.xlu0 %v2180
        %v2182 = vpop.xlane.xlu0 %2181
        %v2183 = vsel %vm360, %v2021, -inf
        %2184 = vmax.xlane.f32.xlu0 %v2183
        %v2185 = vpop.xlane.xlu0 %2184
        %v2186 = vsel %vm360, %v2099, -inf
        %2187 = vmax.xlane.f32.xlu0 %v2186
        %v2188 = vpop.xlane.xlu0 %2187
        %v2189 = vsel %vm360, %v2177, -inf
        %2190 = vmax.xlane.f32.xlu0 %v2189
        %v2191 = vpop.xlane.xlu0 %2190
        %v2192 = vsub.f32 %v1943, %v2182
        %v2193 = vsub.f32 %v2021, %v2185
        %v2194 = vsub.f32 %v2099, %v2188
        %v2195 = vsub.f32 %v2177, %v2191
        %v2196 = vmul.f32 %v2192, 1.442695
        %v2197 = vpow.pop %v2196
        %v2198 = vmul.f32 %v2193, 1.442695
        %v2199 = vpow.pop %v2198
        %v2200 = vmul.f32 %v2194, 1.442695
        %v2201 = vpow.pop %v2200
        %v2202 = vmul.f32 %v2195, 1.442695
        %v2203 = vpow.pop %v2202
        %v2204 = vsel %vm360, %v2197, 0.0
        %2205 = vadd.xlane.f32.xlu0 %v2204
        %v2206 = vpop.xlane.xlu0 %2205
        %v2207 = vsel %vm360, %v2199, 0.0
        %2208 = vadd.xlane.f32.xlu0 %v2207
        %v2209 = vpop.xlane.xlu0 %2208
        %v2210 = vsel %vm360, %v2201, 0.0
        %2211 = vadd.xlane.f32.xlu0 %v2210
        %v2212 = vpop.xlane.xlu0 %2211
        %v2213 = vsel %vm360, %v2203, 0.0
        %2214 = vadd.xlane.f32.xlu0 %v2213
        %v2215 = vpop.xlane.xlu0 %2214
        %v2216 = vrcp.pop %v2206
        %v2217 = vrcp.pop %v2209
        %v2218 = vrcp.pop %v2212
        %v2219 = vrcp.pop %v2215
        %v2220 = vmul.f32 %v2197, %v2216
        %v2221 = vmul.f32 %v2199, %v2217
        %v2222 = vmul.f32 %v2201, %v2218
        %v2223 = vmul.f32 %v2203, %v2219
        %2224 = vrot.lane.b32.xlu0 %v335, 48
        %v2225 = vpop.permute.xlu0 %2224
        %v2228 = vsel %vm360, %v2220, 0
        %2230 = vmatprep.subr.mxu0 0.0
        %2231 = vmatpush1.msra.mxu0 %v2225
        %2232 = vmatprep.subr.mxu0 0.0
        %2233 = vmatpush1.msra.mxu0 0.0
        %2234 = vmatprep.subr.mxu0 0.0
        %2235 = vmatpush1.msra.mxu0 0.0
        %2236 = vmatprep.subr.mxu0 0.0
        %2237 = vmatpush1.msra.mxu0 0.0
        %2238 = vmatprep.subr.mxu0 0.0
        %2239 = vmatpush1.msra.mxu0 0.0
        %2240 = vmatprep.subr.mxu0 0.0
        %2241 = vmatpush1.msra.mxu0 0.0
        %2242 = vmatprep.subr.mxu0 0.0
        %2243 = vmatpush1.msra.mxu0 0.0
        %2244 = vmatprep.subr.mxu0 0.0
        %2245 = vmatpush1.msra.mxu0 0.0
        %2246 = vmatprep.subr.mxu0 0.0
        %2247 = vmatpush1.msra.mxu0 0.0
        %2248 = vmatprep.subr.mxu0 0.0
        %2249 = vmatpush1.msra.mxu0 0.0
        %2250 = vmatprep.subr.mxu0 0.0
        %2251 = vmatpush1.msra.mxu0 0.0
        %2252 = vmatprep.subr.mxu0 0.0
        %2253 = vmatpush1.msra.mxu0 0.0
        %2254 = vmatprep.subr.mxu0 0.0
        %2255 = vmatpush1.msra.mxu0 0.0
        %2256 = vmatprep.subr.mxu0 0.0
        %2257 = vmatpush1.msra.mxu0 0.0
        %2258 = vmatprep.subr.mxu0 0.0
        %2259 = vmatpush1.msra.mxu0 0.0
        %2260 = vmatprep.subr.mxu0 0.0
        %2261 = vmatpush1.msra.mxu0 0.0
        %2262 = vmatprep.subr.mxu0 0.0
        %2263 = vmatpush1.msra.mxu0 0.0
        %2264 = vmatprep.subr.mxu0 0.0
        %2265 = vmatpush1.msra.mxu0 0.0
        %2266 = vmatprep.subr.mxu0 0.0
        %2267 = vmatpush1.msra.mxu0 0.0
        %2268 = vmatprep.subr.mxu0 0.0
        %2269 = vmatpush1.msra.mxu0 0.0
        %2270 = vmatprep.subr.mxu0 0.0
        %2271 = vmatpush1.msra.mxu0 0.0
        %2272 = vmatprep.subr.mxu0 0.0
        %2273 = vmatpush1.msra.mxu0 0.0
        %2274 = vmatprep.subr.mxu0 0.0
        %2275 = vmatpush1.msra.mxu0 0.0
        %2276 = vmatprep.subr.mxu0 0.0
        %2277 = vmatpush1.msra.mxu0 0.0
        %2278 = vmatprep.subr.mxu0 0.0
        %2279 = vmatpush1.msra.mxu0 0.0
        %2280 = vmatprep.subr.mxu0 0.0
        %2281 = vmatpush1.msra.mxu0 0.0
        %2282 = vmatprep.subr.mxu0 0.0
        %2283 = vmatpush1.msra.mxu0 0.0
        %2284 = vmatprep.subr.mxu0 0.0
        %2285 = vmatpush1.msra.mxu0 0.0
        %2286 = vmatprep.subr.mxu0 0.0
        %2287 = vmatpush1.msra.mxu0 0.0
        %2288 = vmatprep.subr.mxu0 0.0
        %2289 = vmatpush1.msra.mxu0 0.0
        %2290 = vmatprep.subr.mxu0 0.0
        %2291 = vmatpush1.msra.mxu0 0.0
        %2292 = vmatprep.subr.mxu0 0.0
        %2293 = vmatpush1.msra.mxu0 0.0
        %2294 = vmatprep.mubr.f32.mxu0 0.0
        %2295 = vmatmul.mubr.f32.gmra.mrb[0].mxu0 %v2228
        %v2296 = vpop.f32.mrb[0].mxu0
        %v2297 = vadd.f32 0.0, %v2296
        %v2298 = vpop.f32.mrb[0].mxu0
        %2299 = vdwg.mxu0
        %2300 = vrot.lane.b32.xlu0 %v340, 48
        %v2301 = vpop.permute.xlu0 %2300
        %v2304 = vsel %vm360, %v2221, 0
        %2306 = vmatprep.subr.mxu0 0.0
        %2307 = vmatpush1.msra.mxu0 %v2301
        %2308 = vmatprep.subr.mxu0 0.0
        %2309 = vmatpush1.msra.mxu0 0.0
        %2310 = vmatprep.subr.mxu0 0.0
        %2311 = vmatpush1.msra.mxu0 0.0
        %2312 = vmatprep.subr.mxu0 0.0
        %2313 = vmatpush1.msra.mxu0 0.0
        %2314 = vmatprep.subr.mxu0 0.0
        %2315 = vmatpush1.msra.mxu0 0.0
        %2316 = vmatprep.subr.mxu0 0.0
        %2317 = vmatpush1.msra.mxu0 0.0
        %2318 = vmatprep.subr.mxu0 0.0
        %2319 = vmatpush1.msra.mxu0 0.0
        %2320 = vmatprep.subr.mxu0 0.0
        %2321 = vmatpush1.msra.mxu0 0.0
        %2322 = vmatprep.subr.mxu0 0.0
        %2323 = vmatpush1.msra.mxu0 0.0
        %2324 = vmatprep.subr.mxu0 0.0
        %2325 = vmatpush1.msra.mxu0 0.0
        %2326 = vmatprep.subr.mxu0 0.0
        %2327 = vmatpush1.msra.mxu0 0.0
        %2328 = vmatprep.subr.mxu0 0.0
        %2329 = vmatpush1.msra.mxu0 0.0
        %2330 = vmatprep.subr.mxu0 0.0
        %2331 = vmatpush1.msra.mxu0 0.0
        %2332 = vmatprep.subr.mxu0 0.0
        %2333 = vmatpush1.msra.mxu0 0.0
        %2334 = vmatprep.subr.mxu0 0.0
        %2335 = vmatpush1.msra.mxu0 0.0
        %2336 = vmatprep.subr.mxu0 0.0
        %2337 = vmatpush1.msra.mxu0 0.0
        %2338 = vmatprep.subr.mxu0 0.0
        %2339 = vmatpush1.msra.mxu0 0.0
        %2340 = vmatprep.subr.mxu0 0.0
        %2341 = vmatpush1.msra.mxu0 0.0
        %2342 = vmatprep.subr.mxu0 0.0
        %2343 = vmatpush1.msra.mxu0 0.0
        %2344 = vmatprep.subr.mxu0 0.0
        %2345 = vmatpush1.msra.mxu0 0.0
        %2346 = vmatprep.subr.mxu0 0.0
        %2347 = vmatpush1.msra.mxu0 0.0
        %2348 = vmatprep.subr.mxu0 0.0
        %2349 = vmatpush1.msra.mxu0 0.0
        %2350 = vmatprep.subr.mxu0 0.0
        %2351 = vmatpush1.msra.mxu0 0.0
        %2352 = vmatprep.subr.mxu0 0.0
        %2353 = vmatpush1.msra.mxu0 0.0
        %2354 = vmatprep.subr.mxu0 0.0
        %2355 = vmatpush1.msra.mxu0 0.0
        %2356 = vmatprep.subr.mxu0 0.0
        %2357 = vmatpush1.msra.mxu0 0.0
        %2358 = vmatprep.subr.mxu0 0.0
        %2359 = vmatpush1.msra.mxu0 0.0
        %2360 = vmatprep.subr.mxu0 0.0
        %2361 = vmatpush1.msra.mxu0 0.0
        %2362 = vmatprep.subr.mxu0 0.0
        %2363 = vmatpush1.msra.mxu0 0.0
        %2364 = vmatprep.subr.mxu0 0.0
        %2365 = vmatpush1.msra.mxu0 0.0
        %2366 = vmatprep.subr.mxu0 0.0
        %2367 = vmatpush1.msra.mxu0 0.0
        %2368 = vmatprep.subr.mxu0 0.0
        %2369 = vmatpush1.msra.mxu0 0.0
        %2370 = vmatprep.mubr.f32.mxu0 0.0
        %2371 = vmatmul.mubr.f32.gmra.mrb[0].mxu0 %v2304
        %v2372 = vpop.f32.mrb[0].mxu0
        %v2373 = vadd.f32 0.0, %v2372
        %v2374 = vpop.f32.mrb[0].mxu0
        %2375 = vdwg.mxu0
        %2376 = vrot.lane.b32.xlu0 %v345, 48
        %v2377 = vpop.permute.xlu0 %2376
        %v2380 = vsel %vm360, %v2222, 0
        %2382 = vmatprep.subr.mxu0 0.0
        %2383 = vmatpush1.msra.mxu0 %v2377
        %2384 = vmatprep.subr.mxu0 0.0
        %2385 = vmatpush1.msra.mxu0 0.0
        %2386 = vmatprep.subr.mxu0 0.0
        %2387 = vmatpush1.msra.mxu0 0.0
        %2388 = vmatprep.subr.mxu0 0.0
        %2389 = vmatpush1.msra.mxu0 0.0
        %2390 = vmatprep.subr.mxu0 0.0
        %2391 = vmatpush1.msra.mxu0 0.0
        %2392 = vmatprep.subr.mxu0 0.0
        %2393 = vmatpush1.msra.mxu0 0.0
        %2394 = vmatprep.subr.mxu0 0.0
        %2395 = vmatpush1.msra.mxu0 0.0
        %2396 = vmatprep.subr.mxu0 0.0
        %2397 = vmatpush1.msra.mxu0 0.0
        %2398 = vmatprep.subr.mxu0 0.0
        %2399 = vmatpush1.msra.mxu0 0.0
        %2400 = vmatprep.subr.mxu0 0.0
        %2401 = vmatpush1.msra.mxu0 0.0
        %2402 = vmatprep.subr.mxu0 0.0
        %2403 = vmatpush1.msra.mxu0 0.0
        %2404 = vmatprep.subr.mxu0 0.0
        %2405 = vmatpush1.msra.mxu0 0.0
        %2406 = vmatprep.subr.mxu0 0.0
        %2407 = vmatpush1.msra.mxu0 0.0
        %2408 = vmatprep.subr.mxu0 0.0
        %2409 = vmatpush1.msra.mxu0 0.0
        %2410 = vmatprep.subr.mxu0 0.0
        %2411 = vmatpush1.msra.mxu0 0.0
        %2412 = vmatprep.subr.mxu0 0.0
        %2413 = vmatpush1.msra.mxu0 0.0
        %2414 = vmatprep.subr.mxu0 0.0
        %2415 = vmatpush1.msra.mxu0 0.0
        %2416 = vmatprep.subr.mxu0 0.0
        %2417 = vmatpush1.msra.mxu0 0.0
        %2418 = vmatprep.subr.mxu0 0.0
        %2419 = vmatpush1.msra.mxu0 0.0
        %2420 = vmatprep.subr.mxu0 0.0
        %2421 = vmatpush1.msra.mxu0 0.0
        %2422 = vmatprep.subr.mxu0 0.0
        %2423 = vmatpush1.msra.mxu0 0.0
        %2424 = vmatprep.subr.mxu0 0.0
        %2425 = vmatpush1.msra.mxu0 0.0
        %2426 = vmatprep.subr.mxu0 0.0
        %2427 = vmatpush1.msra.mxu0 0.0
        %2428 = vmatprep.subr.mxu0 0.0
        %2429 = vmatpush1.msra.mxu0 0.0
        %2430 = vmatprep.subr.mxu0 0.0
        %2431 = vmatpush1.msra.mxu0 0.0
        %2432 = vmatprep.subr.mxu0 0.0
        %2433 = vmatpush1.msra.mxu0 0.0
        %2434 = vmatprep.subr.mxu0 0.0
        %2435 = vmatpush1.msra.mxu0 0.0
        %2436 = vmatprep.subr.mxu0 0.0
        %2437 = vmatpush1.msra.mxu0 0.0
        %2438 = vmatprep.subr.mxu0 0.0
        %2439 = vmatpush1.msra.mxu0 0.0
        %2440 = vmatprep.subr.mxu0 0.0
        %2441 = vmatpush1.msra.mxu0 0.0
        %2442 = vmatprep.subr.mxu0 0.0
        %2443 = vmatpush1.msra.mxu0 0.0
        %2444 = vmatprep.subr.mxu0 0.0
        %2445 = vmatpush1.msra.mxu0 0.0
        %2446 = vmatprep.mubr.f32.mxu0 0.0
        %2447 = vmatmul.mubr.f32.gmra.mrb[0].mxu0 %v2380
        %v2448 = vpop.f32.mrb[0].mxu0
        %v2449 = vadd.f32 0.0, %v2448
        %v2450 = vpop.f32.mrb[0].mxu0
        %2451 = vdwg.mxu0
        %2452 = vrot.lane.b32.xlu0 %v350, 48
        %v2453 = vpop.permute.xlu0 %2452
        %v2456 = vsel %vm360, %v2223, 0
        %2458 = vmatprep.subr.mxu0 0.0
        %2459 = vmatpush1.msra.mxu0 %v2453
        %2460 = vmatprep.subr.mxu0 0.0
        %2461 = vmatpush1.msra.mxu0 0.0
        %2462 = vmatprep.subr.mxu0 0.0
        %2463 = vmatpush1.msra.mxu0 0.0
        %2464 = vmatprep.subr.mxu0 0.0
        %2465 = vmatpush1.msra.mxu0 0.0
        %2466 = vmatprep.subr.mxu0 0.0
        %2467 = vmatpush1.msra.mxu0 0.0
        %2468 = vmatprep.subr.mxu0 0.0
        %2469 = vmatpush1.msra.mxu0 0.0
        %2470 = vmatprep.subr.mxu0 0.0
        %2471 = vmatpush1.msra.mxu0 0.0
        %2472 = vmatprep.subr.mxu0 0.0
        %2473 = vmatpush1.msra.mxu0 0.0
        %2474 = vmatprep.subr.mxu0 0.0
        %2475 = vmatpush1.msra.mxu0 0.0
        %2476 = vmatprep.subr.mxu0 0.0
        %2477 = vmatpush1.msra.mxu0 0.0
        %2478 = vmatprep.subr.mxu0 0.0
        %2479 = vmatpush1.msra.mxu0 0.0
        %2480 = vmatprep.subr.mxu0 0.0
        %2481 = vmatpush1.msra.mxu0 0.0
        %2482 = vmatprep.subr.mxu0 0.0
        %2483 = vmatpush1.msra.mxu0 0.0
        %2484 = vmatprep.subr.mxu0 0.0
        %2485 = vmatpush1.msra.mxu0 0.0
        %2486 = vmatprep.subr.mxu0 0.0
        %2487 = vmatpush1.msra.mxu0 0.0
        %2488 = vmatprep.subr.mxu0 0.0
        %2489 = vmatpush1.msra.mxu0 0.0
        %2490 = vmatprep.subr.mxu0 0.0
        %2491 = vmatpush1.msra.mxu0 0.0
        %2492 = vmatprep.subr.mxu0 0.0
        %2493 = vmatpush1.msra.mxu0 0.0
        %2494 = vmatprep.subr.mxu0 0.0
        %2495 = vmatpush1.msra.mxu0 0.0
        %2496 = vmatprep.subr.mxu0 0.0
        %2497 = vmatpush1.msra.mxu0 0.0
        %2498 = vmatprep.subr.mxu0 0.0
        %2499 = vmatpush1.msra.mxu0 0.0
        %2500 = vmatprep.subr.mxu0 0.0
        %2501 = vmatpush1.msra.mxu0 0.0
        %2502 = vmatprep.subr.mxu0 0.0
        %2503 = vmatpush1.msra.mxu0 0.0
        %2504 = vmatprep.subr.mxu0 0.0
        %2505 = vmatpush1.msra.mxu0 0.0
        %2506 = vmatprep.subr.mxu0 0.0
        %2507 = vmatpush1.msra.mxu0 0.0
        %2508 = vmatprep.subr.mxu0 0.0
        %2509 = vmatpush1.msra.mxu0 0.0
        %2510 = vmatprep.subr.mxu0 0.0
        %2511 = vmatpush1.msra.mxu0 0.0
        %2512 = vmatprep.subr.mxu0 0.0
        %2513 = vmatpush1.msra.mxu0 0.0
        %2514 = vmatprep.subr.mxu0 0.0
        %2515 = vmatpush1.msra.mxu0 0.0
        %2516 = vmatprep.subr.mxu0 0.0
        %2517 = vmatpush1.msra.mxu0 0.0
        %2518 = vmatprep.subr.mxu0 0.0
        %2519 = vmatpush1.msra.mxu0 0.0
        %2520 = vmatprep.subr.mxu0 0.0
        %2521 = vmatpush1.msra.mxu0 0.0
        %2522 = vmatprep.mubr.f32.mxu0 0.0
        %2523 = vmatmul.mubr.f32.gmra.mrb[0].mxu0 %v2456
        %v2524 = vpop.f32.mrb[0].mxu0
        %v2525 = vadd.f32 0.0, %v2524
        %v2526 = vpop.f32.mrb[0].mxu0
        %2527 = vdwg.mxu0
        %v2529 = vsel %vm360, %v2297, 0
        %v2532 = vsel %vm360, %v2373, 0
        %v2535 = vsel %vm360, %v2449, 0
        %v2538 = vsel %vm360, %v2525, 0
        %2540 = vmatprep.subr.mxu0 0.0
        %2541 = vmatpush1.msra.mxu0 %v355
        %2542 = vmatprep.subr.mxu0 0.0
        %2543 = vmatpush1.msra.mxu0 0.0
        %2544 = vmatprep.subr.mxu0 0.0
        %2545 = vmatpush1.msra.mxu0 0.0
        %2546 = vmatprep.subr.mxu0 0.0
        %2547 = vmatpush1.msra.mxu0 0.0
        %2548 = vmatprep.subr.mxu0 0.0
        %2549 = vmatpush1.msra.mxu0 0.0
        %2550 = vmatprep.subr.mxu0 0.0
        %2551 = vmatpush1.msra.mxu0 0.0
        %2552 = vmatprep.subr.mxu0 0.0
        %2553 = vmatpush1.msra.mxu0 0.0
        %2554 = vmatprep.subr.mxu0 0.0
        %2555 = vmatpush1.msra.mxu0 0.0
        %2556 = vmatprep.subr.mxu0 0.0
        %2557 = vmatpush1.msra.mxu0 0.0
        %2558 = vmatprep.subr.mxu0 0.0
        %2559 = vmatpush1.msra.mxu0 0.0
        %2560 = vmatprep.subr.mxu0 0.0
        %2561 = vmatpush1.msra.mxu0 0.0
        %2562 = vmatprep.subr.mxu0 0.0
        %2563 = vmatpush1.msra.mxu0 0.0
        %2564 = vmatprep.subr.mxu0 0.0
        %2565 = vmatpush1.msra.mxu0 0.0
        %2566 = vmatprep.subr.mxu0 0.0
        %2567 = vmatpush1.msra.mxu0 0.0
        %2568 = vmatprep.subr.mxu0 0.0
        %2569 = vmatpush1.msra.mxu0 0.0
        %2570 = vmatprep.subr.mxu0 0.0
        %2571 = vmatpush1.msra.mxu0 0.0
        %2572 = vmatprep.subr.mxu0 0.0
        %2573 = vmatpush1.msra.mxu0 0.0
        %2574 = vmatprep.subr.mxu0 0.0
        %2575 = vmatpush1.msra.mxu0 0.0
        %2576 = vmatprep.subr.mxu0 0.0
        %2577 = vmatpush1.msra.mxu0 0.0
        %2578 = vmatprep.subr.mxu0 0.0
        %2579 = vmatpush1.msra.mxu0 0.0
        %2580 = vmatprep.subr.mxu0 0.0
        %2581 = vmatpush1.msra.mxu0 0.0
        %2582 = vmatprep.subr.mxu0 0.0
        %2583 = vmatpush1.msra.mxu0 0.0
        %2584 = vmatprep.subr.mxu0 0.0
        %2585 = vmatpush1.msra.mxu0 0.0
        %2586 = vmatprep.subr.mxu0 0.0
        %2587 = vmatpush1.msra.mxu0 0.0
        %2588 = vmatprep.subr.mxu0 0.0
        %2589 = vmatpush1.msra.mxu0 0.0
        %2590 = vmatprep.subr.mxu0 0.0
        %2591 = vmatpush1.msra.mxu0 0.0
        %2592 = vmatprep.subr.mxu0 0.0
        %2593 = vmatpush1.msra.mxu0 0.0
        %2594 = vmatprep.subr.mxu0 0.0
        %2595 = vmatpush1.msra.mxu0 0.0
        %2596 = vmatprep.subr.mxu0 0.0
        %2597 = vmatpush1.msra.mxu0 0.0
        %2598 = vmatprep.subr.mxu0 0.0
        %2599 = vmatpush1.msra.mxu0 0.0
        %2600 = vmatprep.subr.mxu0 0.0
        %2601 = vmatpush1.msra.mxu0 0.0
        %2602 = vmatprep.subr.mxu0 0.0
        %2603 = vmatpush1.msra.mxu0 0.0
        %2604 = vmatprep.mubr.f32.mxu0 0.0
        %2605 = vmatmul.mubr.f32.gmra.mrb[0].mxu0 %v2529
        %v2606 = vpop.f32.mrb[0].mxu0
        %v2607 = vadd.f32 0.0, %v2606
        %v2608 = vpop.f32.mrb[0].mxu0
        %2609 = vmatprep.mubr.f32.mxu0 0.0
        %2610 = vmatmul.mubr.f32.gmra.mrb[0].mxu0 %v2532
        %v2611 = vpop.f32.mrb[0].mxu0
        %v2612 = vadd.f32 0.0, %v2611
        %v2613 = vpop.f32.mrb[0].mxu0
        %2614 = vmatprep.mubr.f32.mxu0 0.0
        %2615 = vmatmul.mubr.f32.gmra.mrb[0].mxu0 %v2535
        %v2616 = vpop.f32.mrb[0].mxu0
        %v2617 = vadd.f32 0.0, %v2616
        %v2618 = vpop.f32.mrb[0].mxu0
        %2619 = vmatprep.mubr.f32.mxu0 0.0
        %2620 = vmatmul.mubr.f32.gmra.mrb[0].mxu0 %v2538
        %v2621 = vpop.f32.mrb[0].mxu0
        %v2622 = vadd.f32 0.0, %v2621
        %v2623 = vpop.f32.mrb[0].mxu0
        %2624 = vdwg.mxu0
        %v2625 = vadd.f32 %v1850, %v2607
        %v2626 = vadd.f32 %v1855, %v2612
        %v2627 = vadd.f32 %v1860, %v2617
        %v2628 = vadd.f32 %v1865, %v2622
        %2629 = vrot.lane.b32.xlu0 %v335, 104
        %v2630 = vpop.permute.xlu0 %2629
        %2631 = vrot.lane.b32.xlu0 %v335, 72
        %v2632 = vpop.permute.xlu0 %2631
        %v2633 = vsel %vm360, %v2630, 0
        %v2635 = vsel %vm360, %v2632, 0
        %2637 = vmatprep.subr.mxu0 0.0
        %2638 = vmatpush1.xpose.msra.mxu0 %v2635
        %2639 = vmatprep.subr.mxu0 0.0
        %2640 = vmatpush1.xpose.msra.mxu0 0.0
        %2641 = vmatprep.subr.mxu0 0.0
        %2642 = vmatpush1.xpose.msra.mxu0 0.0
        %2643 = vmatprep.subr.mxu0 0.0
        %2644 = vmatpush1.xpose.msra.mxu0 0.0
        %2645 = vmatprep.subr.mxu0 0.0
        %2646 = vmatpush1.xpose.msra.mxu0 0.0
        %2647 = vmatprep.subr.mxu0 0.0
        %2648 = vmatpush1.xpose.msra.mxu0 0.0
        %2649 = vmatprep.subr.mxu0 0.0
        %2650 = vmatpush1.xpose.msra.mxu0 0.0
        %2651 = vmatprep.subr.mxu0 0.0
        %2652 = vmatpush1.xpose.msra.mxu0 0.0
        %2653 = vmatprep.subr.mxu0 0.0
        %2654 = vmatpush1.xpose.msra.mxu0 0.0
        %2655 = vmatprep.subr.mxu0 0.0
        %2656 = vmatpush1.xpose.msra.mxu0 0.0
        %2657 = vmatprep.subr.mxu0 0.0
        %2658 = vmatpush1.xpose.msra.mxu0 0.0
        %2659 = vmatprep.subr.mxu0 0.0
        %2660 = vmatpush1.xpose.msra.mxu0 0.0
        %2661 = vmatprep.subr.mxu0 0.0
        %2662 = vmatpush1.xpose.msra.mxu0 0.0
        %2663 = vmatprep.subr.mxu0 0.0
        %2664 = vmatpush1.xpose.msra.mxu0 0.0
        %2665 = vmatprep.subr.mxu0 0.0
        %2666 = vmatpush1.xpose.msra.mxu0 0.0
        %2667 = vmatprep.subr.mxu0 0.0
        %2668 = vmatpush1.xpose.msra.mxu0 0.0
        %2669 = vmatprep.subr.mxu0 0.0
        %2670 = vmatpush1.xpose.msra.mxu0 0.0
        %2671 = vmatprep.subr.mxu0 0.0
        %2672 = vmatpush1.xpose.msra.mxu0 0.0
        %2673 = vmatprep.subr.mxu0 0.0
        %2674 = vmatpush1.xpose.msra.mxu0 0.0
        %2675 = vmatprep.subr.mxu0 0.0
        %2676 = vmatpush1.xpose.msra.mxu0 0.0
        %2677 = vmatprep.subr.mxu0 0.0
        %2678 = vmatpush1.xpose.msra.mxu0 0.0
        %2679 = vmatprep.subr.mxu0 0.0
        %2680 = vmatpush1.xpose.msra.mxu0 0.0
        %2681 = vmatprep.subr.mxu0 0.0
        %2682 = vmatpush1.xpose.msra.mxu0 0.0
        %2683 = vmatprep.subr.mxu0 0.0
        %2684 = vmatpush1.xpose.msra.mxu0 0.0
        %2685 = vmatprep.subr.mxu0 0.0
        %2686 = vmatpush1.xpose.msra.mxu0 0.0
        %2687 = vmatprep.subr.mxu0 0.0
        %2688 = vmatpush1.xpose.msra.mxu0 0.0
        %2689 = vmatprep.subr.mxu0 0.0
        %2690 = vmatpush1.xpose.msra.mxu0 0.0
        %2691 = vmatprep.subr.mxu0 0.0
        %2692 = vmatpush1.xpose.msra.mxu0 0.0
        %2693 = vmatprep.subr.mxu0 0.0
        %2694 = vmatpush1.xpose.msra.mxu0 0.0
        %2695 = vmatprep.subr.mxu0 0.0
        %2696 = vmatpush1.xpose.msra.mxu0 0.0
        %2697 = vmatprep.subr.mxu0 0.0
        %2698 = vmatpush1.xpose.msra.mxu0 0.0
        %2699 = vmatprep.subr.mxu0 0.0
        %2700 = vmatpush1.xpose.msra.mxu0 0.0
        %2701 = vmatprep.mubr.f32.mxu0 0.0
        %2702 = vmatmul.mubr.f32.gmra.mrb[0].mxu0 %v2633
        %v2703 = vpop.f32.mrb[0].mxu0
        %v2704 = vadd.f32 0.0, %v2703
        %v2705 = vpop.f32.mrb[0].mxu0
        %2706 = vdwg.mxu0
        %2707 = vrot.lane.b32.xlu0 %v340, 104
        %v2708 = vpop.permute.xlu0 %2707
        %2709 = vrot.lane.b32.xlu0 %v340, 72
        %v2710 = vpop.permute.xlu0 %2709
        %v2711 = vsel %vm360, %v2708, 0
        %v2713 = vsel %vm360, %v2710, 0
        %2715 = vmatprep.subr.mxu0 0.0
        %2716 = vmatpush1.xpose.msra.mxu0 %v2713
        %2717 = vmatprep.subr.mxu0 0.0
        %2718 = vmatpush1.xpose.msra.mxu0 0.0
        %2719 = vmatprep.subr.mxu0 0.0
        %2720 = vmatpush1.xpose.msra.mxu0 0.0
        %2721 = vmatprep.subr.mxu0 0.0
        %2722 = vmatpush1.xpose.msra.mxu0 0.0
        %2723 = vmatprep.subr.mxu0 0.0
        %2724 = vmatpush1.xpose.msra.mxu0 0.0
        %2725 = vmatprep.subr.mxu0 0.0
        %2726 = vmatpush1.xpose.msra.mxu0 0.0
        %2727 = vmatprep.subr.mxu0 0.0
        %2728 = vmatpush1.xpose.msra.mxu0 0.0
        %2729 = vmatprep.subr.mxu0 0.0
        %2730 = vmatpush1.xpose.msra.mxu0 0.0
        %2731 = vmatprep.subr.mxu0 0.0
        %2732 = vmatpush1.xpose.msra.mxu0 0.0
        %2733 = vmatprep.subr.mxu0 0.0
        %2734 = vmatpush1.xpose.msra.mxu0 0.0
        %2735 = vmatprep.subr.mxu0 0.0
        %2736 = vmatpush1.xpose.msra.mxu0 0.0
        %2737 = vmatprep.subr.mxu0 0.0
        %2738 = vmatpush1.xpose.msra.mxu0 0.0
        %2739 = vmatprep.subr.mxu0 0.0
        %2740 = vmatpush1.xpose.msra.mxu0 0.0
        %2741 = vmatprep.subr.mxu0 0.0
        %2742 = vmatpush1.xpose.msra.mxu0 0.0
        %2743 = vmatprep.subr.mxu0 0.0
        %2744 = vmatpush1.xpose.msra.mxu0 0.0
        %2745 = vmatprep.subr.mxu0 0.0
        %2746 = vmatpush1.xpose.msra.mxu0 0.0
        %2747 = vmatprep.subr.mxu0 0.0
        %2748 = vmatpush1.xpose.msra.mxu0 0.0
        %2749 = vmatprep.subr.mxu0 0.0
        %2750 = vmatpush1.xpose.msra.mxu0 0.0
        %2751 = vmatprep.subr.mxu0 0.0
        %2752 = vmatpush1.xpose.msra.mxu0 0.0
        %2753 = vmatprep.subr.mxu0 0.0
        %2754 = vmatpush1.xpose.msra.mxu0 0.0
        %2755 = vmatprep.subr.mxu0 0.0
        %2756 = vmatpush1.xpose.msra.mxu0 0.0
        %2757 = vmatprep.subr.mxu0 0.0
        %2758 = vmatpush1.xpose.msra.mxu0 0.0
        %2759 = vmatprep.subr.mxu0 0.0
        %2760 = vmatpush1.xpose.msra.mxu0 0.0
        %2761 = vmatprep.subr.mxu0 0.0
        %2762 = vmatpush1.xpose.msra.mxu0 0.0
        %2763 = vmatprep.subr.mxu0 0.0
        %2764 = vmatpush1.xpose.msra.mxu0 0.0
        %2765 = vmatprep.subr.mxu0 0.0
        %2766 = vmatpush1.xpose.msra.mxu0 0.0
        %2767 = vmatprep.subr.mxu0 0.0
        %2768 = vmatpush1.xpose.msra.mxu0 0.0
        %2769 = vmatprep.subr.mxu0 0.0
        %2770 = vmatpush1.xpose.msra.mxu0 0.0
        %2771 = vmatprep.subr.mxu0 0.0
        %2772 = vmatpush1.xpose.msra.mxu0 0.0
        %2773 = vmatprep.subr.mxu0 0.0
        %2774 = vmatpush1.xpose.msra.mxu0 0.0
        %2775 = vmatprep.subr.mxu0 0.0
        %2776 = vmatpush1.xpose.msra.mxu0 0.0
        %2777 = vmatprep.subr.mxu0 0.0
        %2778 = vmatpush1.xpose.msra.mxu0 0.0
        %2779 = vmatprep.mubr.f32.mxu0 0.0
        %2780 = vmatmul.mubr.f32.gmra.mrb[0].mxu0 %v2711
        %v2781 = vpop.f32.mrb[0].mxu0
        %v2782 = vadd.f32 0.0, %v2781
        %v2783 = vpop.f32.mrb[0].mxu0
        %2784 = vdwg.mxu0
        %2785 = vrot.lane.b32.xlu0 %v345, 104
        %v2786 = vpop.permute.xlu0 %2785
        %2787 = vrot.lane.b32.xlu0 %v345, 72
        %v2788 = vpop.permute.xlu0 %2787
        %v2789 = vsel %vm360, %v2786, 0
        %v2791 = vsel %vm360, %v2788, 0
        %2793 = vmatprep.subr.mxu0 0.0
        %2794 = vmatpush1.xpose.msra.mxu0 %v2791
        %2795 = vmatprep.subr.mxu0 0.0
        %2796 = vmatpush1.xpose.msra.mxu0 0.0
        %2797 = vmatprep.subr.mxu0 0.0
        %2798 = vmatpush1.xpose.msra.mxu0 0.0
        %2799 = vmatprep.subr.mxu0 0.0
        %2800 = vmatpush1.xpose.msra.mxu0 0.0
        %2801 = vmatprep.subr.mxu0 0.0
        %2802 = vmatpush1.xpose.msra.mxu0 0.0
        %2803 = vmatprep.subr.mxu0 0.0
        %2804 = vmatpush1.xpose.msra.mxu0 0.0
        %2805 = vmatprep.subr.mxu0 0.0
        %2806 = vmatpush1.xpose.msra.mxu0 0.0
        %2807 = vmatprep.subr.mxu0 0.0
        %2808 = vmatpush1.xpose.msra.mxu0 0.0
        %2809 = vmatprep.subr.mxu0 0.0
        %2810 = vmatpush1.xpose.msra.mxu0 0.0
        %2811 = vmatprep.subr.mxu0 0.0
        %2812 = vmatpush1.xpose.msra.mxu0 0.0
        %2813 = vmatprep.subr.mxu0 0.0
        %2814 = vmatpush1.xpose.msra.mxu0 0.0
        %2815 = vmatprep.subr.mxu0 0.0
        %2816 = vmatpush1.xpose.msra.mxu0 0.0
        %2817 = vmatprep.subr.mxu0 0.0
        %2818 = vmatpush1.xpose.msra.mxu0 0.0
        %2819 = vmatprep.subr.mxu0 0.0
        %2820 = vmatpush1.xpose.msra.mxu0 0.0
        %2821 = vmatprep.subr.mxu0 0.0
        %2822 = vmatpush1.xpose.msra.mxu0 0.0
        %2823 = vmatprep.subr.mxu0 0.0
        %2824 = vmatpush1.xpose.msra.mxu0 0.0
        %2825 = vmatprep.subr.mxu0 0.0
        %2826 = vmatpush1.xpose.msra.mxu0 0.0
        %2827 = vmatprep.subr.mxu0 0.0
        %2828 = vmatpush1.xpose.msra.mxu0 0.0
        %2829 = vmatprep.subr.mxu0 0.0
        %2830 = vmatpush1.xpose.msra.mxu0 0.0
        %2831 = vmatprep.subr.mxu0 0.0
        %2832 = vmatpush1.xpose.msra.mxu0 0.0
        %2833 = vmatprep.subr.mxu0 0.0
        %2834 = vmatpush1.xpose.msra.mxu0 0.0
        %2835 = vmatprep.subr.mxu0 0.0
        %2836 = vmatpush1.xpose.msra.mxu0 0.0
        %2837 = vmatprep.subr.mxu0 0.0
        %2838 = vmatpush1.xpose.msra.mxu0 0.0
        %2839 = vmatprep.subr.mxu0 0.0
        %2840 = vmatpush1.xpose.msra.mxu0 0.0
        %2841 = vmatprep.subr.mxu0 0.0
        %2842 = vmatpush1.xpose.msra.mxu0 0.0
        %2843 = vmatprep.subr.mxu0 0.0
        %2844 = vmatpush1.xpose.msra.mxu0 0.0
        %2845 = vmatprep.subr.mxu0 0.0
        %2846 = vmatpush1.xpose.msra.mxu0 0.0
        %2847 = vmatprep.subr.mxu0 0.0
        %2848 = vmatpush1.xpose.msra.mxu0 0.0
        %2849 = vmatprep.subr.mxu0 0.0
        %2850 = vmatpush1.xpose.msra.mxu0 0.0
        %2851 = vmatprep.subr.mxu0 0.0
        %2852 = vmatpush1.xpose.msra.mxu0 0.0
        %2853 = vmatprep.subr.mxu0 0.0
        %2854 = vmatpush1.xpose.msra.mxu0 0.0
        %2855 = vmatprep.subr.mxu0 0.0
        %2856 = vmatpush1.xpose.msra.mxu0 0.0
        %2857 = vmatprep.mubr.f32.mxu0 0.0
        %2858 = vmatmul.mubr.f32.gmra.mrb[0].mxu0 %v2789
        %v2859 = vpop.f32.mrb[0].mxu0
        %v2860 = vadd.f32 0.0, %v2859
        %v2861 = vpop.f32.mrb[0].mxu0
        %2862 = vdwg.mxu0
        %2863 = vrot.lane.b32.xlu0 %v350, 104
        %v2864 = vpop.permute.xlu0 %2863
        %2865 = vrot.lane.b32.xlu0 %v350, 72
        %v2866 = vpop.permute.xlu0 %2865
        %v2867 = vsel %vm360, %v2864, 0
        %v2869 = vsel %vm360, %v2866, 0
        %2871 = vmatprep.subr.mxu0 0.0
        %2872 = vmatpush1.xpose.msra.mxu0 %v2869
        %2873 = vmatprep.subr.mxu0 0.0
        %2874 = vmatpush1.xpose.msra.mxu0 0.0
        %2875 = vmatprep.subr.mxu0 0.0
        %2876 = vmatpush1.xpose.msra.mxu0 0.0
        %2877 = vmatprep.subr.mxu0 0.0
        %2878 = vmatpush1.xpose.msra.mxu0 0.0
        %2879 = vmatprep.subr.mxu0 0.0
        %2880 = vmatpush1.xpose.msra.mxu0 0.0
        %2881 = vmatprep.subr.mxu0 0.0
        %2882 = vmatpush1.xpose.msra.mxu0 0.0
        %2883 = vmatprep.subr.mxu0 0.0
        %2884 = vmatpush1.xpose.msra.mxu0 0.0
        %2885 = vmatprep.subr.mxu0 0.0
        %2886 = vmatpush1.xpose.msra.mxu0 0.0
        %2887 = vmatprep.subr.mxu0 0.0
        %2888 = vmatpush1.xpose.msra.mxu0 0.0
        %2889 = vmatprep.subr.mxu0 0.0
        %2890 = vmatpush1.xpose.msra.mxu0 0.0
        %2891 = vmatprep.subr.mxu0 0.0
        %2892 = vmatpush1.xpose.msra.mxu0 0.0
        %2893 = vmatprep.subr.mxu0 0.0
        %2894 = vmatpush1.xpose.msra.mxu0 0.0
        %2895 = vmatprep.subr.mxu0 0.0
        %2896 = vmatpush1.xpose.msra.mxu0 0.0
        %2897 = vmatprep.subr.mxu0 0.0
        %2898 = vmatpush1.xpose.msra.mxu0 0.0
        %2899 = vmatprep.subr.mxu0 0.0
        %2900 = vmatpush1.xpose.msra.mxu0 0.0
        %2901 = vmatprep.subr.mxu0 0.0
        %2902 = vmatpush1.xpose.msra.mxu0 0.0
        %2903 = vmatprep.subr.mxu0 0.0
        %2904 = vmatpush1.xpose.msra.mxu0 0.0
        %2905 = vmatprep.subr.mxu0 0.0
        %2906 = vmatpush1.xpose.msra.mxu0 0.0
        %2907 = vmatprep.subr.mxu0 0.0
        %2908 = vmatpush1.xpose.msra.mxu0 0.0
        %2909 = vmatprep.subr.mxu0 0.0
        %2910 = vmatpush1.xpose.msra.mxu0 0.0
        %2911 = vmatprep.subr.mxu0 0.0
        %2912 = vmatpush1.xpose.msra.mxu0 0.0
        %2913 = vmatprep.subr.mxu0 0.0
        %2914 = vmatpush1.xpose.msra.mxu0 0.0
        %2915 = vmatprep.subr.mxu0 0.0
        %2916 = vmatpush1.xpose.msra.mxu0 0.0
        %2917 = vmatprep.subr.mxu0 0.0
        %2918 = vmatpush1.xpose.msra.mxu0 0.0
        %2919 = vmatprep.subr.mxu0 0.0
        %2920 = vmatpush1.xpose.msra.mxu0 0.0
        %2921 = vmatprep.subr.mxu0 0.0
        %2922 = vmatpush1.xpose.msra.mxu0 0.0
        %2923 = vmatprep.subr.mxu0 0.0
        %2924 = vmatpush1.xpose.msra.mxu0 0.0
        %2925 = vmatprep.subr.mxu0 0.0
        %2926 = vmatpush1.xpose.msra.mxu0 0.0
        %2927 = vmatprep.subr.mxu0 0.0
        %2928 = vmatpush1.xpose.msra.mxu0 0.0
        %2929 = vmatprep.subr.mxu0 0.0
        %2930 = vmatpush1.xpose.msra.mxu0 0.0
        %2931 = vmatprep.subr.mxu0 0.0
        %2932 = vmatpush1.xpose.msra.mxu0 0.0
        %2933 = vmatprep.subr.mxu0 0.0
        %2934 = vmatpush1.xpose.msra.mxu0 0.0
        %2935 = vmatprep.mubr.f32.mxu0 0.0
        %2936 = vmatmul.mubr.f32.gmra.mrb[0].mxu0 %v2867
        %v2937 = vpop.f32.mrb[0].mxu0
        %v2938 = vadd.f32 0.0, %v2937
        %v2939 = vpop.f32.mrb[0].mxu0
        %2940 = vdwg.mxu0
        %v2941 = vsel %vm360, %v2704, -inf
        %2942 = vmax.xlane.f32.xlu0 %v2941
        %v2943 = vpop.xlane.xlu0 %2942
        %v2944 = vsel %vm360, %v2782, -inf
        %2945 = vmax.xlane.f32.xlu0 %v2944
        %v2946 = vpop.xlane.xlu0 %2945
        %v2947 = vsel %vm360, %v2860, -inf
        %2948 = vmax.xlane.f32.xlu0 %v2947
        %v2949 = vpop.xlane.xlu0 %2948
        %v2950 = vsel %vm360, %v2938, -inf
        %2951 = vmax.xlane.f32.xlu0 %v2950
        %v2952 = vpop.xlane.xlu0 %2951
        %v2953 = vsub.f32 %v2704, %v2943
        %v2954 = vsub.f32 %v2782, %v2946
        %v2955 = vsub.f32 %v2860, %v2949
        %v2956 = vsub.f32 %v2938, %v2952
        %v2957 = vmul.f32 %v2953, 1.442695
        %v2958 = vpow.pop %v2957
        %v2959 = vmul.f32 %v2954, 1.442695
        %v2960 = vpow.pop %v2959
        %v2961 = vmul.f32 %v2955, 1.442695
        %v2962 = vpow.pop %v2961
        %v2963 = vmul.f32 %v2956, 1.442695
        %v2964 = vpow.pop %v2963
        %v2965 = vsel %vm360, %v2958, 0.0
        %2966 = vadd.xlane.f32.xlu0 %v2965
        %v2967 = vpop.xlane.xlu0 %2966
        %v2968 = vsel %vm360, %v2960, 0.0
        %2969 = vadd.xlane.f32.xlu0 %v2968
        %v2970 = vpop.xlane.xlu0 %2969
        %v2971 = vsel %vm360, %v2962, 0.0
        %2972 = vadd.xlane.f32.xlu0 %v2971
        %v2973 = vpop.xlane.xlu0 %2972
        %v2974 = vsel %vm360, %v2964, 0.0
        %2975 = vadd.xlane.f32.xlu0 %v2974
        %v2976 = vpop.xlane.xlu0 %2975
        %v2977 = vrcp.pop %v2967
        %v2978 = vrcp.pop %v2970
        %v2979 = vrcp.pop %v2973
        %v2980 = vrcp.pop %v2976
        %v2981 = vmul.f32 %v2958, %v2977
        %v2982 = vmul.f32 %v2960, %v2978
        %v2983 = vmul.f32 %v2962, %v2979
        %v2984 = vmul.f32 %v2964, %v2980
        %2985 = vrot.lane.b32.xlu0 %v335, 40
        %v2986 = vpop.permute.xlu0 %2985
        %v2989 = vsel %vm360, %v2981, 0
        %2991 = vmatprep.subr.mxu0 0.0
        %2992 = vmatpush1.msra.mxu0 %v2986
        %2993 = vmatprep.subr.mxu0 0.0
        %2994 = vmatpush1.msra.mxu0 0.0
        %2995 = vmatprep.subr.mxu0 0.0
        %2996 = vmatpush1.msra.mxu0 0.0
        %2997 = vmatprep.subr.mxu0 0.0
        %2998 = vmatpush1.msra.mxu0 0.0
        %2999 = vmatprep.subr.mxu0 0.0
        %3000 = vmatpush1.msra.mxu0 0.0
        %3001 = vmatprep.subr.mxu0 0.0
        %3002 = vmatpush1.msra.mxu0 0.0
        %3003 = vmatprep.subr.mxu0 0.0
        %3004 = vmatpush1.msra.mxu0 0.0
        %3005 = vmatprep.subr.mxu0 0.0
        %3006 = vmatpush1.msra.mxu0 0.0
        %3007 = vmatprep.subr.mxu0 0.0
        %3008 = vmatpush1.msra.mxu0 0.0
        %3009 = vmatprep.subr.mxu0 0.0
        %3010 = vmatpush1.msra.mxu0 0.0
        %3011 = vmatprep.subr.mxu0 0.0
        %3012 = vmatpush1.msra.mxu0 0.0
        %3013 = vmatprep.subr.mxu0 0.0
        %3014 = vmatpush1.msra.mxu0 0.0
        %3015 = vmatprep.subr.mxu0 0.0
        %3016 = vmatpush1.msra.mxu0 0.0
        %3017 = vmatprep.subr.mxu0 0.0
        %3018 = vmatpush1.msra.mxu0 0.0
        %3019 = vmatprep.subr.mxu0 0.0
        %3020 = vmatpush1.msra.mxu0 0.0
        %3021 = vmatprep.subr.mxu0 0.0
        %3022 = vmatpush1.msra.mxu0 0.0
        %3023 = vmatprep.subr.mxu0 0.0
        %3024 = vmatpush1.msra.mxu0 0.0
        %3025 = vmatprep.subr.mxu0 0.0
        %3026 = vmatpush1.msra.mxu0 0.0
        %3027 = vmatprep.subr.mxu0 0.0
        %3028 = vmatpush1.msra.mxu0 0.0
        %3029 = vmatprep.subr.mxu0 0.0
        %3030 = vmatpush1.msra.mxu0 0.0
        %3031 = vmatprep.subr.mxu0 0.0
        %3032 = vmatpush1.msra.mxu0 0.0
        %3033 = vmatprep.subr.mxu0 0.0
        %3034 = vmatpush1.msra.mxu0 0.0
        %3035 = vmatprep.subr.mxu0 0.0
        %3036 = vmatpush1.msra.mxu0 0.0
        %3037 = vmatprep.subr.mxu0 0.0
        %3038 = vmatpush1.msra.mxu0 0.0
        %3039 = vmatprep.subr.mxu0 0.0
        %3040 = vmatpush1.msra.mxu0 0.0
        %3041 = vmatprep.subr.mxu0 0.0
        %3042 = vmatpush1.msra.mxu0 0.0
        %3043 = vmatprep.subr.mxu0 0.0
        %3044 = vmatpush1.msra.mxu0 0.0
        %3045 = vmatprep.subr.mxu0 0.0
        %3046 = vmatpush1.msra.mxu0 0.0
        %3047 = vmatprep.subr.mxu0 0.0
        %3048 = vmatpush1.msra.mxu0 0.0
        %3049 = vmatprep.subr.mxu0 0.0
        %3050 = vmatpush1.msra.mxu0 0.0
        %3051 = vmatprep.subr.mxu0 0.0
        %3052 = vmatpush1.msra.mxu0 0.0
        %3053 = vmatprep.subr.mxu0 0.0
        %3054 = vmatpush1.msra.mxu0 0.0
        %3055 = vmatprep.mubr.f32.mxu0 0.0
        %3056 = vmatmul.mubr.f32.gmra.mrb[0].mxu0 %v2989
        %v3057 = vpop.f32.mrb[0].mxu0
        %v3058 = vadd.f32 0.0, %v3057
        %v3059 = vpop.f32.mrb[0].mxu0
        %3060 = vdwg.mxu0
        %3061 = vrot.lane.b32.xlu0 %v340, 40
        %v3062 = vpop.permute.xlu0 %3061
        %v3065 = vsel %vm360, %v2982, 0
        %3067 = vmatprep.subr.mxu0 0.0
        %3068 = vmatpush1.msra.mxu0 %v3062
        %3069 = vmatprep.subr.mxu0 0.0
        %3070 = vmatpush1.msra.mxu0 0.0
        %3071 = vmatprep.subr.mxu0 0.0
        %3072 = vmatpush1.msra.mxu0 0.0
        %3073 = vmatprep.subr.mxu0 0.0
        %3074 = vmatpush1.msra.mxu0 0.0
        %3075 = vmatprep.subr.mxu0 0.0
        %3076 = vmatpush1.msra.mxu0 0.0
        %3077 = vmatprep.subr.mxu0 0.0
        %3078 = vmatpush1.msra.mxu0 0.0
        %3079 = vmatprep.subr.mxu0 0.0
        %3080 = vmatpush1.msra.mxu0 0.0
        %3081 = vmatprep.subr.mxu0 0.0
        %3082 = vmatpush1.msra.mxu0 0.0
        %3083 = vmatprep.subr.mxu0 0.0
        %3084 = vmatpush1.msra.mxu0 0.0
        %3085 = vmatprep.subr.mxu0 0.0
        %3086 = vmatpush1.msra.mxu0 0.0
        %3087 = vmatprep.subr.mxu0 0.0
        %3088 = vmatpush1.msra.mxu0 0.0
        %3089 = vmatprep.subr.mxu0 0.0
        %3090 = vmatpush1.msra.mxu0 0.0
        %3091 = vmatprep.subr.mxu0 0.0
        %3092 = vmatpush1.msra.mxu0 0.0
        %3093 = vmatprep.subr.mxu0 0.0
        %3094 = vmatpush1.msra.mxu0 0.0
        %3095 = vmatprep.subr.mxu0 0.0
        %3096 = vmatpush1.msra.mxu0 0.0
        %3097 = vmatprep.subr.mxu0 0.0
        %3098 = vmatpush1.msra.mxu0 0.0
        %3099 = vmatprep.subr.mxu0 0.0
        %3100 = vmatpush1.msra.mxu0 0.0
        %3101 = vmatprep.subr.mxu0 0.0
        %3102 = vmatpush1.msra.mxu0 0.0
        %3103 = vmatprep.subr.mxu0 0.0
        %3104 = vmatpush1.msra.mxu0 0.0
        %3105 = vmatprep.subr.mxu0 0.0
        %3106 = vmatpush1.msra.mxu0 0.0
        %3107 = vmatprep.subr.mxu0 0.0
        %3108 = vmatpush1.msra.mxu0 0.0
        %3109 = vmatprep.subr.mxu0 0.0
        %3110 = vmatpush1.msra.mxu0 0.0
        %3111 = vmatprep.subr.mxu0 0.0
        %3112 = vmatpush1.msra.mxu0 0.0
        %3113 = vmatprep.subr.mxu0 0.0
        %3114 = vmatpush1.msra.mxu0 0.0
        %3115 = vmatprep.subr.mxu0 0.0
        %3116 = vmatpush1.msra.mxu0 0.0
        %3117 = vmatprep.subr.mxu0 0.0
        %3118 = vmatpush1.msra.mxu0 0.0
        %3119 = vmatprep.subr.mxu0 0.0
        %3120 = vmatpush1.msra.mxu0 0.0
        %3121 = vmatprep.subr.mxu0 0.0
        %3122 = vmatpush1.msra.mxu0 0.0
        %3123 = vmatprep.subr.mxu0 0.0
        %3124 = vmatpush1.msra.mxu0 0.0
        %3125 = vmatprep.subr.mxu0 0.0
        %3126 = vmatpush1.msra.mxu0 0.0
        %3127 = vmatprep.subr.mxu0 0.0
        %3128 = vmatpush1.msra.mxu0 0.0
        %3129 = vmatprep.subr.mxu0 0.0
        %3130 = vmatpush1.msra.mxu0 0.0
        %3131 = vmatprep.mubr.f32.mxu0 0.0
        %3132 = vmatmul.mubr.f32.gmra.mrb[0].mxu0 %v3065
        %v3133 = vpop.f32.mrb[0].mxu0
        %v3134 = vadd.f32 0.0, %v3133
        %v3135 = vpop.f32.mrb[0].mxu0
        %3136 = vdwg.mxu0
        %3137 = vrot.lane.b32.xlu0 %v345, 40
        %v3138 = vpop.permute.xlu0 %3137
        %v3141 = vsel %vm360, %v2983, 0
        %3143 = vmatprep.subr.mxu0 0.0
        %3144 = vmatpush1.msra.mxu0 %v3138
        %3145 = vmatprep.subr.mxu0 0.0
        %3146 = vmatpush1.msra.mxu0 0.0
        %3147 = vmatprep.subr.mxu0 0.0
        %3148 = vmatpush1.msra.mxu0 0.0
        %3149 = vmatprep.subr.mxu0 0.0
        %3150 = vmatpush1.msra.mxu0 0.0
        %3151 = vmatprep.subr.mxu0 0.0
        %3152 = vmatpush1.msra.mxu0 0.0
        %3153 = vmatprep.subr.mxu0 0.0
        %3154 = vmatpush1.msra.mxu0 0.0
        %3155 = vmatprep.subr.mxu0 0.0
        %3156 = vmatpush1.msra.mxu0 0.0
        %3157 = vmatprep.subr.mxu0 0.0
        %3158 = vmatpush1.msra.mxu0 0.0
        %3159 = vmatprep.subr.mxu0 0.0
        %3160 = vmatpush1.msra.mxu0 0.0
        %3161 = vmatprep.subr.mxu0 0.0
        %3162 = vmatpush1.msra.mxu0 0.0
        %3163 = vmatprep.subr.mxu0 0.0
        %3164 = vmatpush1.msra.mxu0 0.0
        %3165 = vmatprep.subr.mxu0 0.0
        %3166 = vmatpush1.msra.mxu0 0.0
        %3167 = vmatprep.subr.mxu0 0.0
        %3168 = vmatpush1.msra.mxu0 0.0
        %3169 = vmatprep.subr.mxu0 0.0
        %3170 = vmatpush1.msra.mxu0 0.0
        %3171 = vmatprep.subr.mxu0 0.0
        %3172 = vmatpush1.msra.mxu0 0.0
        %3173 = vmatprep.subr.mxu0 0.0
        %3174 = vmatpush1.msra.mxu0 0.0
        %3175 = vmatprep.subr.mxu0 0.0
        %3176 = vmatpush1.msra.mxu0 0.0
        %3177 = vmatprep.subr.mxu0 0.0
        %3178 = vmatpush1.msra.mxu0 0.0
        %3179 = vmatprep.subr.mxu0 0.0
        %3180 = vmatpush1.msra.mxu0 0.0
        %3181 = vmatprep.subr.mxu0 0.0
        %3182 = vmatpush1.msra.mxu0 0.0
        %3183 = vmatprep.subr.mxu0 0.0
        %3184 = vmatpush1.msra.mxu0 0.0
        %3185 = vmatprep.subr.mxu0 0.0
        %3186 = vmatpush1.msra.mxu0 0.0
        %3187 = vmatprep.subr.mxu0 0.0
        %3188 = vmatpush1.msra.mxu0 0.0
        %3189 = vmatprep.subr.mxu0 0.0
        %3190 = vmatpush1.msra.mxu0 0.0
        %3191 = vmatprep.subr.mxu0 0.0
        %3192 = vmatpush1.msra.mxu0 0.0
        %3193 = vmatprep.subr.mxu0 0.0
        %3194 = vmatpush1.msra.mxu0 0.0
        %3195 = vmatprep.subr.mxu0 0.0
        %3196 = vmatpush1.msra.mxu0 0.0
        %3197 = vmatprep.subr.mxu0 0.0
        %3198 = vmatpush1.msra.mxu0 0.0
        %3199 = vmatprep.subr.mxu0 0.0
        %3200 = vmatpush1.msra.mxu0 0.0
        %3201 = vmatprep.subr.mxu0 0.0
        %3202 = vmatpush1.msra.mxu0 0.0
        %3203 = vmatprep.subr.mxu0 0.0
        %3204 = vmatpush1.msra.mxu0 0.0
        %3205 = vmatprep.subr.mxu0 0.0
        %3206 = vmatpush1.msra.mxu0 0.0
        %3207 = vmatprep.mubr.f32.mxu0 0.0
        %3208 = vmatmul.mubr.f32.gmra.mrb[0].mxu0 %v3141
        %v3209 = vpop.f32.mrb[0].mxu0
        %v3210 = vadd.f32 0.0, %v3209
        %v3211 = vpop.f32.mrb[0].mxu0
        %3212 = vdwg.mxu0
        %3213 = vrot.lane.b32.xlu0 %v350, 40
        %v3214 = vpop.permute.xlu0 %3213
        %v3217 = vsel %vm360, %v2984, 0
        %3219 = vmatprep.subr.mxu0 0.0
        %3220 = vmatpush1.msra.mxu0 %v3214
        %3221 = vmatprep.subr.mxu0 0.0
        %3222 = vmatpush1.msra.mxu0 0.0
        %3223 = vmatprep.subr.mxu0 0.0
        %3224 = vmatpush1.msra.mxu0 0.0
        %3225 = vmatprep.subr.mxu0 0.0
        %3226 = vmatpush1.msra.mxu0 0.0
        %3227 = vmatprep.subr.mxu0 0.0
        %3228 = vmatpush1.msra.mxu0 0.0
        %3229 = vmatprep.subr.mxu0 0.0
        %3230 = vmatpush1.msra.mxu0 0.0
        %3231 = vmatprep.subr.mxu0 0.0
        %3232 = vmatpush1.msra.mxu0 0.0
        %3233 = vmatprep.subr.mxu0 0.0
        %3234 = vmatpush1.msra.mxu0 0.0
        %3235 = vmatprep.subr.mxu0 0.0
        %3236 = vmatpush1.msra.mxu0 0.0
        %3237 = vmatprep.subr.mxu0 0.0
        %3238 = vmatpush1.msra.mxu0 0.0
        %3239 = vmatprep.subr.mxu0 0.0
        %3240 = vmatpush1.msra.mxu0 0.0
        %3241 = vmatprep.subr.mxu0 0.0
        %3242 = vmatpush1.msra.mxu0 0.0
        %3243 = vmatprep.subr.mxu0 0.0
        %3244 = vmatpush1.msra.mxu0 0.0
        %3245 = vmatprep.subr.mxu0 0.0
        %3246 = vmatpush1.msra.mxu0 0.0
        %3247 = vmatprep.subr.mxu0 0.0
        %3248 = vmatpush1.msra.mxu0 0.0
        %3249 = vmatprep.subr.mxu0 0.0
        %3250 = vmatpush1.msra.mxu0 0.0
        %3251 = vmatprep.subr.mxu0 0.0
        %3252 = vmatpush1.msra.mxu0 0.0
        %3253 = vmatprep.subr.mxu0 0.0
        %3254 = vmatpush1.msra.mxu0 0.0
        %3255 = vmatprep.subr.mxu0 0.0
        %3256 = vmatpush1.msra.mxu0 0.0
        %3257 = vmatprep.subr.mxu0 0.0
        %3258 = vmatpush1.msra.mxu0 0.0
        %3259 = vmatprep.subr.mxu0 0.0
        %3260 = vmatpush1.msra.mxu0 0.0
        %3261 = vmatprep.subr.mxu0 0.0
        %3262 = vmatpush1.msra.mxu0 0.0
        %3263 = vmatprep.subr.mxu0 0.0
        %3264 = vmatpush1.msra.mxu0 0.0
        %3265 = vmatprep.subr.mxu0 0.0
        %3266 = vmatpush1.msra.mxu0 0.0
        %3267 = vmatprep.subr.mxu0 0.0
        %3268 = vmatpush1.msra.mxu0 0.0
        %3269 = vmatprep.subr.mxu0 0.0
        %3270 = vmatpush1.msra.mxu0 0.0
        %3271 = vmatprep.subr.mxu0 0.0
        %3272 = vmatpush1.msra.mxu0 0.0
        %3273 = vmatprep.subr.mxu0 0.0
        %3274 = vmatpush1.msra.mxu0 0.0
        %3275 = vmatprep.subr.mxu0 0.0
        %3276 = vmatpush1.msra.mxu0 0.0
        %3277 = vmatprep.subr.mxu0 0.0
        %3278 = vmatpush1.msra.mxu0 0.0
        %3279 = vmatprep.subr.mxu0 0.0
        %3280 = vmatpush1.msra.mxu0 0.0
        %3281 = vmatprep.subr.mxu0 0.0
        %3282 = vmatpush1.msra.mxu0 0.0
        %3283 = vmatprep.mubr.f32.mxu0 0.0
        %3284 = vmatmul.mubr.f32.gmra.mrb[0].mxu0 %v3217
        %v3285 = vpop.f32.mrb[0].mxu0
        %v3286 = vadd.f32 0.0, %v3285
        %v3287 = vpop.f32.mrb[0].mxu0
        %3288 = vdwg.mxu0
        %v3290 = vsel %vm360, %v3058, 0
        %v3293 = vsel %vm360, %v3134, 0
        %v3296 = vsel %vm360, %v3210, 0
        %v3299 = vsel %vm360, %v3286, 0
        %3301 = vmatprep.subr.mxu0 0.0
        %3302 = vmatpush1.msra.mxu0 %v356
        %3303 = vmatprep.subr.mxu0 0.0
        %3304 = vmatpush1.msra.mxu0 0.0
        %3305 = vmatprep.subr.mxu0 0.0
        %3306 = vmatpush1.msra.mxu0 0.0
        %3307 = vmatprep.subr.mxu0 0.0
        %3308 = vmatpush1.msra.mxu0 0.0
        %3309 = vmatprep.subr.mxu0 0.0
        %3310 = vmatpush1.msra.mxu0 0.0
        %3311 = vmatprep.subr.mxu0 0.0
        %3312 = vmatpush1.msra.mxu0 0.0
        %3313 = vmatprep.subr.mxu0 0.0
        %3314 = vmatpush1.msra.mxu0 0.0
        %3315 = vmatprep.subr.mxu0 0.0
        %3316 = vmatpush1.msra.mxu0 0.0
        %3317 = vmatprep.subr.mxu0 0.0
        %3318 = vmatpush1.msra.mxu0 0.0
        %3319 = vmatprep.subr.mxu0 0.0
        %3320 = vmatpush1.msra.mxu0 0.0
        %3321 = vmatprep.subr.mxu0 0.0
        %3322 = vmatpush1.msra.mxu0 0.0
        %3323 = vmatprep.subr.mxu0 0.0
        %3324 = vmatpush1.msra.mxu0 0.0
        %3325 = vmatprep.subr.mxu0 0.0
        %3326 = vmatpush1.msra.mxu0 0.0
        %3327 = vmatprep.subr.mxu0 0.0
        %3328 = vmatpush1.msra.mxu0 0.0
        %3329 = vmatprep.subr.mxu0 0.0
        %3330 = vmatpush1.msra.mxu0 0.0
        %3331 = vmatprep.subr.mxu0 0.0
        %3332 = vmatpush1.msra.mxu0 0.0
        %3333 = vmatprep.subr.mxu0 0.0
        %3334 = vmatpush1.msra.mxu0 0.0
        %3335 = vmatprep.subr.mxu0 0.0
        %3336 = vmatpush1.msra.mxu0 0.0
        %3337 = vmatprep.subr.mxu0 0.0
        %3338 = vmatpush1.msra.mxu0 0.0
        %3339 = vmatprep.subr.mxu0 0.0
        %3340 = vmatpush1.msra.mxu0 0.0
        %3341 = vmatprep.subr.mxu0 0.0
        %3342 = vmatpush1.msra.mxu0 0.0
        %3343 = vmatprep.subr.mxu0 0.0
        %3344 = vmatpush1.msra.mxu0 0.0
        %3345 = vmatprep.subr.mxu0 0.0
        %3346 = vmatpush1.msra.mxu0 0.0
        %3347 = vmatprep.subr.mxu0 0.0
        %3348 = vmatpush1.msra.mxu0 0.0
        %3349 = vmatprep.subr.mxu0 0.0
        %3350 = vmatpush1.msra.mxu0 0.0
        %3351 = vmatprep.subr.mxu0 0.0
        %3352 = vmatpush1.msra.mxu0 0.0
        %3353 = vmatprep.subr.mxu0 0.0
        %3354 = vmatpush1.msra.mxu0 0.0
        %3355 = vmatprep.subr.mxu0 0.0
        %3356 = vmatpush1.msra.mxu0 0.0
        %3357 = vmatprep.subr.mxu0 0.0
        %3358 = vmatpush1.msra.mxu0 0.0
        %3359 = vmatprep.subr.mxu0 0.0
        %3360 = vmatpush1.msra.mxu0 0.0
        %3361 = vmatprep.subr.mxu0 0.0
        %3362 = vmatpush1.msra.mxu0 0.0
        %3363 = vmatprep.subr.mxu0 0.0
        %3364 = vmatpush1.msra.mxu0 0.0
        %3365 = vmatprep.mubr.f32.mxu0 0.0
        %3366 = vmatmul.mubr.f32.gmra.mrb[0].mxu0 %v3290
        %v3367 = vpop.f32.mrb[0].mxu0
        %v3368 = vadd.f32 0.0, %v3367
        %v3369 = vpop.f32.mrb[0].mxu0
        %3370 = vmatprep.mubr.f32.mxu0 0.0
        %3371 = vmatmul.mubr.f32.gmra.mrb[0].mxu0 %v3293
        %v3372 = vpop.f32.mrb[0].mxu0
        %v3373 = vadd.f32 0.0, %v3372
        %v3374 = vpop.f32.mrb[0].mxu0
        %3375 = vmatprep.mubr.f32.mxu0 0.0
        %3376 = vmatmul.mubr.f32.gmra.mrb[0].mxu0 %v3296
        %v3377 = vpop.f32.mrb[0].mxu0
        %v3378 = vadd.f32 0.0, %v3377
        %v3379 = vpop.f32.mrb[0].mxu0
        %3380 = vmatprep.mubr.f32.mxu0 0.0
        %3381 = vmatmul.mubr.f32.gmra.mrb[0].mxu0 %v3299
        %v3382 = vpop.f32.mrb[0].mxu0
        %v3383 = vadd.f32 0.0, %v3382
        %v3384 = vpop.f32.mrb[0].mxu0
        %3385 = vdwg.mxu0
        %v3386 = vadd.f32 %v2625, %v3368
        %v3387 = vadd.f32 %v2626, %v3373
        %v3388 = vadd.f32 %v2627, %v3378
        %v3389 = vadd.f32 %v2628, %v3383
        %v3390 = vld [vmem:[%s3] sm:$0x1]
        %v3392 = vlaneseq
        %v3393 = vshrl.u32 %v3392, 7
        %v3394 = vsub.s32 0, %v3393
        %v3395 = vrot.slane %v3390, %v3394
        %v3397 = vadd.f32 %v3386, %v3395
        %v3398 = vadd.f32 %v3387, %v3395
        %v3399 = vadd.f32 %v3388, %v3395
        %v3400 = vadd.f32 %v3389, %v3395
        %3401 = vst [vmem:[%s244] sm:$0xff] %v3397
        %3402 = vst [vmem:[%s244 + $0x8] sm:$0xff] %v3398
        %3403 = vst [vmem:[%s244 + $0x10] sm:$0xff] %v3399
        %3404 = vst [vmem:[%s244 + $0x18] sm:$0xff] %v3400
        %s3405 = sand.u32 %s119, 1
        %s3406 = scalar_lea.sflag [#allocation4], %s3405
        %s3407 = sand.u32 %s119, 1
        %s3408 = smul.addr %s3407, 32
        %s3409 = scalar_lea.vmem [#allocation8], %s3408
        // Predicated region
        $region49: #{tpu_custom_call.1} parent=35 // pred_check
          %p3410 = pneg %p129
        $region50: #{tpu_custom_call.1} parent=35 // pred_check_branch
          %3412 = sbr.rel (%p3410) target = $region52
        $region51: #{tpu_custom_call.1} parent=35 // pred_region
          %s3413 = smul.u32 4, %s22
          %s3415 = ssub.s32 512, 512
          %3416 = vsyncadd %s3406, %s3415
          %s3417 = smul.addr %s3413, 128
          %s3418 = scalar_lea.hbm %s4, %s3417
          %s3419 = sshll.u32 %s3409, 4
          %s3420 = int_to_ptr.vmem [resolvable:$true] %s3419
          %3425 = dma.vmem_to_hbm [thread:$0]  %s3420, 512, %s3418, %s3406, 128, 128, 8
        $region52: #{tpu_custom_call.1} parent=35 // pred_fallthru
          _
      $region36: #{tpu_custom_call.1} parent=5 // pred_fallthru
        _
      %p3426 = scmp.le.s32.totalorder 2, %s17
      // Predicated region
      $region53: #{tpu_custom_call.1} parent=5 // pred_check
        %p3427 = pneg %p3426
      $region54: #{tpu_custom_call.1} parent=5 // pred_check_branch
        %3429 = sbr.rel (%p3427) target = $region56
      $region55: #{tpu_custom_call.1} parent=5 // pred_region
        %s3430 = ssub.s32 %s17, 2
        // Predicated region
        $region57: #{tpu_custom_call.1} parent=55 // pred_check
          %p3431 = pneg %p135
        $region58: #{tpu_custom_call.1} parent=55 // pred_check_branch
          %3433 = sbr.rel (%p3431) target = $region60
        $region59: #{tpu_custom_call.1} parent=55 // pred_region
          %s3434 = sand.u32 %s120, 1
          %s3435 = scalar_lea.sflag [#allocation4], %s3434
          %s3436 = sand.u32 %s120, 1
          %s3437 = smul.addr %s3436, 32
          %s3438 = scalar_lea.vmem [#allocation8], %s3437
          %3439 = dma.done %s3435, 512
        $region60: #{tpu_custom_call.1} parent=55 // pred_fallthru
          _
      $region56: #{tpu_custom_call.1} parent=5 // pred_fallthru
        _
    $region6: #{tpu_custom_call.1} parent=1 // loop_footer
      %s21 = sadd.s32 1, %s17
    $region7: #{tpu_custom_call.1} parent=1 // loop_footer_branch
      %16 = sbr.rel target = $region3
    $region8: #{tpu_custom_call.1} parent=1 // loop_exit
      _
    %3440 = vsyncpa [#allocation3], 1
    %s3441 = scalar_lea.sflag [#allocation3], 1
    %3442 = vsyncpa %s3441, 1
    %3443 = vsyncpa [#allocation6], 1
    %3444 = vsyncpa [#allocation4], 1
    %s3445 = scalar_lea.sflag [#allocation4], 1
    %3446 = vsyncpa %s3445, 1

</llo_original>
